<compile_context>
chip_gen: v7x
topology: tpu7x:2x2x1
jax: 0.10.0
libtpu: 0.0.40
codegen_flags: <defaults>
</compile_context>

<pallas_src>
import math

import jax
import jax.numpy as jnp
from jax.experimental import pallas as pl
from jax.experimental.pallas import tpu as pltpu

# ----------------------------- small ViT config -----------------------------
IMG = 32          # image height/width         (ViT-B/16_imagenet1k: 384)
CH = 3            # input channels
PATCH = 16        # patch size                 (ViT-B/16: 16)
DIM = 32          # hidden dim                 (ViT-B/16: 768)
HEADS = 4         # attention heads            (ViT-B/16: 12)
HEAD_DIM = DIM // HEADS
FF = 64           # MLP hidden dim             (ViT-B/16: 3072)
LAYERS = 2        # encoder blocks             (ViT-B/16: 12)
NUM_CLASSES = 10  # classifier outputs         (imagenet1k: 1000)
LN_EPS = 1e-6     # pytorch_pretrained_vit uses LayerNorm(eps=1e-6)


# --------------------------- in-kernel helpers -------------------------------

def _mm(a, w):
    """bf16-operand matmul with f32 accumulation (MXU)."""
    return jnp.dot(a.astype(jnp.bfloat16), w.astype(jnp.bfloat16),
                   preferred_element_type=jnp.float32)


def _mm_nt(a, b):
    """a @ b.T (contract last dims of both), bf16 operands / f32 accumulate."""
    return jax.lax.dot_general(
        a.astype(jnp.bfloat16), b.astype(jnp.bfloat16),
        dimension_numbers=(((1,), (1,)), ((), ())),
        preferred_element_type=jnp.float32)


def _layernorm(x, g, b):
    # row-wise LayerNorm over the last dim (biased variance, eps inside rsqrt)
    mu = jnp.mean(x, axis=-1, keepdims=True)
    var = jnp.mean((x - mu) ** 2, axis=-1, keepdims=True)
    return (x - mu) * jax.lax.rsqrt(var + LN_EPS) * g + b


def _gelu(y):
    # TODO(synk): PyTorch F.gelu defaults to the exact erf form; the tanh
    # approximation is used for robust Mosaic lowering (~1e-3 relative diff).
    c = math.sqrt(2.0 / math.pi)
    return 0.5 * y * (1.0 + jnp.tanh(c * (y + 0.044715 * y * y * y)))


# ------------------------------ fused ViT kernel -----------------------------

def _vit_kernel(patches_ref, patch_w_ref, patch_b_ref, cls_ref, pos_ref,
                ln1_g_ref, ln1_b_ref, wqkv_ref, bqkv_ref, wo_ref, bo_ref,
                ln2_g_ref, ln2_b_ref, w1_ref, b1_ref, w2_ref, b2_ref,
                norm_g_ref, norm_b_ref, fc_w_ref, fc_b_ref,
                logits_ref, seq_scr, ctx_scr):
    """One grid step = one batch element; whole model runs in this kernel."""
    n_layers = wqkv_ref.shape[0]
    S = pos_ref.shape[0]
    D = patch_w_ref.shape[1]
    scale = 1.0 / math.sqrt(HEAD_DIM)

    # ---- patch embedding + class token + positional embedding ----
    tok = _mm(patches_ref[0], patch_w_ref[...]) + patch_b_ref[...]     # (NP, D)
    seq_scr[0:1, :] = cls_ref[...] + pos_ref[0:1, :]
    seq_scr[1:S, :] = tok + pos_ref[1:S, :]
    x = seq_scr[...]                                                   # (S, D)

    # ---- transformer encoder blocks (pre-norm) ----
    for l in range(n_layers):
        # multi-head self-attention with fused QKV projection
        h = _layernorm(x, ln1_g_ref[l], ln1_b_ref[l])
        qkv = _mm(h, wqkv_ref[l]) + bqkv_ref[l]                        # (S, 3D)
        for hh in range(HEADS):
            lo = hh * HEAD_DIM
            q = qkv[:, lo:lo + HEAD_DIM]
            k = qkv[:, D + lo:D + lo + HEAD_DIM]
            v = qkv[:, 2 * D + lo:2 * D + lo + HEAD_DIM]
            s = _mm_nt(q, k) * scale                                   # (S, S)
            s = s - jnp.max(s, axis=-1, keepdims=True)
            p = jnp.exp(s)
            p = p * pl.reciprocal(jnp.sum(p, axis=-1, keepdims=True),
                                  approx=True)
            ctx_scr[:, lo:lo + HEAD_DIM] = _mm(p, v)                   # (S, HD)
        x = x + _mm(ctx_scr[...], wo_ref[l]) + bo_ref[l]               # residual

        # MLP
        h = _layernorm(x, ln2_g_ref[l], ln2_b_ref[l])
        h = _gelu(_mm(h, w1_ref[l]) + b1_ref[l])
        x = x + _mm(h, w2_ref[l]) + b2_ref[l]                          # residual

    # ---- final LayerNorm on the class token + classifier head ----
    cls_tok = _layernorm(x[0:1, :], norm_g_ref[...], norm_b_ref[...])  # (1, D)
    logits_ref[0] = _mm(cls_tok, fc_w_ref[...]) + fc_b_ref[...]        # (1, NC)


# ------------------------------ ViT forward ----------------------------------

def _const_spec(shape):
    nd = len(shape)
    return pl.BlockSpec(shape, lambda b, _n=nd: (0,) * _n)


def vit_forward(params, x):
    """x: (B, C, H, W) float32 -> logits (B, NUM_CLASSES)."""
    B, C, H, W = x.shape
    gh, gw = H // PATCH, W // PATCH
    n_patches = gh * gw
    S = n_patches + 1
    cpp = C * PATCH * PATCH

    # Patch-embedding conv (kernel=stride=PATCH) == patch extraction + matmul.
    patches = (
        x.reshape(B, C, gh, PATCH, gw, PATCH)
        .transpose(0, 2, 4, 1, 3, 5)                 # (B, gh, gw, C, P, P)
        .reshape(B, n_patches, cpp)
    )

    blocks = params["blocks"]

    def stack(name):
        return jnp.stack([blk[name] for blk in blocks], axis=0)

    wqkv = jnp.stack(
        [jnp.concatenate([b_["wq"], b_["wk"], b_["wv"]], axis=1) for b_ in blocks],
        axis=0)                                                         # (L, D, 3D)
    bqkv = jnp.stack(
        [jnp.concatenate([b_["bq"], b_["bk"], b_["bv"]], axis=0) for b_ in blocks],
        axis=0)[:, None, :]                                             # (L, 1, 3D)

    args = (
        patches,
        params["patch_w"], params["patch_b"].reshape(1, -1),
        params["cls"].reshape(1, DIM), params["pos"].reshape(S, DIM),
        stack("ln1_g")[:, None, :], stack("ln1_b")[:, None, :],
        wqkv, bqkv,
        stack("wo"), stack("bo")[:, None, :],
        stack("ln2_g")[:, None, :], stack("ln2_b")[:, None, :],
        stack("w1"), stack("b1")[:, None, :],
        stack("w2"), stack("b2")[:, None, :],
        params["norm_g"].reshape(1, -1), params["norm_b"].reshape(1, -1),
        params["fc_w"], params["fc_b"].reshape(1, -1),
    )

    in_specs = [pl.BlockSpec((1, n_patches, cpp), lambda b: (b, 0, 0))]
    in_specs += [_const_spec(a.shape) for a in args[1:]]

    out = pl.pallas_call(
        _vit_kernel,
        out_shape=jax.ShapeDtypeStruct((B, 1, NUM_CLASSES), jnp.float32),
        grid=(B,),
        in_specs=in_specs,
        out_specs=pl.BlockSpec((1, 1, NUM_CLASSES), lambda b: (b, 0, 0)),
        scratch_shapes=[pltpu.VMEM((S, DIM), jnp.float32),   # sequence assembly
                        pltpu.VMEM((S, DIM), jnp.float32)],  # merged attn context
        compiler_params=pltpu.CompilerParams(
            dimension_semantics=("parallel",)),
    )(*args)
    return out.reshape(B, NUM_CLASSES)


# --------------------------- deterministic params ----------------------------

def init_params(key):
    n_patches = (IMG // PATCH) ** 2
    S = n_patches + 1
    keys = iter(jax.random.split(key, 16 + LAYERS * 16))

    def nrm(shape, scale=0.02):
        return scale * jax.random.normal(next(keys), shape, jnp.float32)

    params = {
        "patch_w": nrm((CH * PATCH * PATCH, DIM)),
        "patch_b": nrm((DIM,)),
        "cls": nrm((1, 1, DIM)),
        "pos": nrm((1, S, DIM)),
        "norm_g": jnp.ones((DIM,), jnp.float32),
        "norm_b": jnp.zeros((DIM,), jnp.float32),
        "fc_w": nrm((DIM, NUM_CLASSES)),
        "fc_b": jnp.zeros((NUM_CLASSES,), jnp.float32),
        "blocks": [],
    }
    for _ in range(LAYERS):
        params["blocks"].append({
            "ln1_g": jnp.ones((DIM,), jnp.float32),
            "ln1_b": jnp.zeros((DIM,), jnp.float32),
            "wq": nrm((DIM, DIM)), "bq": nrm((DIM,)),
            "wk": nrm((DIM, DIM)), "bk": nrm((DIM,)),
            "wv": nrm((DIM, DIM)), "bv": nrm((DIM,)),
            "wo": nrm((DIM, DIM)), "bo": nrm((DIM,)),
            "ln2_g": jnp.ones((DIM,), jnp.float32),
            "ln2_b": jnp.zeros((DIM,), jnp.float32),
            "w1": nrm((DIM, FF)), "b1": nrm((FF,)),
            "w2": nrm((FF, DIM)), "b2": nrm((DIM,)),
        })
    return params


# ----------------------------------- main ------------------------------------

if __name__ == "__main__":
    key = jax.random.PRNGKey(0)
    k_x, k_p = jax.random.split(key)
    x = jax.random.normal(k_x, (2, CH, IMG, IMG), jnp.float32)
    params = init_params(k_p)

    logits = jax.jit(vit_forward)(params, x)
    jax.block_until_ready(logits)
    assert logits.shape == (2, NUM_CLASSES)
    assert bool(jnp.all(jnp.isfinite(logits)))
    print("KERNEL_OK")
</pallas_src>

<mosaic_0001>
module attributes {stable_mosaic.version = 11 : i64} {
  func.func @_vit_kernel(%arg0: i32, %arg1: memref<1x4x768xf32, #tpu.memory_space<vmem>>, %arg2: memref<768x32xf32, #tpu.memory_space<vmem>>, %arg3: memref<1x32xf32, #tpu.memory_space<vmem>>, %arg4: memref<1x32xf32, #tpu.memory_space<vmem>>, %arg5: memref<5x32xf32, #tpu.memory_space<vmem>>, %arg6: memref<2x1x32xf32, #tpu.memory_space<vmem>>, %arg7: memref<2x1x32xf32, #tpu.memory_space<vmem>>, %arg8: memref<2x32x96xf32, #tpu.memory_space<vmem>>, %arg9: memref<2x1x96xf32, #tpu.memory_space<vmem>>, %arg10: memref<2x32x32xf32, #tpu.memory_space<vmem>>, %arg11: memref<2x1x32xf32, #tpu.memory_space<vmem>>, %arg12: memref<2x1x32xf32, #tpu.memory_space<vmem>>, %arg13: memref<2x1x32xf32, #tpu.memory_space<vmem>>, %arg14: memref<2x32x64xf32, #tpu.memory_space<vmem>>, %arg15: memref<2x1x64xf32, #tpu.memory_space<vmem>>, %arg16: memref<2x64x32xf32, #tpu.memory_space<vmem>>, %arg17: memref<2x1x32xf32, #tpu.memory_space<vmem>>, %arg18: memref<1x32xf32, #tpu.memory_space<vmem>>, %arg19: memref<1x32xf32, #tpu.memory_space<vmem>>, %arg20: memref<32x10xf32, #tpu.memory_space<vmem>>, %arg21: memref<1x10xf32, #tpu.memory_space<vmem>>, %arg22: memref<1x1x10xf32, #tpu.memory_space<vmem>>, %arg23: memref<5x32xf32, #tpu.memory_space<vmem>>, %arg24: memref<5x32xf32, #tpu.memory_space<vmem>>) attributes {dimension_semantics = [#tpu.dimension_semantics<parallel>], iteration_bounds = array<i64: 2>, scalar_prefetch = 0 : i64, scratch_operands = 2 : i64, tpu.core_type = #tpu.core_type<tc>, window_params = [{transform_indices = @transform_0, window_bounds = array<i64: 1, 4, 768>}, {pipeline_mode = #tpu.pipeline_mode<synchronous>, transform_indices = @transform_1, window_bounds = array<i64: 768, 32>}, {pipeline_mode = #tpu.pipeline_mode<synchronous>, transform_indices = @transform_2, window_bounds = array<i64: 1, 32>}, {pipeline_mode = #tpu.pipeline_mode<synchronous>, transform_indices = @transform_3, window_bounds = array<i64: 1, 32>}, {pipeline_mode = #tpu.pipeline_mode<synchronous>, transform_indices = @transform_4, window_bounds = array<i64: 5, 32>}, {pipeline_mode = #tpu.pipeline_mode<synchronous>, transform_indices = @transform_5, window_bounds = array<i64: 2, 1, 32>}, {pipeline_mode = #tpu.pipeline_mode<synchronous>, transform_indices = @transform_6, window_bounds = array<i64: 2, 1, 32>}, {pipeline_mode = #tpu.pipeline_mode<synchronous>, transform_indices = @transform_7, window_bounds = array<i64: 2, 32, 96>}, {pipeline_mode = #tpu.pipeline_mode<synchronous>, transform_indices = @transform_8, window_bounds = array<i64: 2, 1, 96>}, {pipeline_mode = #tpu.pipeline_mode<synchronous>, transform_indices = @transform_9, window_bounds = array<i64: 2, 32, 32>}, {pipeline_mode = #tpu.pipeline_mode<synchronous>, transform_indices = @transform_10, window_bounds = array<i64: 2, 1, 32>}, {pipeline_mode = #tpu.pipeline_mode<synchronous>, transform_indices = @transform_11, window_bounds = array<i64: 2, 1, 32>}, {pipeline_mode = #tpu.pipeline_mode<synchronous>, transform_indices = @transform_12, window_bounds = array<i64: 2, 1, 32>}, {pipeline_mode = #tpu.pipeline_mode<synchronous>, transform_indices = @transform_13, window_bounds = array<i64: 2, 32, 64>}, {pipeline_mode = #tpu.pipeline_mode<synchronous>, transform_indices = @transform_14, window_bounds = array<i64: 2, 1, 64>}, {pipeline_mode = #tpu.pipeline_mode<synchronous>, transform_indices = @transform_15, window_bounds = array<i64: 2, 64, 32>}, {pipeline_mode = #tpu.pipeline_mode<synchronous>, transform_indices = @transform_16, window_bounds = array<i64: 2, 1, 32>}, {pipeline_mode = #tpu.pipeline_mode<synchronous>, transform_indices = @transform_17, window_bounds = array<i64: 1, 32>}, {pipeline_mode = #tpu.pipeline_mode<synchronous>, transform_indices = @transform_18, window_bounds = array<i64: 1, 32>}, {pipeline_mode = #tpu.pipeline_mode<synchronous>, transform_indices = @transform_19, window_bounds = array<i64: 32, 10>}, {pipeline_mode = #tpu.pipeline_mode<synchronous>, transform_indices = @transform_20, window_bounds = array<i64: 1, 10>}, {transform_indices = @transform_21, window_bounds = array<i64: 1, 1, 10>}]} {
    %c0 = arith.constant 0 : index
    %c0_0 = arith.constant 0 : index
    %c0_1 = arith.constant 0 : index
    %0 = vector.load %arg1[%c0, %c0_0, %c0_1] : memref<1x4x768xf32, #tpu.memory_space<vmem>>, vector<1x4x768xf32>
    %1 = vector.shape_cast %0 : vector<1x4x768xf32> to vector<4x768xf32>
    %c0_2 = arith.constant 0 : index
    %c0_3 = arith.constant 0 : index
    %2 = vector.load %arg2[%c0_2, %c0_3] : memref<768x32xf32, #tpu.memory_space<vmem>>, vector<768x32xf32>
    %3 = arith.truncf %1 : vector<4x768xf32> to vector<4x768xbf16>
    %4 = arith.truncf %2 : vector<768x32xf32> to vector<768x32xbf16>
    %cst = arith.constant dense<0.000000e+00> : vector<4x32xf32>
    %5 = tpu.matmul %3, %4, %cst {dimension_numbers = #tpu.dot_dimension_numbers<[1], [0], [0], [1], [0, 0, 1, 1], [], []>} : vector<4x768xbf16>, vector<768x32xbf16>, vector<4x32xf32> -> vector<4x32xf32>
    %c0_4 = arith.constant 0 : index
    %c0_5 = arith.constant 0 : index
    %6 = vector.load %arg3[%c0_4, %c0_5] : memref<1x32xf32, #tpu.memory_space<vmem>>, vector<1x32xf32>
    %7 = vector.broadcast %6 : vector<1x32xf32> to vector<4x32xf32>
    %8 = arith.addf %5, %7 : vector<4x32xf32>
    %c0_6 = arith.constant 0 : index
    %c0_7 = arith.constant 0 : index
    %9 = vector.load %arg4[%c0_6, %c0_7] : memref<1x32xf32, #tpu.memory_space<vmem>>, vector<1x32xf32>
    %c0_8 = arith.constant 0 : index
    %c0_9 = arith.constant 0 : index
    %10 = vector.load %arg5[%c0_8, %c0_9] : memref<5x32xf32, #tpu.memory_space<vmem>>, vector<1x32xf32>
    %11 = arith.addf %9, %10 : vector<1x32xf32>
    %c0_10 = arith.constant 0 : index
    %c0_11 = arith.constant 0 : index
    %12 = vector.load %arg23[%c0_10, %c0_11] : memref<5x32xf32, #tpu.memory_space<vmem>>, vector<1x32xf32>
    tpu.vector_store %arg23[%c0_10, %c0_11], %11 {strides = array<i32>} : memref<5x32xf32, #tpu.memory_space<vmem>>, vector<1x32xf32>,
    %c1 = arith.constant 1 : index
    %c0_12 = arith.constant 0 : index
    %13 = vector.load %arg5[%c1, %c0_12] : memref<5x32xf32, #tpu.memory_space<vmem>>, vector<4x32xf32>
    %14 = arith.addf %8, %13 : vector<4x32xf32>
    %c1_13 = arith.constant 1 : index
    %c0_14 = arith.constant 0 : index
    %15 = vector.load %arg23[%c1_13, %c0_14] : memref<5x32xf32, #tpu.memory_space<vmem>>, vector<4x32xf32>
    tpu.vector_store %arg23[%c1_13, %c0_14], %14 {strides = array<i32>} : memref<5x32xf32, #tpu.memory_space<vmem>>, vector<4x32xf32>,
    %c0_15 = arith.constant 0 : index
    %c0_16 = arith.constant 0 : index
    %16 = vector.load %arg23[%c0_15, %c0_16] : memref<5x32xf32, #tpu.memory_space<vmem>>, vector<5x32xf32>
    %c0_17 = arith.constant 0 : index
    %c0_18 = arith.constant 0 : index
    %c0_19 = arith.constant 0 : index
    %17 = vector.load %arg6[%c0_17, %c0_18, %c0_19] : memref<2x1x32xf32, #tpu.memory_space<vmem>>, vector<1x1x32xf32>
    %18 = vector.shape_cast %17 : vector<1x1x32xf32> to vector<1x32xf32>
    %c0_20 = arith.constant 0 : index
    %c0_21 = arith.constant 0 : index
    %c0_22 = arith.constant 0 : index
    %19 = vector.load %arg7[%c0_20, %c0_21, %c0_22] : memref<2x1x32xf32, #tpu.memory_space<vmem>>, vector<1x1x32xf32>
    %20 = vector.shape_cast %19 : vector<1x1x32xf32> to vector<1x32xf32>
    %cst_23 = arith.constant dense<0.000000e+00> : vector<5xf32>
    %21 = vector.multi_reduction <add>, %16, %cst_23 [1] : vector<5x32xf32> to vector<5xf32>
    %22 = vector.shape_cast %21 : vector<5xf32> to vector<5x1xf32>
    %cst_24 = arith.constant 3.200000e+01 : f32
    %23 = vector.broadcast %cst_24 : f32 to vector<5x1xf32>
    %24 = arith.divf %22, %23 : vector<5x1xf32>
    %25 = vector.broadcast %24 : vector<5x1xf32> to vector<5x32xf32>
    %26 = arith.subf %16, %25 : vector<5x32xf32>
    %27 = arith.mulf %26, %26 : vector<5x32xf32>
    %cst_25 = arith.constant dense<0.000000e+00> : vector<5xf32>
    %28 = vector.multi_reduction <add>, %27, %cst_25 [1] : vector<5x32xf32> to vector<5xf32>
    %29 = vector.shape_cast %28 : vector<5xf32> to vector<5x1xf32>
    %cst_26 = arith.constant 3.200000e+01 : f32
    %30 = vector.broadcast %cst_26 : f32 to vector<5x1xf32>
    %31 = arith.divf %29, %30 : vector<5x1xf32>
    %32 = vector.broadcast %24 : vector<5x1xf32> to vector<5x32xf32>
    %33 = arith.subf %16, %32 : vector<5x32xf32>
    %cst_27 = arith.constant 9.99999997E-7 : f32
    %34 = vector.broadcast %cst_27 : f32 to vector<5x1xf32>
    %35 = arith.addf %31, %34 : vector<5x1xf32>
    %36 = math.rsqrt %35 : vector<5x1xf32>
    %37 = vector.broadcast %36 : vector<5x1xf32> to vector<5x32xf32>
    %38 = arith.mulf %33, %37 : vector<5x32xf32>
    %39 = vector.broadcast %18 : vector<1x32xf32> to vector<5x32xf32>
    %40 = arith.mulf %38, %39 : vector<5x32xf32>
    %41 = vector.broadcast %20 : vector<1x32xf32> to vector<5x32xf32>
    %42 = arith.addf %40, %41 : vector<5x32xf32>
    %c0_28 = arith.constant 0 : index
    %c0_29 = arith.constant 0 : index
    %c0_30 = arith.constant 0 : index
    %43 = vector.load %arg8[%c0_28, %c0_29, %c0_30] : memref<2x32x96xf32, #tpu.memory_space<vmem>>, vector<1x32x96xf32>
    %44 = vector.shape_cast %43 : vector<1x32x96xf32> to vector<32x96xf32>
    %45 = arith.truncf %42 : vector<5x32xf32> to vector<5x32xbf16>
    %46 = arith.truncf %44 : vector<32x96xf32> to vector<32x96xbf16>
    %cst_31 = arith.constant dense<0.000000e+00> : vector<5x96xf32>
    %47 = tpu.matmul %45, %46, %cst_31 {dimension_numbers = #tpu.dot_dimension_numbers<[1], [0], [0], [1], [0, 0, 1, 1], [], []>} : vector<5x32xbf16>, vector<32x96xbf16>, vector<5x96xf32> -> vector<5x96xf32>
    %c0_32 = arith.constant 0 : index
    %c0_33 = arith.constant 0 : index
    %c0_34 = arith.constant 0 : index
    %48 = vector.load %arg9[%c0_32, %c0_33, %c0_34] : memref<2x1x96xf32, #tpu.memory_space<vmem>>, vector<1x1x96xf32>
    %49 = vector.shape_cast %48 : vector<1x1x96xf32> to vector<1x96xf32>
    %50 = vector.broadcast %49 : vector<1x96xf32> to vector<5x96xf32>
    %51 = arith.addf %47, %50 : vector<5x96xf32>
    %52 = vector.extract_strided_slice %51 {offsets = [0, 0], sizes = [5, 8], strides = [1, 1]} : vector<5x96xf32> to vector<5x8xf32>
    %53 = vector.extract_strided_slice %51 {offsets = [0, 32], sizes = [5, 8], strides = [1, 1]} : vector<5x96xf32> to vector<5x8xf32>
    %54 = vector.extract_strided_slice %51 {offsets = [0, 64], sizes = [5, 8], strides = [1, 1]} : vector<5x96xf32> to vector<5x8xf32>
    %55 = arith.truncf %52 : vector<5x8xf32> to vector<5x8xbf16>
    %56 = arith.truncf %53 : vector<5x8xf32> to vector<5x8xbf16>
    %cst_35 = arith.constant dense<0.000000e+00> : vector<5x5xf32>
    %57 = tpu.matmul %55, %56, %cst_35 {dimension_numbers = #tpu.dot_dimension_numbers<[1], [1], [0], [0], [0, 0, 1, 0], [], []>} : vector<5x8xbf16>, vector<5x8xbf16>, vector<5x5xf32> -> vector<5x5xf32>
    %cst_36 = arith.constant 0.353553385 : f32
    %58 = vector.broadcast %cst_36 : f32 to vector<5x5xf32>
    %59 = arith.mulf %57, %58 : vector<5x5xf32>
    %cst_37 = arith.constant dense<0xFF800000> : vector<5xf32>
    %60 = vector.multi_reduction <maximumf>, %59, %cst_37 [1] : vector<5x5xf32> to vector<5xf32>
    %61 = vector.shape_cast %60 : vector<5xf32> to vector<5x1xf32>
    %62 = vector.broadcast %61 : vector<5x1xf32> to vector<5x5xf32>
    %63 = arith.subf %59, %62 : vector<5x5xf32>
    %64 = math.exp %63 : vector<5x5xf32>
    %cst_38 = arith.constant dense<0.000000e+00> : vector<5xf32>
    %65 = vector.multi_reduction <add>, %64, %cst_38 [1] : vector<5x5xf32> to vector<5xf32>
    %66 = vector.shape_cast %65 : vector<5xf32> to vector<5x1xf32>
    %67 = tpu.reciprocal %66 {approx = true} : vector<5x1xf32> -> vector<5x1xf32>
    %68 = vector.broadcast %67 : vector<5x1xf32> to vector<5x5xf32>
    %69 = arith.mulf %64, %68 : vector<5x5xf32>
    %70 = arith.truncf %69 : vector<5x5xf32> to vector<5x5xbf16>
    %71 = arith.truncf %54 : vector<5x8xf32> to vector<5x8xbf16>
    %cst_39 = arith.constant dense<0.000000e+00> : vector<5x8xf32>
    %72 = tpu.matmul %70, %71, %cst_39 {dimension_numbers = #tpu.dot_dimension_numbers<[1], [0], [0], [1], [0, 0, 1, 1], [], []>} : vector<5x5xbf16>, vector<5x8xbf16>, vector<5x8xf32> -> vector<5x8xf32>
    %c0_40 = arith.constant 0 : index
    %c0_41 = arith.constant 0 : index
    %73 = vector.load %arg24[%c0_40, %c0_41] : memref<5x32xf32, #tpu.memory_space<vmem>>, vector<5x8xf32>
    tpu.vector_store %arg24[%c0_40, %c0_41], %72 {strides = array<i32>} : memref<5x32xf32, #tpu.memory_space<vmem>>, vector<5x8xf32>,
    %74 = vector.extract_strided_slice %51 {offsets = [0, 8], sizes = [5, 8], strides = [1, 1]} : vector<5x96xf32> to vector<5x8xf32>
    %75 = vector.extract_strided_slice %51 {offsets = [0, 40], sizes = [5, 8], strides = [1, 1]} : vector<5x96xf32> to vector<5x8xf32>
    %76 = vector.extract_strided_slice %51 {offsets = [0, 72], sizes = [5, 8], strides = [1, 1]} : vector<5x96xf32> to vector<5x8xf32>
    %77 = arith.truncf %74 : vector<5x8xf32> to vector<5x8xbf16>
    %78 = arith.truncf %75 : vector<5x8xf32> to vector<5x8xbf16>
    %cst_42 = arith.constant dense<0.000000e+00> : vector<5x5xf32>
    %79 = tpu.matmul %77, %78, %cst_42 {dimension_numbers = #tpu.dot_dimension_numbers<[1], [1], [0], [0], [0, 0, 1, 0], [], []>} : vector<5x8xbf16>, vector<5x8xbf16>, vector<5x5xf32> -> vector<5x5xf32>
    %cst_43 = arith.constant 0.353553385 : f32
    %80 = vector.broadcast %cst_43 : f32 to vector<5x5xf32>
    %81 = arith.mulf %79, %80 : vector<5x5xf32>
    %cst_44 = arith.constant dense<0xFF800000> : vector<5xf32>
    %82 = vector.multi_reduction <maximumf>, %81, %cst_44 [1] : vector<5x5xf32> to vector<5xf32>
    %83 = vector.shape_cast %82 : vector<5xf32> to vector<5x1xf32>
    %84 = vector.broadcast %83 : vector<5x1xf32> to vector<5x5xf32>
    %85 = arith.subf %81, %84 : vector<5x5xf32>
    %86 = math.exp %85 : vector<5x5xf32>
    %cst_45 = arith.constant dense<0.000000e+00> : vector<5xf32>
    %87 = vector.multi_reduction <add>, %86, %cst_45 [1] : vector<5x5xf32> to vector<5xf32>
    %88 = vector.shape_cast %87 : vector<5xf32> to vector<5x1xf32>
    %89 = tpu.reciprocal %88 {approx = true} : vector<5x1xf32> -> vector<5x1xf32>
    %90 = vector.broadcast %89 : vector<5x1xf32> to vector<5x5xf32>
    %91 = arith.mulf %86, %90 : vector<5x5xf32>
    %92 = arith.truncf %91 : vector<5x5xf32> to vector<5x5xbf16>
    %93 = arith.truncf %76 : vector<5x8xf32> to vector<5x8xbf16>
    %cst_46 = arith.constant dense<0.000000e+00> : vector<5x8xf32>
    %94 = tpu.matmul %92, %93, %cst_46 {dimension_numbers = #tpu.dot_dimension_numbers<[1], [0], [0], [1], [0, 0, 1, 1], [], []>} : vector<5x5xbf16>, vector<5x8xbf16>, vector<5x8xf32> -> vector<5x8xf32>
    %c0_47 = arith.constant 0 : index
    %c8 = arith.constant 8 : index
    %95 = vector.load %arg24[%c0_47, %c8] : memref<5x32xf32, #tpu.memory_space<vmem>>, vector<5x8xf32>
    tpu.vector_store %arg24[%c0_47, %c8], %94 {strides = array<i32>} : memref<5x32xf32, #tpu.memory_space<vmem>>, vector<5x8xf32>,
    %96 = vector.extract_strided_slice %51 {offsets = [0, 16], sizes = [5, 8], strides = [1, 1]} : vector<5x96xf32> to vector<5x8xf32>
    %97 = vector.extract_strided_slice %51 {offsets = [0, 48], sizes = [5, 8], strides = [1, 1]} : vector<5x96xf32> to vector<5x8xf32>
    %98 = vector.extract_strided_slice %51 {offsets = [0, 80], sizes = [5, 8], strides = [1, 1]} : vector<5x96xf32> to vector<5x8xf32>
    %99 = arith.truncf %96 : vector<5x8xf32> to vector<5x8xbf16>
    %100 = arith.truncf %97 : vector<5x8xf32> to vector<5x8xbf16>
    %cst_48 = arith.constant dense<0.000000e+00> : vector<5x5xf32>
    %101 = tpu.matmul %99, %100, %cst_48 {dimension_numbers = #tpu.dot_dimension_numbers<[1], [1], [0], [0], [0, 0, 1, 0], [], []>} : vector<5x8xbf16>, vector<5x8xbf16>, vector<5x5xf32> -> vector<5x5xf32>
    %cst_49 = arith.constant 0.353553385 : f32
    %102 = vector.broadcast %cst_49 : f32 to vector<5x5xf32>
    %103 = arith.mulf %101, %102 : vector<5x5xf32>
    %cst_50 = arith.constant dense<0xFF800000> : vector<5xf32>
    %104 = vector.multi_reduction <maximumf>, %103, %cst_50 [1] : vector<5x5xf32> to vector<5xf32>
    %105 = vector.shape_cast %104 : vector<5xf32> to vector<5x1xf32>
    %106 = vector.broadcast %105 : vector<5x1xf32> to vector<5x5xf32>
    %107 = arith.subf %103, %106 : vector<5x5xf32>
    %108 = math.exp %107 : vector<5x5xf32>
    %cst_51 = arith.constant dense<0.000000e+00> : vector<5xf32>
    %109 = vector.multi_reduction <add>, %108, %cst_51 [1] : vector<5x5xf32> to vector<5xf32>
    %110 = vector.shape_cast %109 : vector<5xf32> to vector<5x1xf32>
    %111 = tpu.reciprocal %110 {approx = true} : vector<5x1xf32> -> vector<5x1xf32>
    %112 = vector.broadcast %111 : vector<5x1xf32> to vector<5x5xf32>
    %113 = arith.mulf %108, %112 : vector<5x5xf32>
    %114 = arith.truncf %113 : vector<5x5xf32> to vector<5x5xbf16>
    %115 = arith.truncf %98 : vector<5x8xf32> to vector<5x8xbf16>
    %cst_52 = arith.constant dense<0.000000e+00> : vector<5x8xf32>
    %116 = tpu.matmul %114, %115, %cst_52 {dimension_numbers = #tpu.dot_dimension_numbers<[1], [0], [0], [1], [0, 0, 1, 1], [], []>} : vector<5x5xbf16>, vector<5x8xbf16>, vector<5x8xf32> -> vector<5x8xf32>
    %c0_53 = arith.constant 0 : index
    %c16 = arith.constant 16 : index
    %117 = vector.load %arg24[%c0_53, %c16] : memref<5x32xf32, #tpu.memory_space<vmem>>, vector<5x8xf32>
    tpu.vector_store %arg24[%c0_53, %c16], %116 {strides = array<i32>} : memref<5x32xf32, #tpu.memory_space<vmem>>, vector<5x8xf32>,
    %118 = vector.extract_strided_slice %51 {offsets = [0, 24], sizes = [5, 8], strides = [1, 1]} : vector<5x96xf32> to vector<5x8xf32>
    %119 = vector.extract_strided_slice %51 {offsets = [0, 56], sizes = [5, 8], strides = [1, 1]} : vector<5x96xf32> to vector<5x8xf32>
    %120 = vector.extract_strided_slice %51 {offsets = [0, 88], sizes = [5, 8], strides = [1, 1]} : vector<5x96xf32> to vector<5x8xf32>
    %121 = arith.truncf %118 : vector<5x8xf32> to vector<5x8xbf16>
    %122 = arith.truncf %119 : vector<5x8xf32> to vector<5x8xbf16>
    %cst_54 = arith.constant dense<0.000000e+00> : vector<5x5xf32>
    %123 = tpu.matmul %121, %122, %cst_54 {dimension_numbers = #tpu.dot_dimension_numbers<[1], [1], [0], [0], [0, 0, 1, 0], [], []>} : vector<5x8xbf16>, vector<5x8xbf16>, vector<5x5xf32> -> vector<5x5xf32>
    %cst_55 = arith.constant 0.353553385 : f32
    %124 = vector.broadcast %cst_55 : f32 to vector<5x5xf32>
    %125 = arith.mulf %123, %124 : vector<5x5xf32>
    %cst_56 = arith.constant dense<0xFF800000> : vector<5xf32>
    %126 = vector.multi_reduction <maximumf>, %125, %cst_56 [1] : vector<5x5xf32> to vector<5xf32>
    %127 = vector.shape_cast %126 : vector<5xf32> to vector<5x1xf32>
    %128 = vector.broadcast %127 : vector<5x1xf32> to vector<5x5xf32>
    %129 = arith.subf %125, %128 : vector<5x5xf32>
    %130 = math.exp %129 : vector<5x5xf32>
    %cst_57 = arith.constant dense<0.000000e+00> : vector<5xf32>
    %131 = vector.multi_reduction <add>, %130, %cst_57 [1] : vector<5x5xf32> to vector<5xf32>
    %132 = vector.shape_cast %131 : vector<5xf32> to vector<5x1xf32>
    %133 = tpu.reciprocal %132 {approx = true} : vector<5x1xf32> -> vector<5x1xf32>
    %134 = vector.broadcast %133 : vector<5x1xf32> to vector<5x5xf32>
    %135 = arith.mulf %130, %134 : vector<5x5xf32>
    %136 = arith.truncf %135 : vector<5x5xf32> to vector<5x5xbf16>
    %137 = arith.truncf %120 : vector<5x8xf32> to vector<5x8xbf16>
    %cst_58 = arith.constant dense<0.000000e+00> : vector<5x8xf32>
    %138 = tpu.matmul %136, %137, %cst_58 {dimension_numbers = #tpu.dot_dimension_numbers<[1], [0], [0], [1], [0, 0, 1, 1], [], []>} : vector<5x5xbf16>, vector<5x8xbf16>, vector<5x8xf32> -> vector<5x8xf32>
    %c0_59 = arith.constant 0 : index
    %c24 = arith.constant 24 : index
    %139 = vector.load %arg24[%c0_59, %c24] : memref<5x32xf32, #tpu.memory_space<vmem>>, vector<5x8xf32>
    tpu.vector_store %arg24[%c0_59, %c24], %138 {strides = array<i32>} : memref<5x32xf32, #tpu.memory_space<vmem>>, vector<5x8xf32>,
    %c0_60 = arith.constant 0 : index
    %c0_61 = arith.constant 0 : index
    %140 = vector.load %arg24[%c0_60, %c0_61] : memref<5x32xf32, #tpu.memory_space<vmem>>, vector<5x32xf32>
    %c0_62 = arith.constant 0 : index
    %c0_63 = arith.constant 0 : index
    %c0_64 = arith.constant 0 : index
    %141 = vector.load %arg10[%c0_62, %c0_63, %c0_64] : memref<2x32x32xf32, #tpu.memory_space<vmem>>, vector<1x32x32xf32>
    %142 = vector.shape_cast %141 : vector<1x32x32xf32> to vector<32x32xf32>
    %143 = arith.truncf %140 : vector<5x32xf32> to vector<5x32xbf16>
    %144 = arith.truncf %142 : vector<32x32xf32> to vector<32x32xbf16>
    %cst_65 = arith.constant dense<0.000000e+00> : vector<5x32xf32>
    %145 = tpu.matmul %143, %144, %cst_65 {dimension_numbers = #tpu.dot_dimension_numbers<[1], [0], [0], [1], [0, 0, 1, 1], [], []>} : vector<5x32xbf16>, vector<32x32xbf16>, vector<5x32xf32> -> vector<5x32xf32>
    %146 = arith.addf %16, %145 : vector<5x32xf32>
    %c0_66 = arith.constant 0 : index
    %c0_67 = arith.constant 0 : index
    %c0_68 = arith.constant 0 : index
    %147 = vector.load %arg11[%c0_66, %c0_67, %c0_68] : memref<2x1x32xf32, #tpu.memory_space<vmem>>, vector<1x1x32xf32>
    %148 = vector.shape_cast %147 : vector<1x1x32xf32> to vector<1x32xf32>
    %149 = vector.broadcast %148 : vector<1x32xf32> to vector<5x32xf32>
    %150 = arith.addf %146, %149 : vector<5x32xf32>
    %c0_69 = arith.constant 0 : index
    %c0_70 = arith.constant 0 : index
    %c0_71 = arith.constant 0 : index
    %151 = vector.load %arg12[%c0_69, %c0_70, %c0_71] : memref<2x1x32xf32, #tpu.memory_space<vmem>>, vector<1x1x32xf32>
    %152 = vector.shape_cast %151 : vector<1x1x32xf32> to vector<1x32xf32>
    %c0_72 = arith.constant 0 : index
    %c0_73 = arith.constant 0 : index
    %c0_74 = arith.constant 0 : index
    %153 = vector.load %arg13[%c0_72, %c0_73, %c0_74] : memref<2x1x32xf32, #tpu.memory_space<vmem>>, vector<1x1x32xf32>
    %154 = vector.shape_cast %153 : vector<1x1x32xf32> to vector<1x32xf32>
    %cst_75 = arith.constant dense<0.000000e+00> : vector<5xf32>
    %155 = vector.multi_reduction <add>, %150, %cst_75 [1] : vector<5x32xf32> to vector<5xf32>
    %156 = vector.shape_cast %155 : vector<5xf32> to vector<5x1xf32>
    %cst_76 = arith.constant 3.200000e+01 : f32
    %157 = vector.broadcast %cst_76 : f32 to vector<5x1xf32>
    %158 = arith.divf %156, %157 : vector<5x1xf32>
    %159 = vector.broadcast %158 : vector<5x1xf32> to vector<5x32xf32>
    %160 = arith.subf %150, %159 : vector<5x32xf32>
    %161 = arith.mulf %160, %160 : vector<5x32xf32>
    %cst_77 = arith.constant dense<0.000000e+00> : vector<5xf32>
    %162 = vector.multi_reduction <add>, %161, %cst_77 [1] : vector<5x32xf32> to vector<5xf32>
    %163 = vector.shape_cast %162 : vector<5xf32> to vector<5x1xf32>
    %cst_78 = arith.constant 3.200000e+01 : f32
    %164 = vector.broadcast %cst_78 : f32 to vector<5x1xf32>
    %165 = arith.divf %163, %164 : vector<5x1xf32>
    %166 = vector.broadcast %158 : vector<5x1xf32> to vector<5x32xf32>
    %167 = arith.subf %150, %166 : vector<5x32xf32>
    %cst_79 = arith.constant 9.99999997E-7 : f32
    %168 = vector.broadcast %cst_79 : f32 to vector<5x1xf32>
    %169 = arith.addf %165, %168 : vector<5x1xf32>
    %170 = math.rsqrt %169 : vector<5x1xf32>
    %171 = vector.broadcast %170 : vector<5x1xf32> to vector<5x32xf32>
    %172 = arith.mulf %167, %171 : vector<5x32xf32>
    %173 = vector.broadcast %152 : vector<1x32xf32> to vector<5x32xf32>
    %174 = arith.mulf %172, %173 : vector<5x32xf32>
    %175 = vector.broadcast %154 : vector<1x32xf32> to vector<5x32xf32>
    %176 = arith.addf %174, %175 : vector<5x32xf32>
    %c0_80 = arith.constant 0 : index
    %c0_81 = arith.constant 0 : index
    %c0_82 = arith.constant 0 : index
    %177 = vector.load %arg14[%c0_80, %c0_81, %c0_82] : memref<2x32x64xf32, #tpu.memory_space<vmem>>, vector<1x32x64xf32>
    %178 = vector.shape_cast %177 : vector<1x32x64xf32> to vector<32x64xf32>
    %179 = arith.truncf %176 : vector<5x32xf32> to vector<5x32xbf16>
    %180 = arith.truncf %178 : vector<32x64xf32> to vector<32x64xbf16>
    %cst_83 = arith.constant dense<0.000000e+00> : vector<5x64xf32>
    %181 = tpu.matmul %179, %180, %cst_83 {dimension_numbers = #tpu.dot_dimension_numbers<[1], [0], [0], [1], [0, 0, 1, 1], [], []>} : vector<5x32xbf16>, vector<32x64xbf16>, vector<5x64xf32> -> vector<5x64xf32>
    %c0_84 = arith.constant 0 : index
    %c0_85 = arith.constant 0 : index
    %c0_86 = arith.constant 0 : index
    %182 = vector.load %arg15[%c0_84, %c0_85, %c0_86] : memref<2x1x64xf32, #tpu.memory_space<vmem>>, vector<1x1x64xf32>
    %183 = vector.shape_cast %182 : vector<1x1x64xf32> to vector<1x64xf32>
    %184 = vector.broadcast %183 : vector<1x64xf32> to vector<5x64xf32>
    %185 = arith.addf %181, %184 : vector<5x64xf32>
    %cst_87 = arith.constant 5.000000e-01 : f32
    %186 = vector.broadcast %cst_87 : f32 to vector<5x64xf32>
    %187 = arith.mulf %186, %185 : vector<5x64xf32>
    %cst_88 = arith.constant 4.471500e-02 : f32
    %188 = vector.broadcast %cst_88 : f32 to vector<5x64xf32>
    %189 = arith.mulf %188, %185 : vector<5x64xf32>
    %190 = arith.mulf %189, %185 : vector<5x64xf32>
    %191 = arith.mulf %190, %185 : vector<5x64xf32>
    %192 = arith.addf %185, %191 : vector<5x64xf32>
    %cst_89 = arith.constant 0.797884583 : f32
    %193 = vector.broadcast %cst_89 : f32 to vector<5x64xf32>
    %194 = arith.mulf %193, %192 : vector<5x64xf32>
    %195 = math.tanh %194 : vector<5x64xf32>
    %cst_90 = arith.constant 1.000000e+00 : f32
    %196 = vector.broadcast %cst_90 : f32 to vector<5x64xf32>
    %197 = arith.addf %196, %195 : vector<5x64xf32>
    %198 = arith.mulf %187, %197 : vector<5x64xf32>
    %c0_91 = arith.constant 0 : index
    %c0_92 = arith.constant 0 : index
    %c0_93 = arith.constant 0 : index
    %199 = vector.load %arg16[%c0_91, %c0_92, %c0_93] : memref<2x64x32xf32, #tpu.memory_space<vmem>>, vector<1x64x32xf32>
    %200 = vector.shape_cast %199 : vector<1x64x32xf32> to vector<64x32xf32>
    %201 = arith.truncf %198 : vector<5x64xf32> to vector<5x64xbf16>
    %202 = arith.truncf %200 : vector<64x32xf32> to vector<64x32xbf16>
    %cst_94 = arith.constant dense<0.000000e+00> : vector<5x32xf32>
    %203 = tpu.matmul %201, %202, %cst_94 {dimension_numbers = #tpu.dot_dimension_numbers<[1], [0], [0], [1], [0, 0, 1, 1], [], []>} : vector<5x64xbf16>, vector<64x32xbf16>, vector<5x32xf32> -> vector<5x32xf32>
    %204 = arith.addf %150, %203 : vector<5x32xf32>
    %c0_95 = arith.constant 0 : index
    %c0_96 = arith.constant 0 : index
    %c0_97 = arith.constant 0 : index
    %205 = vector.load %arg17[%c0_95, %c0_96, %c0_97] : memref<2x1x32xf32, #tpu.memory_space<vmem>>, vector<1x1x32xf32>
    %206 = vector.shape_cast %205 : vector<1x1x32xf32> to vector<1x32xf32>
    %207 = vector.broadcast %206 : vector<1x32xf32> to vector<5x32xf32>
    %208 = arith.addf %204, %207 : vector<5x32xf32>
    %c1_98 = arith.constant 1 : index
    %c0_99 = arith.constant 0 : index
    %c0_100 = arith.constant 0 : index
    %209 = vector.load %arg6[%c1_98, %c0_99, %c0_100] : memref<2x1x32xf32, #tpu.memory_space<vmem>>, vector<1x1x32xf32>
    %210 = vector.shape_cast %209 : vector<1x1x32xf32> to vector<1x32xf32>
    %c1_101 = arith.constant 1 : index
    %c0_102 = arith.constant 0 : index
    %c0_103 = arith.constant 0 : index
    %211 = vector.load %arg7[%c1_101, %c0_102, %c0_103] : memref<2x1x32xf32, #tpu.memory_space<vmem>>, vector<1x1x32xf32>
    %212 = vector.shape_cast %211 : vector<1x1x32xf32> to vector<1x32xf32>
    %cst_104 = arith.constant dense<0.000000e+00> : vector<5xf32>
    %213 = vector.multi_reduction <add>, %208, %cst_104 [1] : vector<5x32xf32> to vector<5xf32>
    %214 = vector.shape_cast %213 : vector<5xf32> to vector<5x1xf32>
    %cst_105 = arith.constant 3.200000e+01 : f32
    %215 = vector.broadcast %cst_105 : f32 to vector<5x1xf32>
    %216 = arith.divf %214, %215 : vector<5x1xf32>
    %217 = vector.broadcast %216 : vector<5x1xf32> to vector<5x32xf32>
    %218 = arith.subf %208, %217 : vector<5x32xf32>
    %219 = arith.mulf %218, %218 : vector<5x32xf32>
    %cst_106 = arith.constant dense<0.000000e+00> : vector<5xf32>
    %220 = vector.multi_reduction <add>, %219, %cst_106 [1] : vector<5x32xf32> to vector<5xf32>
    %221 = vector.shape_cast %220 : vector<5xf32> to vector<5x1xf32>
    %cst_107 = arith.constant 3.200000e+01 : f32
    %222 = vector.broadcast %cst_107 : f32 to vector<5x1xf32>
    %223 = arith.divf %221, %222 : vector<5x1xf32>
    %224 = vector.broadcast %216 : vector<5x1xf32> to vector<5x32xf32>
    %225 = arith.subf %208, %224 : vector<5x32xf32>
    %cst_108 = arith.constant 9.99999997E-7 : f32
    %226 = vector.broadcast %cst_108 : f32 to vector<5x1xf32>
    %227 = arith.addf %223, %226 : vector<5x1xf32>
    %228 = math.rsqrt %227 : vector<5x1xf32>
    %229 = vector.broadcast %228 : vector<5x1xf32> to vector<5x32xf32>
    %230 = arith.mulf %225, %229 : vector<5x32xf32>
    %231 = vector.broadcast %210 : vector<1x32xf32> to vector<5x32xf32>
    %232 = arith.mulf %230, %231 : vector<5x32xf32>
    %233 = vector.broadcast %212 : vector<1x32xf32> to vector<5x32xf32>
    %234 = arith.addf %232, %233 : vector<5x32xf32>
    %c1_109 = arith.constant 1 : index
    %c0_110 = arith.constant 0 : index
    %c0_111 = arith.constant 0 : index
    %235 = vector.load %arg8[%c1_109, %c0_110, %c0_111] : memref<2x32x96xf32, #tpu.memory_space<vmem>>, vector<1x32x96xf32>
    %236 = vector.shape_cast %235 : vector<1x32x96xf32> to vector<32x96xf32>
    %237 = arith.truncf %234 : vector<5x32xf32> to vector<5x32xbf16>
    %238 = arith.truncf %236 : vector<32x96xf32> to vector<32x96xbf16>
    %cst_112 = arith.constant dense<0.000000e+00> : vector<5x96xf32>
    %239 = tpu.matmul %237, %238, %cst_112 {dimension_numbers = #tpu.dot_dimension_numbers<[1], [0], [0], [1], [0, 0, 1, 1], [], []>} : vector<5x32xbf16>, vector<32x96xbf16>, vector<5x96xf32> -> vector<5x96xf32>
    %c1_113 = arith.constant 1 : index
    %c0_114 = arith.constant 0 : index
    %c0_115 = arith.constant 0 : index
    %240 = vector.load %arg9[%c1_113, %c0_114, %c0_115] : memref<2x1x96xf32, #tpu.memory_space<vmem>>, vector<1x1x96xf32>
    %241 = vector.shape_cast %240 : vector<1x1x96xf32> to vector<1x96xf32>
    %242 = vector.broadcast %241 : vector<1x96xf32> to vector<5x96xf32>
    %243 = arith.addf %239, %242 : vector<5x96xf32>
    %244 = vector.extract_strided_slice %243 {offsets = [0, 0], sizes = [5, 8], strides = [1, 1]} : vector<5x96xf32> to vector<5x8xf32>
    %245 = vector.extract_strided_slice %243 {offsets = [0, 32], sizes = [5, 8], strides = [1, 1]} : vector<5x96xf32> to vector<5x8xf32>
    %246 = vector.extract_strided_slice %243 {offsets = [0, 64], sizes = [5, 8], strides = [1, 1]} : vector<5x96xf32> to vector<5x8xf32>
    %247 = arith.truncf %244 : vector<5x8xf32> to vector<5x8xbf16>
    %248 = arith.truncf %245 : vector<5x8xf32> to vector<5x8xbf16>
    %cst_116 = arith.constant dense<0.000000e+00> : vector<5x5xf32>
    %249 = tpu.matmul %247, %248, %cst_116 {dimension_numbers = #tpu.dot_dimension_numbers<[1], [1], [0], [0], [0, 0, 1, 0], [], []>} : vector<5x8xbf16>, vector<5x8xbf16>, vector<5x5xf32> -> vector<5x5xf32>
    %cst_117 = arith.constant 0.353553385 : f32
    %250 = vector.broadcast %cst_117 : f32 to vector<5x5xf32>
    %251 = arith.mulf %249, %250 : vector<5x5xf32>
    %cst_118 = arith.constant dense<0xFF800000> : vector<5xf32>
    %252 = vector.multi_reduction <maximumf>, %251, %cst_118 [1] : vector<5x5xf32> to vector<5xf32>
    %253 = vector.shape_cast %252 : vector<5xf32> to vector<5x1xf32>
    %254 = vector.broadcast %253 : vector<5x1xf32> to vector<5x5xf32>
    %255 = arith.subf %251, %254 : vector<5x5xf32>
    %256 = math.exp %255 : vector<5x5xf32>
    %cst_119 = arith.constant dense<0.000000e+00> : vector<5xf32>
    %257 = vector.multi_reduction <add>, %256, %cst_119 [1] : vector<5x5xf32> to vector<5xf32>
    %258 = vector.shape_cast %257 : vector<5xf32> to vector<5x1xf32>
    %259 = tpu.reciprocal %258 {approx = true} : vector<5x1xf32> -> vector<5x1xf32>
    %260 = vector.broadcast %259 : vector<5x1xf32> to vector<5x5xf32>
    %261 = arith.mulf %256, %260 : vector<5x5xf32>
    %262 = arith.truncf %261 : vector<5x5xf32> to vector<5x5xbf16>
    %263 = arith.truncf %246 : vector<5x8xf32> to vector<5x8xbf16>
    %cst_120 = arith.constant dense<0.000000e+00> : vector<5x8xf32>
    %264 = tpu.matmul %262, %263, %cst_120 {dimension_numbers = #tpu.dot_dimension_numbers<[1], [0], [0], [1], [0, 0, 1, 1], [], []>} : vector<5x5xbf16>, vector<5x8xbf16>, vector<5x8xf32> -> vector<5x8xf32>
    %c0_121 = arith.constant 0 : index
    %c0_122 = arith.constant 0 : index
    %265 = vector.load %arg24[%c0_121, %c0_122] : memref<5x32xf32, #tpu.memory_space<vmem>>, vector<5x8xf32>
    tpu.vector_store %arg24[%c0_121, %c0_122], %264 {strides = array<i32>} : memref<5x32xf32, #tpu.memory_space<vmem>>, vector<5x8xf32>,
    %266 = vector.extract_strided_slice %243 {offsets = [0, 8], sizes = [5, 8], strides = [1, 1]} : vector<5x96xf32> to vector<5x8xf32>
    %267 = vector.extract_strided_slice %243 {offsets = [0, 40], sizes = [5, 8], strides = [1, 1]} : vector<5x96xf32> to vector<5x8xf32>
    %268 = vector.extract_strided_slice %243 {offsets = [0, 72], sizes = [5, 8], strides = [1, 1]} : vector<5x96xf32> to vector<5x8xf32>
    %269 = arith.truncf %266 : vector<5x8xf32> to vector<5x8xbf16>
    %270 = arith.truncf %267 : vector<5x8xf32> to vector<5x8xbf16>
    %cst_123 = arith.constant dense<0.000000e+00> : vector<5x5xf32>
    %271 = tpu.matmul %269, %270, %cst_123 {dimension_numbers = #tpu.dot_dimension_numbers<[1], [1], [0], [0], [0, 0, 1, 0], [], []>} : vector<5x8xbf16>, vector<5x8xbf16>, vector<5x5xf32> -> vector<5x5xf32>
    %cst_124 = arith.constant 0.353553385 : f32
    %272 = vector.broadcast %cst_124 : f32 to vector<5x5xf32>
    %273 = arith.mulf %271, %272 : vector<5x5xf32>
    %cst_125 = arith.constant dense<0xFF800000> : vector<5xf32>
    %274 = vector.multi_reduction <maximumf>, %273, %cst_125 [1] : vector<5x5xf32> to vector<5xf32>
    %275 = vector.shape_cast %274 : vector<5xf32> to vector<5x1xf32>
    %276 = vector.broadcast %275 : vector<5x1xf32> to vector<5x5xf32>
    %277 = arith.subf %273, %276 : vector<5x5xf32>
    %278 = math.exp %277 : vector<5x5xf32>
    %cst_126 = arith.constant dense<0.000000e+00> : vector<5xf32>
    %279 = vector.multi_reduction <add>, %278, %cst_126 [1] : vector<5x5xf32> to vector<5xf32>
    %280 = vector.shape_cast %279 : vector<5xf32> to vector<5x1xf32>
    %281 = tpu.reciprocal %280 {approx = true} : vector<5x1xf32> -> vector<5x1xf32>
    %282 = vector.broadcast %281 : vector<5x1xf32> to vector<5x5xf32>
    %283 = arith.mulf %278, %282 : vector<5x5xf32>
    %284 = arith.truncf %283 : vector<5x5xf32> to vector<5x5xbf16>
    %285 = arith.truncf %268 : vector<5x8xf32> to vector<5x8xbf16>
    %cst_127 = arith.constant dense<0.000000e+00> : vector<5x8xf32>
    %286 = tpu.matmul %284, %285, %cst_127 {dimension_numbers = #tpu.dot_dimension_numbers<[1], [0], [0], [1], [0, 0, 1, 1], [], []>} : vector<5x5xbf16>, vector<5x8xbf16>, vector<5x8xf32> -> vector<5x8xf32>
    %c0_128 = arith.constant 0 : index
    %c8_129 = arith.constant 8 : index
    %287 = vector.load %arg24[%c0_128, %c8_129] : memref<5x32xf32, #tpu.memory_space<vmem>>, vector<5x8xf32>
    tpu.vector_store %arg24[%c0_128, %c8_129], %286 {strides = array<i32>} : memref<5x32xf32, #tpu.memory_space<vmem>>, vector<5x8xf32>,
    %288 = vector.extract_strided_slice %243 {offsets = [0, 16], sizes = [5, 8], strides = [1, 1]} : vector<5x96xf32> to vector<5x8xf32>
    %289 = vector.extract_strided_slice %243 {offsets = [0, 48], sizes = [5, 8], strides = [1, 1]} : vector<5x96xf32> to vector<5x8xf32>
    %290 = vector.extract_strided_slice %243 {offsets = [0, 80], sizes = [5, 8], strides = [1, 1]} : vector<5x96xf32> to vector<5x8xf32>
    %291 = arith.truncf %288 : vector<5x8xf32> to vector<5x8xbf16>
    %292 = arith.truncf %289 : vector<5x8xf32> to vector<5x8xbf16>
    %cst_130 = arith.constant dense<0.000000e+00> : vector<5x5xf32>
    %293 = tpu.matmul %291, %292, %cst_130 {dimension_numbers = #tpu.dot_dimension_numbers<[1], [1], [0], [0], [0, 0, 1, 0], [], []>} : vector<5x8xbf16>, vector<5x8xbf16>, vector<5x5xf32> -> vector<5x5xf32>
    %cst_131 = arith.constant 0.353553385 : f32
    %294 = vector.broadcast %cst_131 : f32 to vector<5x5xf32>
    %295 = arith.mulf %293, %294 : vector<5x5xf32>
    %cst_132 = arith.constant dense<0xFF800000> : vector<5xf32>
    %296 = vector.multi_reduction <maximumf>, %295, %cst_132 [1] : vector<5x5xf32> to vector<5xf32>
    %297 = vector.shape_cast %296 : vector<5xf32> to vector<5x1xf32>
    %298 = vector.broadcast %297 : vector<5x1xf32> to vector<5x5xf32>
    %299 = arith.subf %295, %298 : vector<5x5xf32>
    %300 = math.exp %299 : vector<5x5xf32>
    %cst_133 = arith.constant dense<0.000000e+00> : vector<5xf32>
    %301 = vector.multi_reduction <add>, %300, %cst_133 [1] : vector<5x5xf32> to vector<5xf32>
    %302 = vector.shape_cast %301 : vector<5xf32> to vector<5x1xf32>
    %303 = tpu.reciprocal %302 {approx = true} : vector<5x1xf32> -> vector<5x1xf32>
    %304 = vector.broadcast %303 : vector<5x1xf32> to vector<5x5xf32>
    %305 = arith.mulf %300, %304 : vector<5x5xf32>
    %306 = arith.truncf %305 : vector<5x5xf32> to vector<5x5xbf16>
    %307 = arith.truncf %290 : vector<5x8xf32> to vector<5x8xbf16>
    %cst_134 = arith.constant dense<0.000000e+00> : vector<5x8xf32>
    %308 = tpu.matmul %306, %307, %cst_134 {dimension_numbers = #tpu.dot_dimension_numbers<[1], [0], [0], [1], [0, 0, 1, 1], [], []>} : vector<5x5xbf16>, vector<5x8xbf16>, vector<5x8xf32> -> vector<5x8xf32>
    %c0_135 = arith.constant 0 : index
    %c16_136 = arith.constant 16 : index
    %309 = vector.load %arg24[%c0_135, %c16_136] : memref<5x32xf32, #tpu.memory_space<vmem>>, vector<5x8xf32>
    tpu.vector_store %arg24[%c0_135, %c16_136], %308 {strides = array<i32>} : memref<5x32xf32, #tpu.memory_space<vmem>>, vector<5x8xf32>,
    %310 = vector.extract_strided_slice %243 {offsets = [0, 24], sizes = [5, 8], strides = [1, 1]} : vector<5x96xf32> to vector<5x8xf32>
    %311 = vector.extract_strided_slice %243 {offsets = [0, 56], sizes = [5, 8], strides = [1, 1]} : vector<5x96xf32> to vector<5x8xf32>
    %312 = vector.extract_strided_slice %243 {offsets = [0, 88], sizes = [5, 8], strides = [1, 1]} : vector<5x96xf32> to vector<5x8xf32>
    %313 = arith.truncf %310 : vector<5x8xf32> to vector<5x8xbf16>
    %314 = arith.truncf %311 : vector<5x8xf32> to vector<5x8xbf16>
    %cst_137 = arith.constant dense<0.000000e+00> : vector<5x5xf32>
    %315 = tpu.matmul %313, %314, %cst_137 {dimension_numbers = #tpu.dot_dimension_numbers<[1], [1], [0], [0], [0, 0, 1, 0], [], []>} : vector<5x8xbf16>, vector<5x8xbf16>, vector<5x5xf32> -> vector<5x5xf32>
    %cst_138 = arith.constant 0.353553385 : f32
    %316 = vector.broadcast %cst_138 : f32 to vector<5x5xf32>
    %317 = arith.mulf %315, %316 : vector<5x5xf32>
    %cst_139 = arith.constant dense<0xFF800000> : vector<5xf32>
    %318 = vector.multi_reduction <maximumf>, %317, %cst_139 [1] : vector<5x5xf32> to vector<5xf32>
    %319 = vector.shape_cast %318 : vector<5xf32> to vector<5x1xf32>
    %320 = vector.broadcast %319 : vector<5x1xf32> to vector<5x5xf32>
    %321 = arith.subf %317, %320 : vector<5x5xf32>
    %322 = math.exp %321 : vector<5x5xf32>
    %cst_140 = arith.constant dense<0.000000e+00> : vector<5xf32>
    %323 = vector.multi_reduction <add>, %322, %cst_140 [1] : vector<5x5xf32> to vector<5xf32>
    %324 = vector.shape_cast %323 : vector<5xf32> to vector<5x1xf32>
    %325 = tpu.reciprocal %324 {approx = true} : vector<5x1xf32> -> vector<5x1xf32>
    %326 = vector.broadcast %325 : vector<5x1xf32> to vector<5x5xf32>
    %327 = arith.mulf %322, %326 : vector<5x5xf32>
    %328 = arith.truncf %327 : vector<5x5xf32> to vector<5x5xbf16>
    %329 = arith.truncf %312 : vector<5x8xf32> to vector<5x8xbf16>
    %cst_141 = arith.constant dense<0.000000e+00> : vector<5x8xf32>
    %330 = tpu.matmul %328, %329, %cst_141 {dimension_numbers = #tpu.dot_dimension_numbers<[1], [0], [0], [1], [0, 0, 1, 1], [], []>} : vector<5x5xbf16>, vector<5x8xbf16>, vector<5x8xf32> -> vector<5x8xf32>
    %c0_142 = arith.constant 0 : index
    %c24_143 = arith.constant 24 : index
    %331 = vector.load %arg24[%c0_142, %c24_143] : memref<5x32xf32, #tpu.memory_space<vmem>>, vector<5x8xf32>
    tpu.vector_store %arg24[%c0_142, %c24_143], %330 {strides = array<i32>} : memref<5x32xf32, #tpu.memory_space<vmem>>, vector<5x8xf32>,
    %c0_144 = arith.constant 0 : index
    %c0_145 = arith.constant 0 : index
    %332 = vector.load %arg24[%c0_144, %c0_145] : memref<5x32xf32, #tpu.memory_space<vmem>>, vector<5x32xf32>
    %c1_146 = arith.constant 1 : index
    %c0_147 = arith.constant 0 : index
    %c0_148 = arith.constant 0 : index
    %333 = vector.load %arg10[%c1_146, %c0_147, %c0_148] : memref<2x32x32xf32, #tpu.memory_space<vmem>>, vector<1x32x32xf32>
    %334 = vector.shape_cast %333 : vector<1x32x32xf32> to vector<32x32xf32>
    %335 = arith.truncf %332 : vector<5x32xf32> to vector<5x32xbf16>
    %336 = arith.truncf %334 : vector<32x32xf32> to vector<32x32xbf16>
    %cst_149 = arith.constant dense<0.000000e+00> : vector<5x32xf32>
    %337 = tpu.matmul %335, %336, %cst_149 {dimension_numbers = #tpu.dot_dimension_numbers<[1], [0], [0], [1], [0, 0, 1, 1], [], []>} : vector<5x32xbf16>, vector<32x32xbf16>, vector<5x32xf32> -> vector<5x32xf32>
    %338 = arith.addf %208, %337 : vector<5x32xf32>
    %c1_150 = arith.constant 1 : index
    %c0_151 = arith.constant 0 : index
    %c0_152 = arith.constant 0 : index
    %339 = vector.load %arg11[%c1_150, %c0_151, %c0_152] : memref<2x1x32xf32, #tpu.memory_space<vmem>>, vector<1x1x32xf32>
    %340 = vector.shape_cast %339 : vector<1x1x32xf32> to vector<1x32xf32>
    %341 = vector.broadcast %340 : vector<1x32xf32> to vector<5x32xf32>
    %342 = arith.addf %338, %341 : vector<5x32xf32>
    %c1_153 = arith.constant 1 : index
    %c0_154 = arith.constant 0 : index
    %c0_155 = arith.constant 0 : index
    %343 = vector.load %arg12[%c1_153, %c0_154, %c0_155] : memref<2x1x32xf32, #tpu.memory_space<vmem>>, vector<1x1x32xf32>
    %344 = vector.shape_cast %343 : vector<1x1x32xf32> to vector<1x32xf32>
    %c1_156 = arith.constant 1 : index
    %c0_157 = arith.constant 0 : index
    %c0_158 = arith.constant 0 : index
    %345 = vector.load %arg13[%c1_156, %c0_157, %c0_158] : memref<2x1x32xf32, #tpu.memory_space<vmem>>, vector<1x1x32xf32>
    %346 = vector.shape_cast %345 : vector<1x1x32xf32> to vector<1x32xf32>
    %cst_159 = arith.constant dense<0.000000e+00> : vector<5xf32>
    %347 = vector.multi_reduction <add>, %342, %cst_159 [1] : vector<5x32xf32> to vector<5xf32>
    %348 = vector.shape_cast %347 : vector<5xf32> to vector<5x1xf32>
    %cst_160 = arith.constant 3.200000e+01 : f32
    %349 = vector.broadcast %cst_160 : f32 to vector<5x1xf32>
    %350 = arith.divf %348, %349 : vector<5x1xf32>
    %351 = vector.broadcast %350 : vector<5x1xf32> to vector<5x32xf32>
    %352 = arith.subf %342, %351 : vector<5x32xf32>
    %353 = arith.mulf %352, %352 : vector<5x32xf32>
    %cst_161 = arith.constant dense<0.000000e+00> : vector<5xf32>
    %354 = vector.multi_reduction <add>, %353, %cst_161 [1] : vector<5x32xf32> to vector<5xf32>
    %355 = vector.shape_cast %354 : vector<5xf32> to vector<5x1xf32>
    %cst_162 = arith.constant 3.200000e+01 : f32
    %356 = vector.broadcast %cst_162 : f32 to vector<5x1xf32>
    %357 = arith.divf %355, %356 : vector<5x1xf32>
    %358 = vector.broadcast %350 : vector<5x1xf32> to vector<5x32xf32>
    %359 = arith.subf %342, %358 : vector<5x32xf32>
    %cst_163 = arith.constant 9.99999997E-7 : f32
    %360 = vector.broadcast %cst_163 : f32 to vector<5x1xf32>
    %361 = arith.addf %357, %360 : vector<5x1xf32>
    %362 = math.rsqrt %361 : vector<5x1xf32>
    %363 = vector.broadcast %362 : vector<5x1xf32> to vector<5x32xf32>
    %364 = arith.mulf %359, %363 : vector<5x32xf32>
    %365 = vector.broadcast %344 : vector<1x32xf32> to vector<5x32xf32>
    %366 = arith.mulf %364, %365 : vector<5x32xf32>
    %367 = vector.broadcast %346 : vector<1x32xf32> to vector<5x32xf32>
    %368 = arith.addf %366, %367 : vector<5x32xf32>
    %c1_164 = arith.constant 1 : index
    %c0_165 = arith.constant 0 : index
    %c0_166 = arith.constant 0 : index
    %369 = vector.load %arg14[%c1_164, %c0_165, %c0_166] : memref<2x32x64xf32, #tpu.memory_space<vmem>>, vector<1x32x64xf32>
    %370 = vector.shape_cast %369 : vector<1x32x64xf32> to vector<32x64xf32>
    %371 = arith.truncf %368 : vector<5x32xf32> to vector<5x32xbf16>
    %372 = arith.truncf %370 : vector<32x64xf32> to vector<32x64xbf16>
    %cst_167 = arith.constant dense<0.000000e+00> : vector<5x64xf32>
    %373 = tpu.matmul %371, %372, %cst_167 {dimension_numbers = #tpu.dot_dimension_numbers<[1], [0], [0], [1], [0, 0, 1, 1], [], []>} : vector<5x32xbf16>, vector<32x64xbf16>, vector<5x64xf32> -> vector<5x64xf32>
    %c1_168 = arith.constant 1 : index
    %c0_169 = arith.constant 0 : index
    %c0_170 = arith.constant 0 : index
    %374 = vector.load %arg15[%c1_168, %c0_169, %c0_170] : memref<2x1x64xf32, #tpu.memory_space<vmem>>, vector<1x1x64xf32>
    %375 = vector.shape_cast %374 : vector<1x1x64xf32> to vector<1x64xf32>
    %376 = vector.broadcast %375 : vector<1x64xf32> to vector<5x64xf32>
    %377 = arith.addf %373, %376 : vector<5x64xf32>
    %cst_171 = arith.constant 5.000000e-01 : f32
    %378 = vector.broadcast %cst_171 : f32 to vector<5x64xf32>
    %379 = arith.mulf %378, %377 : vector<5x64xf32>
    %cst_172 = arith.constant 4.471500e-02 : f32
    %380 = vector.broadcast %cst_172 : f32 to vector<5x64xf32>
    %381 = arith.mulf %380, %377 : vector<5x64xf32>
    %382 = arith.mulf %381, %377 : vector<5x64xf32>
    %383 = arith.mulf %382, %377 : vector<5x64xf32>
    %384 = arith.addf %377, %383 : vector<5x64xf32>
    %cst_173 = arith.constant 0.797884583 : f32
    %385 = vector.broadcast %cst_173 : f32 to vector<5x64xf32>
    %386 = arith.mulf %385, %384 : vector<5x64xf32>
    %387 = math.tanh %386 : vector<5x64xf32>
    %cst_174 = arith.constant 1.000000e+00 : f32
    %388 = vector.broadcast %cst_174 : f32 to vector<5x64xf32>
    %389 = arith.addf %388, %387 : vector<5x64xf32>
    %390 = arith.mulf %379, %389 : vector<5x64xf32>
    %c1_175 = arith.constant 1 : index
    %c0_176 = arith.constant 0 : index
    %c0_177 = arith.constant 0 : index
    %391 = vector.load %arg16[%c1_175, %c0_176, %c0_177] : memref<2x64x32xf32, #tpu.memory_space<vmem>>, vector<1x64x32xf32>
    %392 = vector.shape_cast %391 : vector<1x64x32xf32> to vector<64x32xf32>
    %393 = arith.truncf %390 : vector<5x64xf32> to vector<5x64xbf16>
    %394 = arith.truncf %392 : vector<64x32xf32> to vector<64x32xbf16>
    %cst_178 = arith.constant dense<0.000000e+00> : vector<5x32xf32>
    %395 = tpu.matmul %393, %394, %cst_178 {dimension_numbers = #tpu.dot_dimension_numbers<[1], [0], [0], [1], [0, 0, 1, 1], [], []>} : vector<5x64xbf16>, vector<64x32xbf16>, vector<5x32xf32> -> vector<5x32xf32>
    %396 = arith.addf %342, %395 : vector<5x32xf32>
    %c1_179 = arith.constant 1 : index
    %c0_180 = arith.constant 0 : index
    %c0_181 = arith.constant 0 : index
    %397 = vector.load %arg17[%c1_179, %c0_180, %c0_181] : memref<2x1x32xf32, #tpu.memory_space<vmem>>, vector<1x1x32xf32>
    %398 = vector.shape_cast %397 : vector<1x1x32xf32> to vector<1x32xf32>
    %399 = vector.broadcast %398 : vector<1x32xf32> to vector<5x32xf32>
    %400 = arith.addf %396, %399 : vector<5x32xf32>
    %401 = vector.extract_strided_slice %400 {offsets = [0, 0], sizes = [1, 32], strides = [1, 1]} : vector<5x32xf32> to vector<1x32xf32>
    %c0_182 = arith.constant 0 : index
    %c0_183 = arith.constant 0 : index
    %402 = vector.load %arg18[%c0_182, %c0_183] : memref<1x32xf32, #tpu.memory_space<vmem>>, vector<1x32xf32>
    %c0_184 = arith.constant 0 : index
    %c0_185 = arith.constant 0 : index
    %403 = vector.load %arg19[%c0_184, %c0_185] : memref<1x32xf32, #tpu.memory_space<vmem>>, vector<1x32xf32>
    %cst_186 = arith.constant dense<0.000000e+00> : vector<1xf32>
    %404 = vector.multi_reduction <add>, %401, %cst_186 [1] : vector<1x32xf32> to vector<1xf32>
    %405 = vector.shape_cast %404 : vector<1xf32> to vector<1x1xf32>
    %cst_187 = arith.constant 3.200000e+01 : f32
    %406 = vector.broadcast %cst_187 : f32 to vector<1x1xf32>
    %407 = arith.divf %405, %406 : vector<1x1xf32>
    %408 = vector.broadcast %407 : vector<1x1xf32> to vector<1x32xf32>
    %409 = arith.subf %401, %408 : vector<1x32xf32>
    %410 = arith.mulf %409, %409 : vector<1x32xf32>
    %cst_188 = arith.constant dense<0.000000e+00> : vector<1xf32>
    %411 = vector.multi_reduction <add>, %410, %cst_188 [1] : vector<1x32xf32> to vector<1xf32>
    %412 = vector.shape_cast %411 : vector<1xf32> to vector<1x1xf32>
    %cst_189 = arith.constant 3.200000e+01 : f32
    %413 = vector.broadcast %cst_189 : f32 to vector<1x1xf32>
    %414 = arith.divf %412, %413 : vector<1x1xf32>
    %415 = vector.broadcast %407 : vector<1x1xf32> to vector<1x32xf32>
    %416 = arith.subf %401, %415 : vector<1x32xf32>
    %cst_190 = arith.constant 9.99999997E-7 : f32
    %417 = vector.broadcast %cst_190 : f32 to vector<1x1xf32>
    %418 = arith.addf %414, %417 : vector<1x1xf32>
    %419 = math.rsqrt %418 : vector<1x1xf32>
    %420 = vector.broadcast %419 : vector<1x1xf32> to vector<1x32xf32>
    %421 = arith.mulf %416, %420 : vector<1x32xf32>
    %422 = arith.mulf %421, %402 : vector<1x32xf32>
    %423 = arith.addf %422, %403 : vector<1x32xf32>
    %c0_191 = arith.constant 0 : index
    %c0_192 = arith.constant 0 : index
    %424 = vector.load %arg20[%c0_191, %c0_192] : memref<32x10xf32, #tpu.memory_space<vmem>>, vector<32x10xf32>
    %425 = arith.truncf %423 : vector<1x32xf32> to vector<1x32xbf16>
    %426 = arith.truncf %424 : vector<32x10xf32> to vector<32x10xbf16>
    %cst_193 = arith.constant dense<0.000000e+00> : vector<1x10xf32>
    %427 = tpu.matmul %425, %426, %cst_193 {dimension_numbers = #tpu.dot_dimension_numbers<[1], [0], [0], [1], [0, 0, 1, 1], [], []>} : vector<1x32xbf16>, vector<32x10xbf16>, vector<1x10xf32> -> vector<1x10xf32>
    %c0_194 = arith.constant 0 : index
    %c0_195 = arith.constant 0 : index
    %428 = vector.load %arg21[%c0_194, %c0_195] : memref<1x10xf32, #tpu.memory_space<vmem>>, vector<1x10xf32>
    %429 = arith.addf %427, %428 : vector<1x10xf32>
    %c0_196 = arith.constant 0 : index
    %c0_197 = arith.constant 0 : index
    %c0_198 = arith.constant 0 : index
    %430 = vector.load %arg22[%c0_196, %c0_197, %c0_198] : memref<1x1x10xf32, #tpu.memory_space<vmem>>, vector<1x1x10xf32>
    %431 = vector.shape_cast %430 : vector<1x1x10xf32> to vector<1x10xf32>
    %432 = vector.shape_cast %429 : vector<1x10xf32> to vector<1x1x10xf32>
    tpu.vector_store %arg22[%c0_196, %c0_197, %c0_198], %432 {strides = array<i32>} : memref<1x1x10xf32, #tpu.memory_space<vmem>>, vector<1x1x10xf32>,
    return
  }
  func.func @transform_0(%arg0: i32) -> (i32, i32, i32) {
    %c0_i32 = arith.constant 0 : i32
    %c0_i32_0 = arith.constant 0 : i32
    %c0_i32_1 = arith.constant 0 : i32
    return %arg0, %c0_i32, %c0_i32_0 : i32, i32, i32
  }
  func.func @transform_1(%arg0: i32) -> (i32, i32) {
    %c0_i32 = arith.constant 0 : i32
    %c0_i32_0 = arith.constant 0 : i32
    %c0_i32_1 = arith.constant 0 : i32
    return %c0_i32, %c0_i32_0 : i32, i32
  }
  func.func @transform_2(%arg0: i32) -> (i32, i32) {
    %c0_i32 = arith.constant 0 : i32
    %c0_i32_0 = arith.constant 0 : i32
    %c0_i32_1 = arith.constant 0 : i32
    return %c0_i32, %c0_i32_0 : i32, i32
  }
  func.func @transform_3(%arg0: i32) -> (i32, i32) {
    %c0_i32 = arith.constant 0 : i32
    %c0_i32_0 = arith.constant 0 : i32
    %c0_i32_1 = arith.constant 0 : i32
    return %c0_i32, %c0_i32_0 : i32, i32
  }
  func.func @transform_4(%arg0: i32) -> (i32, i32) {
    %c0_i32 = arith.constant 0 : i32
    %c0_i32_0 = arith.constant 0 : i32
    %c0_i32_1 = arith.constant 0 : i32
    return %c0_i32, %c0_i32_0 : i32, i32
  }
  func.func @transform_5(%arg0: i32) -> (i32, i32, i32) {
    %c0_i32 = arith.constant 0 : i32
    %c0_i32_0 = arith.constant 0 : i32
    %c0_i32_1 = arith.constant 0 : i32
    %c0_i32_2 = arith.constant 0 : i32
    return %c0_i32, %c0_i32_0, %c0_i32_1 : i32, i32, i32
  }
  func.func @transform_6(%arg0: i32) -> (i32, i32, i32) {
    %c0_i32 = arith.constant 0 : i32
    %c0_i32_0 = arith.constant 0 : i32
    %c0_i32_1 = arith.constant 0 : i32
    %c0_i32_2 = arith.constant 0 : i32
    return %c0_i32, %c0_i32_0, %c0_i32_1 : i32, i32, i32
  }
  func.func @transform_7(%arg0: i32) -> (i32, i32, i32) {
    %c0_i32 = arith.constant 0 : i32
    %c0_i32_0 = arith.constant 0 : i32
    %c0_i32_1 = arith.constant 0 : i32
    %c0_i32_2 = arith.constant 0 : i32
    return %c0_i32, %c0_i32_0, %c0_i32_1 : i32, i32, i32
  }
  func.func @transform_8(%arg0: i32) -> (i32, i32, i32) {
    %c0_i32 = arith.constant 0 : i32
    %c0_i32_0 = arith.constant 0 : i32
    %c0_i32_1 = arith.constant 0 : i32
    %c0_i32_2 = arith.constant 0 : i32
    return %c0_i32, %c0_i32_0, %c0_i32_1 : i32, i32, i32
  }
  func.func @transform_9(%arg0: i32) -> (i32, i32, i32) {
    %c0_i32 = arith.constant 0 : i32
    %c0_i32_0 = arith.constant 0 : i32
    %c0_i32_1 = arith.constant 0 : i32
    %c0_i32_2 = arith.constant 0 : i32
    return %c0_i32, %c0_i32_0, %c0_i32_1 : i32, i32, i32
  }
  func.func @transform_10(%arg0: i32) -> (i32, i32, i32) {
    %c0_i32 = arith.constant 0 : i32
    %c0_i32_0 = arith.constant 0 : i32
    %c0_i32_1 = arith.constant 0 : i32
    %c0_i32_2 = arith.constant 0 : i32
    return %c0_i32, %c0_i32_0, %c0_i32_1 : i32, i32, i32
  }
  func.func @transform_11(%arg0: i32) -> (i32, i32, i32) {
    %c0_i32 = arith.constant 0 : i32
    %c0_i32_0 = arith.constant 0 : i32
    %c0_i32_1 = arith.constant 0 : i32
    %c0_i32_2 = arith.constant 0 : i32
    return %c0_i32, %c0_i32_0, %c0_i32_1 : i32, i32, i32
  }
  func.func @transform_12(%arg0: i32) -> (i32, i32, i32) {
    %c0_i32 = arith.constant 0 : i32
    %c0_i32_0 = arith.constant 0 : i32
    %c0_i32_1 = arith.constant 0 : i32
    %c0_i32_2 = arith.constant 0 : i32
    return %c0_i32, %c0_i32_0, %c0_i32_1 : i32, i32, i32
  }
  func.func @transform_13(%arg0: i32) -> (i32, i32, i32) {
    %c0_i32 = arith.constant 0 : i32
    %c0_i32_0 = arith.constant 0 : i32
    %c0_i32_1 = arith.constant 0 : i32
    %c0_i32_2 = arith.constant 0 : i32
    return %c0_i32, %c0_i32_0, %c0_i32_1 : i32, i32, i32
  }
  func.func @transform_14(%arg0: i32) -> (i32, i32, i32) {
    %c0_i32 = arith.constant 0 : i32
    %c0_i32_0 = arith.constant 0 : i32
    %c0_i32_1 = arith.constant 0 : i32
    %c0_i32_2 = arith.constant 0 : i32
    return %c0_i32, %c0_i32_0, %c0_i32_1 : i32, i32, i32
  }
  func.func @transform_15(%arg0: i32) -> (i32, i32, i32) {
    %c0_i32 = arith.constant 0 : i32
    %c0_i32_0 = arith.constant 0 : i32
    %c0_i32_1 = arith.constant 0 : i32
    %c0_i32_2 = arith.constant 0 : i32
    return %c0_i32, %c0_i32_0, %c0_i32_1 : i32, i32, i32
  }
  func.func @transform_16(%arg0: i32) -> (i32, i32, i32) {
    %c0_i32 = arith.constant 0 : i32
    %c0_i32_0 = arith.constant 0 : i32
    %c0_i32_1 = arith.constant 0 : i32
    %c0_i32_2 = arith.constant 0 : i32
    return %c0_i32, %c0_i32_0, %c0_i32_1 : i32, i32, i32
  }
  func.func @transform_17(%arg0: i32) -> (i32, i32) {
    %c0_i32 = arith.constant 0 : i32
    %c0_i32_0 = arith.constant 0 : i32
    %c0_i32_1 = arith.constant 0 : i32
    return %c0_i32, %c0_i32_0 : i32, i32
  }
  func.func @transform_18(%arg0: i32) -> (i32, i32) {
    %c0_i32 = arith.constant 0 : i32
    %c0_i32_0 = arith.constant 0 : i32
    %c0_i32_1 = arith.constant 0 : i32
    return %c0_i32, %c0_i32_0 : i32, i32
  }
  func.func @transform_19(%arg0: i32) -> (i32, i32) {
    %c0_i32 = arith.constant 0 : i32
    %c0_i32_0 = arith.constant 0 : i32
    %c0_i32_1 = arith.constant 0 : i32
    return %c0_i32, %c0_i32_0 : i32, i32
  }
  func.func @transform_20(%arg0: i32) -> (i32, i32) {
    %c0_i32 = arith.constant 0 : i32
    %c0_i32_0 = arith.constant 0 : i32
    %c0_i32_1 = arith.constant 0 : i32
    return %c0_i32, %c0_i32_0 : i32, i32
  }
  func.func @transform_21(%arg0: i32) -> (i32, i32, i32) {
    %c0_i32 = arith.constant 0 : i32
    %c0_i32_0 = arith.constant 0 : i32
    %c0_i32_1 = arith.constant 0 : i32
    return %arg0, %c0_i32, %c0_i32_0 : i32, i32, i32
  }
}

</mosaic_0001>

<llo_original>
// kernel: vit_forward.1
$region0: #{vit_forward.1}
  #allocation0 [shape = 'u32[]', space=smem, size = 0x4, offset = 0x4, fixed_abs, tag = 'smem constant byte address 0x4 - core index']
  #allocation1 [shape = 'u32[144,128]{1,0:T(1,128)}', space=vmem, size = 0x12000, scoped, tag = 'internal scratch']
  #allocation2 [shape = 'f32[5,32]{1,0:T(8,128)}', space=vmem, size = 0x1000, scoped, tag = 'scratch operand']
  #allocation3 [shape = 'f32[5,32]{1,0:T(8,128)}', space=vmem, size = 0x1000, scoped, tag = 'scratch operand']
  %s0 = inlined_call_operand.vmem [shape: f32[2,4,768], index: 0, kind: input, shape index: {}]
  %s1 = inlined_call_operand.vmem [shape: f32[768,32], index: 1, kind: input, shape index: {}]
  %s2 = inlined_call_operand.vmem [shape: f32[1,32], index: 2, kind: input, shape index: {}]
  %s3 = inlined_call_operand.vmem [shape: f32[1,32], index: 3, kind: input, shape index: {}]
  %s4 = inlined_call_operand.vmem [shape: f32[5,32], index: 4, kind: input, shape index: {}]
  %s5 = inlined_call_operand.vmem [shape: f32[2,1,32], index: 5, kind: input, shape index: {}]
  %s6 = inlined_call_operand.vmem [shape: f32[2,1,32], index: 6, kind: input, shape index: {}]
  %s7 = inlined_call_operand.vmem [shape: f32[2,32,96], index: 7, kind: input, shape index: {}]
  %s8 = inlined_call_operand.vmem [shape: f32[2,1,96], index: 8, kind: input, shape index: {}]
  %s9 = inlined_call_operand.vmem [shape: f32[2,32,32], index: 9, kind: input, shape index: {}]
  %s10 = inlined_call_operand.vmem [shape: f32[2,1,32], index: 10, kind: input, shape index: {}]
  %s11 = inlined_call_operand.vmem [shape: f32[2,1,32], index: 11, kind: input, shape index: {}]
  %s12 = inlined_call_operand.vmem [shape: f32[2,1,32], index: 12, kind: input, shape index: {}]
  %s13 = inlined_call_operand.vmem [shape: f32[2,32,64], index: 13, kind: input, shape index: {}]
  %s14 = inlined_call_operand.vmem [shape: f32[2,1,64], index: 14, kind: input, shape index: {}]
  %s15 = inlined_call_operand.vmem [shape: f32[2,64,32], index: 15, kind: input, shape index: {}]
  %s16 = inlined_call_operand.vmem [shape: f32[2,1,32], index: 16, kind: input, shape index: {}]
  %s17 = inlined_call_operand.vmem [shape: f32[1,32], index: 17, kind: input, shape index: {}]
  %s18 = inlined_call_operand.vmem [shape: f32[1,32], index: 18, kind: input, shape index: {}]
  %s19 = inlined_call_operand.vmem [shape: f32[32,10], index: 19, kind: input, shape index: {}]
  %s20 = inlined_call_operand.vmem [shape: f32[1,10], index: 20, kind: input, shape index: {}]
  %s21 = inlined_call_operand.hbm [shape: f32[2,1,10], index: 21, kind: output, shape index: {}]
  %s22 = sld [smem:[#allocation0]]
  $region117: #{vit_forward.1} parent=0
    _
  %s24 = ssub.s32 1, %s22
  %s25 = scalar_select 0, %s24, %s22
  $region1: #{vit_forward.1} parent=0
    #allocation4 [shape = 'u8[1024]{0}', space=vmem, size = 0x400, scoped, tag = 'output window, operand 0']
    #allocation5 [shape = 's32[2]{0}', space=sflag, size = 0x8, scoped, tag = 'scoped memory for vit_forward.1']
    %26 = vsyncpa [#allocation5], 0
    %s27 = scalar_lea.sflag [#allocation5], 1
    %28 = vsyncpa %s27, 0
    loop: start=0, step=1, limit=4
    $region2: #{vit_forward.1} parent=1 // loop_pre_header
      _
    $region3: #{vit_forward.1} parent=1 // loop_header
      %s30 = sphi 0, %s34
      %p31 = scmp.ge.s32.totalorder %s30, 4
      %s40 = sphi 0, %s42
      %s43 = sphi 0, %s40
      %s44 = sphi 0, %s43
      %s60 = sphi 0, %s44
      %s64 = sphi 0, %s64
      %s66 = sphi 0, %s64
      %s67 = sphi 0, %s66
      %s81 = sphi 0, %s67
      %s85 = sphi 0, %s85
      %s87 = sphi 0, %s85
      %s88 = sphi 0, %s87
      %s102 = sphi 0, %s88
      %s106 = sphi 0, %s106
      %s108 = sphi 0, %s106
      %s109 = sphi 0, %s108
      %s123 = sphi 0, %s109
      %s127 = sphi 0, %s127
      %s129 = sphi 0, %s127
      %s130 = sphi 0, %s129
      %s144 = sphi 0, %s130
      %s148 = sphi 0, %s148
      %s150 = sphi 0, %s148
      %s151 = sphi 0, %s150
      %s165 = sphi 0, %s151
      %s169 = sphi 0, %s169
      %s171 = sphi 0, %s169
      %s172 = sphi 0, %s171
      %s186 = sphi 0, %s172
      %s190 = sphi 0, %s190
      %s192 = sphi 0, %s190
      %s193 = sphi 0, %s192
      %s207 = sphi 0, %s193
      %s211 = sphi 0, %s211
      %s213 = sphi 0, %s211
      %s214 = sphi 0, %s213
      %s228 = sphi 0, %s214
      %s232 = sphi 0, %s232
      %s234 = sphi 0, %s232
      %s235 = sphi 0, %s234
      %s249 = sphi 0, %s235
      %s253 = sphi 0, %s253
      %s255 = sphi 0, %s253
      %s256 = sphi 0, %s255
      %s270 = sphi 0, %s256
      %s274 = sphi 0, %s274
      %s276 = sphi 0, %s274
      %s277 = sphi 0, %s276
      %s291 = sphi 0, %s277
      %s295 = sphi 0, %s295
      %s297 = sphi 0, %s295
      %s298 = sphi 0, %s297
      %s312 = sphi 0, %s298
      %s316 = sphi 0, %s316
      %s318 = sphi 0, %s316
      %s319 = sphi 0, %s318
      %s333 = sphi 0, %s319
      %s337 = sphi 0, %s337
      %s339 = sphi 0, %s337
      %s340 = sphi 0, %s339
      %s354 = sphi 0, %s340
      %s358 = sphi 0, %s358
      %s360 = sphi 0, %s358
      %s361 = sphi 0, %s360
      %s375 = sphi 0, %s361
      %s379 = sphi 0, %s379
      %s381 = sphi 0, %s379
      %s382 = sphi 0, %s381
      %s396 = sphi 0, %s382
      %s400 = sphi 0, %s400
      %s402 = sphi 0, %s400
      %s403 = sphi 0, %s402
      %s417 = sphi 0, %s403
      %s421 = sphi 0, %s421
      %s423 = sphi 0, %s421
      %s424 = sphi 0, %s423
      %s438 = sphi 0, %s424
      %s442 = sphi 0, %s442
      %s444 = sphi 0, %s442
      %s445 = sphi 0, %s444
      %s459 = sphi 0, %s445
      %s463 = sphi 0, %s463
      %s465 = sphi 0, %s463
      %s466 = sphi 0, %s465
      %s480 = sphi 0, %s466
      %s486 = sphi 0, %s488
      %s489 = sphi 0, %s486
      %s490 = sphi 0, %s489
      %s506 = sphi 0, %s490
    $region4: #{vit_forward.1} parent=1 // loop_header_branch
      %33 = sbr.rel (%p31) target = $region8
    $region5: #{vit_forward.1} parent=1 // loop_body
      %s35 = ssub.s32 %s30, 1
      %s36 = ssub.s32 %s30, 2
      %s37 = sadd.s32 %s30, 1
      %s38 = ssub.s32 %s30, %s37
      %p39 = scmp.eq.s32.totalorder %s38, 0
      %s41 = sadd.s32 %s40, 1
      %s42 = scalar_select %p39, %s40, %s41
      %p45 = pneg %p39
      %p46 = scmp.eq.s32.totalorder %s30, 1
      %p47 = por %p45, %p46
      %p48 = scmp.ne.s32.totalorder %s40, %s43
      %p49 = scmp.eq.s32.totalorder %s30, 0
      %p50 = por %p48, %p49
      %p51 = scmp.ne.s32.totalorder %s40, %s43
      %p52 = scmp.eq.s32.totalorder %s35, 1
      %p53 = por %p51, %p52
      %p54 = scmp.ne.s32.totalorder %s43, %s44
      %p55 = scmp.eq.s32.totalorder %s35, 0
      %p56 = por %p54, %p55
      %p57 = scmp.ne.s32.totalorder %s43, %s44
      %p58 = scmp.eq.s32.totalorder %s36, 1
      %p59 = por %p57, %p58
      %p61 = scmp.ne.s32.totalorder %s44, %s60
      %p62 = scmp.eq.s32.totalorder %s36, 0
      %p63 = por %p61, %p62
      %s65 = sadd.s32 %s64, 1
      %p68 = scmp.eq.s32.totalorder %s30, 1
      %p69 = scmp.ne.s32.totalorder %s64, %s66
      %p70 = scmp.eq.s32.totalorder %s30, 0
      %p71 = por %p69, %p70
      %p72 = scmp.ne.s32.totalorder %s64, %s66
      %p73 = scmp.eq.s32.totalorder %s35, 1
      %p74 = por %p72, %p73
      %p75 = scmp.ne.s32.totalorder %s66, %s67
      %p76 = scmp.eq.s32.totalorder %s35, 0
      %p77 = por %p75, %p76
      %p78 = scmp.ne.s32.totalorder %s66, %s67
      %p79 = scmp.eq.s32.totalorder %s36, 1
      %p80 = por %p78, %p79
      %p82 = scmp.ne.s32.totalorder %s67, %s81
      %p83 = scmp.eq.s32.totalorder %s36, 0
      %p84 = por %p82, %p83
      %s86 = sadd.s32 %s85, 1
      %p89 = scmp.eq.s32.totalorder %s30, 1
      %p90 = scmp.ne.s32.totalorder %s85, %s87
      %p91 = scmp.eq.s32.totalorder %s30, 0
      %p92 = por %p90, %p91
      %p93 = scmp.ne.s32.totalorder %s85, %s87
      %p94 = scmp.eq.s32.totalorder %s35, 1
      %p95 = por %p93, %p94
      %p96 = scmp.ne.s32.totalorder %s87, %s88
      %p97 = scmp.eq.s32.totalorder %s35, 0
      %p98 = por %p96, %p97
      %p99 = scmp.ne.s32.totalorder %s87, %s88
      %p100 = scmp.eq.s32.totalorder %s36, 1
      %p101 = por %p99, %p100
      %p103 = scmp.ne.s32.totalorder %s88, %s102
      %p104 = scmp.eq.s32.totalorder %s36, 0
      %p105 = por %p103, %p104
      %s107 = sadd.s32 %s106, 1
      %p110 = scmp.eq.s32.totalorder %s30, 1
      %p111 = scmp.ne.s32.totalorder %s106, %s108
      %p112 = scmp.eq.s32.totalorder %s30, 0
      %p113 = por %p111, %p112
      %p114 = scmp.ne.s32.totalorder %s106, %s108
      %p115 = scmp.eq.s32.totalorder %s35, 1
      %p116 = por %p114, %p115
      %p117 = scmp.ne.s32.totalorder %s108, %s109
      %p118 = scmp.eq.s32.totalorder %s35, 0
      %p119 = por %p117, %p118
      %p120 = scmp.ne.s32.totalorder %s108, %s109
      %p121 = scmp.eq.s32.totalorder %s36, 1
      %p122 = por %p120, %p121
      %p124 = scmp.ne.s32.totalorder %s109, %s123
      %p125 = scmp.eq.s32.totalorder %s36, 0
      %p126 = por %p124, %p125
      %s128 = sadd.s32 %s127, 1
      %p131 = scmp.eq.s32.totalorder %s30, 1
      %p132 = scmp.ne.s32.totalorder %s127, %s129
      %p133 = scmp.eq.s32.totalorder %s30, 0
      %p134 = por %p132, %p133
      %p135 = scmp.ne.s32.totalorder %s127, %s129
      %p136 = scmp.eq.s32.totalorder %s35, 1
      %p137 = por %p135, %p136
      %p138 = scmp.ne.s32.totalorder %s129, %s130
      %p139 = scmp.eq.s32.totalorder %s35, 0
      %p140 = por %p138, %p139
      %p141 = scmp.ne.s32.totalorder %s129, %s130
      %p142 = scmp.eq.s32.totalorder %s36, 1
      %p143 = por %p141, %p142
      %p145 = scmp.ne.s32.totalorder %s130, %s144
      %p146 = scmp.eq.s32.totalorder %s36, 0
      %p147 = por %p145, %p146
      %s149 = sadd.s32 %s148, 1
      %p152 = scmp.eq.s32.totalorder %s30, 1
      %p153 = scmp.ne.s32.totalorder %s148, %s150
      %p154 = scmp.eq.s32.totalorder %s30, 0
      %p155 = por %p153, %p154
      %p156 = scmp.ne.s32.totalorder %s148, %s150
      %p157 = scmp.eq.s32.totalorder %s35, 1
      %p158 = por %p156, %p157
      %p159 = scmp.ne.s32.totalorder %s150, %s151
      %p160 = scmp.eq.s32.totalorder %s35, 0
      %p161 = por %p159, %p160
      %p162 = scmp.ne.s32.totalorder %s150, %s151
      %p163 = scmp.eq.s32.totalorder %s36, 1
      %p164 = por %p162, %p163
      %p166 = scmp.ne.s32.totalorder %s151, %s165
      %p167 = scmp.eq.s32.totalorder %s36, 0
      %p168 = por %p166, %p167
      %s170 = sadd.s32 %s169, 1
      %p173 = scmp.eq.s32.totalorder %s30, 1
      %p174 = scmp.ne.s32.totalorder %s169, %s171
      %p175 = scmp.eq.s32.totalorder %s30, 0
      %p176 = por %p174, %p175
      %p177 = scmp.ne.s32.totalorder %s169, %s171
      %p178 = scmp.eq.s32.totalorder %s35, 1
      %p179 = por %p177, %p178
      %p180 = scmp.ne.s32.totalorder %s171, %s172
      %p181 = scmp.eq.s32.totalorder %s35, 0
      %p182 = por %p180, %p181
      %p183 = scmp.ne.s32.totalorder %s171, %s172
      %p184 = scmp.eq.s32.totalorder %s36, 1
      %p185 = por %p183, %p184
      %p187 = scmp.ne.s32.totalorder %s172, %s186
      %p188 = scmp.eq.s32.totalorder %s36, 0
      %p189 = por %p187, %p188
      %s191 = sadd.s32 %s190, 1
      %p194 = scmp.eq.s32.totalorder %s30, 1
      %p195 = scmp.ne.s32.totalorder %s190, %s192
      %p196 = scmp.eq.s32.totalorder %s30, 0
      %p197 = por %p195, %p196
      %p198 = scmp.ne.s32.totalorder %s190, %s192
      %p199 = scmp.eq.s32.totalorder %s35, 1
      %p200 = por %p198, %p199
      %p201 = scmp.ne.s32.totalorder %s192, %s193
      %p202 = scmp.eq.s32.totalorder %s35, 0
      %p203 = por %p201, %p202
      %p204 = scmp.ne.s32.totalorder %s192, %s193
      %p205 = scmp.eq.s32.totalorder %s36, 1
      %p206 = por %p204, %p205
      %p208 = scmp.ne.s32.totalorder %s193, %s207
      %p209 = scmp.eq.s32.totalorder %s36, 0
      %p210 = por %p208, %p209
      %s212 = sadd.s32 %s211, 1
      %p215 = scmp.eq.s32.totalorder %s30, 1
      %p216 = scmp.ne.s32.totalorder %s211, %s213
      %p217 = scmp.eq.s32.totalorder %s30, 0
      %p218 = por %p216, %p217
      %p219 = scmp.ne.s32.totalorder %s211, %s213
      %p220 = scmp.eq.s32.totalorder %s35, 1
      %p221 = por %p219, %p220
      %p222 = scmp.ne.s32.totalorder %s213, %s214
      %p223 = scmp.eq.s32.totalorder %s35, 0
      %p224 = por %p222, %p223
      %p225 = scmp.ne.s32.totalorder %s213, %s214
      %p226 = scmp.eq.s32.totalorder %s36, 1
      %p227 = por %p225, %p226
      %p229 = scmp.ne.s32.totalorder %s214, %s228
      %p230 = scmp.eq.s32.totalorder %s36, 0
      %p231 = por %p229, %p230
      %s233 = sadd.s32 %s232, 1
      %p236 = scmp.eq.s32.totalorder %s30, 1
      %p237 = scmp.ne.s32.totalorder %s232, %s234
      %p238 = scmp.eq.s32.totalorder %s30, 0
      %p239 = por %p237, %p238
      %p240 = scmp.ne.s32.totalorder %s232, %s234
      %p241 = scmp.eq.s32.totalorder %s35, 1
      %p242 = por %p240, %p241
      %p243 = scmp.ne.s32.totalorder %s234, %s235
      %p244 = scmp.eq.s32.totalorder %s35, 0
      %p245 = por %p243, %p244
      %p246 = scmp.ne.s32.totalorder %s234, %s235
      %p247 = scmp.eq.s32.totalorder %s36, 1
      %p248 = por %p246, %p247
      %p250 = scmp.ne.s32.totalorder %s235, %s249
      %p251 = scmp.eq.s32.totalorder %s36, 0
      %p252 = por %p250, %p251
      %s254 = sadd.s32 %s253, 1
      %p257 = scmp.eq.s32.totalorder %s30, 1
      %p258 = scmp.ne.s32.totalorder %s253, %s255
      %p259 = scmp.eq.s32.totalorder %s30, 0
      %p260 = por %p258, %p259
      %p261 = scmp.ne.s32.totalorder %s253, %s255
      %p262 = scmp.eq.s32.totalorder %s35, 1
      %p263 = por %p261, %p262
      %p264 = scmp.ne.s32.totalorder %s255, %s256
      %p265 = scmp.eq.s32.totalorder %s35, 0
      %p266 = por %p264, %p265
      %p267 = scmp.ne.s32.totalorder %s255, %s256
      %p268 = scmp.eq.s32.totalorder %s36, 1
      %p269 = por %p267, %p268
      %p271 = scmp.ne.s32.totalorder %s256, %s270
      %p272 = scmp.eq.s32.totalorder %s36, 0
      %p273 = por %p271, %p272
      %s275 = sadd.s32 %s274, 1
      %p278 = scmp.eq.s32.totalorder %s30, 1
      %p279 = scmp.ne.s32.totalorder %s274, %s276
      %p280 = scmp.eq.s32.totalorder %s30, 0
      %p281 = por %p279, %p280
      %p282 = scmp.ne.s32.totalorder %s274, %s276
      %p283 = scmp.eq.s32.totalorder %s35, 1
      %p284 = por %p282, %p283
      %p285 = scmp.ne.s32.totalorder %s276, %s277
      %p286 = scmp.eq.s32.totalorder %s35, 0
      %p287 = por %p285, %p286
      %p288 = scmp.ne.s32.totalorder %s276, %s277
      %p289 = scmp.eq.s32.totalorder %s36, 1
      %p290 = por %p288, %p289
      %p292 = scmp.ne.s32.totalorder %s277, %s291
      %p293 = scmp.eq.s32.totalorder %s36, 0
      %p294 = por %p292, %p293
      %s296 = sadd.s32 %s295, 1
      %p299 = scmp.eq.s32.totalorder %s30, 1
      %p300 = scmp.ne.s32.totalorder %s295, %s297
      %p301 = scmp.eq.s32.totalorder %s30, 0
      %p302 = por %p300, %p301
      %p303 = scmp.ne.s32.totalorder %s295, %s297
      %p304 = scmp.eq.s32.totalorder %s35, 1
      %p305 = por %p303, %p304
      %p306 = scmp.ne.s32.totalorder %s297, %s298
      %p307 = scmp.eq.s32.totalorder %s35, 0
      %p308 = por %p306, %p307
      %p309 = scmp.ne.s32.totalorder %s297, %s298
      %p310 = scmp.eq.s32.totalorder %s36, 1
      %p311 = por %p309, %p310
      %p313 = scmp.ne.s32.totalorder %s298, %s312
      %p314 = scmp.eq.s32.totalorder %s36, 0
      %p315 = por %p313, %p314
      %s317 = sadd.s32 %s316, 1
      %p320 = scmp.eq.s32.totalorder %s30, 1
      %p321 = scmp.ne.s32.totalorder %s316, %s318
      %p322 = scmp.eq.s32.totalorder %s30, 0
      %p323 = por %p321, %p322
      %p324 = scmp.ne.s32.totalorder %s316, %s318
      %p325 = scmp.eq.s32.totalorder %s35, 1
      %p326 = por %p324, %p325
      %p327 = scmp.ne.s32.totalorder %s318, %s319
      %p328 = scmp.eq.s32.totalorder %s35, 0
      %p329 = por %p327, %p328
      %p330 = scmp.ne.s32.totalorder %s318, %s319
      %p331 = scmp.eq.s32.totalorder %s36, 1
      %p332 = por %p330, %p331
      %p334 = scmp.ne.s32.totalorder %s319, %s333
      %p335 = scmp.eq.s32.totalorder %s36, 0
      %p336 = por %p334, %p335
      %s338 = sadd.s32 %s337, 1
      %p341 = scmp.eq.s32.totalorder %s30, 1
      %p342 = scmp.ne.s32.totalorder %s337, %s339
      %p343 = scmp.eq.s32.totalorder %s30, 0
      %p344 = por %p342, %p343
      %p345 = scmp.ne.s32.totalorder %s337, %s339
      %p346 = scmp.eq.s32.totalorder %s35, 1
      %p347 = por %p345, %p346
      %p348 = scmp.ne.s32.totalorder %s339, %s340
      %p349 = scmp.eq.s32.totalorder %s35, 0
      %p350 = por %p348, %p349
      %p351 = scmp.ne.s32.totalorder %s339, %s340
      %p352 = scmp.eq.s32.totalorder %s36, 1
      %p353 = por %p351, %p352
      %p355 = scmp.ne.s32.totalorder %s340, %s354
      %p356 = scmp.eq.s32.totalorder %s36, 0
      %p357 = por %p355, %p356
      %s359 = sadd.s32 %s358, 1
      %p362 = scmp.eq.s32.totalorder %s30, 1
      %p363 = scmp.ne.s32.totalorder %s358, %s360
      %p364 = scmp.eq.s32.totalorder %s30, 0
      %p365 = por %p363, %p364
      %p366 = scmp.ne.s32.totalorder %s358, %s360
      %p367 = scmp.eq.s32.totalorder %s35, 1
      %p368 = por %p366, %p367
      %p369 = scmp.ne.s32.totalorder %s360, %s361
      %p370 = scmp.eq.s32.totalorder %s35, 0
      %p371 = por %p369, %p370
      %p372 = scmp.ne.s32.totalorder %s360, %s361
      %p373 = scmp.eq.s32.totalorder %s36, 1
      %p374 = por %p372, %p373
      %p376 = scmp.ne.s32.totalorder %s361, %s375
      %p377 = scmp.eq.s32.totalorder %s36, 0
      %p378 = por %p376, %p377
      %s380 = sadd.s32 %s379, 1
      %p383 = scmp.eq.s32.totalorder %s30, 1
      %p384 = scmp.ne.s32.totalorder %s379, %s381
      %p385 = scmp.eq.s32.totalorder %s30, 0
      %p386 = por %p384, %p385
      %p387 = scmp.ne.s32.totalorder %s379, %s381
      %p388 = scmp.eq.s32.totalorder %s35, 1
      %p389 = por %p387, %p388
      %p390 = scmp.ne.s32.totalorder %s381, %s382
      %p391 = scmp.eq.s32.totalorder %s35, 0
      %p392 = por %p390, %p391
      %p393 = scmp.ne.s32.totalorder %s381, %s382
      %p394 = scmp.eq.s32.totalorder %s36, 1
      %p395 = por %p393, %p394
      %p397 = scmp.ne.s32.totalorder %s382, %s396
      %p398 = scmp.eq.s32.totalorder %s36, 0
      %p399 = por %p397, %p398
      %s401 = sadd.s32 %s400, 1
      %p404 = scmp.eq.s32.totalorder %s30, 1
      %p405 = scmp.ne.s32.totalorder %s400, %s402
      %p406 = scmp.eq.s32.totalorder %s30, 0
      %p407 = por %p405, %p406
      %p408 = scmp.ne.s32.totalorder %s400, %s402
      %p409 = scmp.eq.s32.totalorder %s35, 1
      %p410 = por %p408, %p409
      %p411 = scmp.ne.s32.totalorder %s402, %s403
      %p412 = scmp.eq.s32.totalorder %s35, 0
      %p413 = por %p411, %p412
      %p414 = scmp.ne.s32.totalorder %s402, %s403
      %p415 = scmp.eq.s32.totalorder %s36, 1
      %p416 = por %p414, %p415
      %p418 = scmp.ne.s32.totalorder %s403, %s417
      %p419 = scmp.eq.s32.totalorder %s36, 0
      %p420 = por %p418, %p419
      %s422 = sadd.s32 %s421, 1
      %p425 = scmp.eq.s32.totalorder %s30, 1
      %p426 = scmp.ne.s32.totalorder %s421, %s423
      %p427 = scmp.eq.s32.totalorder %s30, 0
      %p428 = por %p426, %p427
      %p429 = scmp.ne.s32.totalorder %s421, %s423
      %p430 = scmp.eq.s32.totalorder %s35, 1
      %p431 = por %p429, %p430
      %p432 = scmp.ne.s32.totalorder %s423, %s424
      %p433 = scmp.eq.s32.totalorder %s35, 0
      %p434 = por %p432, %p433
      %p435 = scmp.ne.s32.totalorder %s423, %s424
      %p436 = scmp.eq.s32.totalorder %s36, 1
      %p437 = por %p435, %p436
      %p439 = scmp.ne.s32.totalorder %s424, %s438
      %p440 = scmp.eq.s32.totalorder %s36, 0
      %p441 = por %p439, %p440
      %s443 = sadd.s32 %s442, 1
      %p446 = scmp.eq.s32.totalorder %s30, 1
      %p447 = scmp.ne.s32.totalorder %s442, %s444
      %p448 = scmp.eq.s32.totalorder %s30, 0
      %p449 = por %p447, %p448
      %p450 = scmp.ne.s32.totalorder %s442, %s444
      %p451 = scmp.eq.s32.totalorder %s35, 1
      %p452 = por %p450, %p451
      %p453 = scmp.ne.s32.totalorder %s444, %s445
      %p454 = scmp.eq.s32.totalorder %s35, 0
      %p455 = por %p453, %p454
      %p456 = scmp.ne.s32.totalorder %s444, %s445
      %p457 = scmp.eq.s32.totalorder %s36, 1
      %p458 = por %p456, %p457
      %p460 = scmp.ne.s32.totalorder %s445, %s459
      %p461 = scmp.eq.s32.totalorder %s36, 0
      %p462 = por %p460, %p461
      %s464 = sadd.s32 %s463, 1
      %p467 = scmp.eq.s32.totalorder %s30, 1
      %p468 = scmp.ne.s32.totalorder %s463, %s465
      %p469 = scmp.eq.s32.totalorder %s30, 0
      %p470 = por %p468, %p469
      %p471 = scmp.ne.s32.totalorder %s463, %s465
      %p472 = scmp.eq.s32.totalorder %s35, 1
      %p473 = por %p471, %p472
      %p474 = scmp.ne.s32.totalorder %s465, %s466
      %p475 = scmp.eq.s32.totalorder %s35, 0
      %p476 = por %p474, %p475
      %p477 = scmp.ne.s32.totalorder %s465, %s466
      %p478 = scmp.eq.s32.totalorder %s36, 1
      %p479 = por %p477, %p478
      %p481 = scmp.ne.s32.totalorder %s466, %s480
      %p482 = scmp.eq.s32.totalorder %s36, 0
      %p483 = por %p481, %p482
      %s484 = ssub.s32 %s30, %s37
      %p485 = scmp.eq.s32.totalorder %s484, 0
      %s487 = sadd.s32 %s486, 1
      %s488 = scalar_select %p485, %s486, %s487
      %p491 = pneg %p485
      %p492 = scmp.eq.s32.totalorder %s30, 1
      %p493 = por %p491, %p492
      %p494 = scmp.ne.s32.totalorder %s486, %s489
      %p495 = scmp.eq.s32.totalorder %s30, 0
      %p496 = por %p494, %p495
      %p497 = scmp.ne.s32.totalorder %s486, %s489
      %p498 = scmp.eq.s32.totalorder %s35, 1
      %p499 = por %p497, %p498
      %p500 = scmp.ne.s32.totalorder %s489, %s490
      %p501 = scmp.eq.s32.totalorder %s35, 0
      %p502 = por %p500, %p501
      %p503 = scmp.ne.s32.totalorder %s489, %s490
      %p504 = scmp.eq.s32.totalorder %s36, 1
      %p505 = por %p503, %p504
      %p507 = scmp.ne.s32.totalorder %s490, %s506
      %p508 = scmp.eq.s32.totalorder %s36, 0
      %p509 = por %p507, %p508
      %p510 = scmp.le.s32.totalorder 1, %s30
      %p511 = scmp.lt.s32.totalorder %s30, 3
      %p512 = pnand %p510, %p511
      %p513 = pneg %p512
      // Predicated region
      $region9: #{vit_forward.1} parent=5 // pred_check
        _
      $region10: #{vit_forward.1} parent=5 // pred_check_branch
        %515 = sbr.rel (%p512) target = $region12
      $region11: #{vit_forward.1} parent=5 // pred_region
        %s516 = ssub.s32 %s30, 1
        // Predicated region
        $region13: #{vit_forward.1} parent=11 // pred_check
          %p517 = pneg %p77
        $region14: #{vit_forward.1} parent=11 // pred_check_branch
          %519 = sbr.rel (%p517) target = $region16
        $region15: #{vit_forward.1} parent=11 // pred_region
          _
        $region16: #{vit_forward.1} parent=11 // pred_fallthru
          _
        // Predicated region
        $region17: #{vit_forward.1} parent=11 // pred_check
          %p520 = pneg %p98
        $region18: #{vit_forward.1} parent=11 // pred_check_branch
          %522 = sbr.rel (%p520) target = $region20
        $region19: #{vit_forward.1} parent=11 // pred_region
          _
        $region20: #{vit_forward.1} parent=11 // pred_fallthru
          _
        // Predicated region
        $region21: #{vit_forward.1} parent=11 // pred_check
          %p523 = pneg %p119
        $region22: #{vit_forward.1} parent=11 // pred_check_branch
          %525 = sbr.rel (%p523) target = $region24
        $region23: #{vit_forward.1} parent=11 // pred_region
          _
        $region24: #{vit_forward.1} parent=11 // pred_fallthru
          _
        // Predicated region
        $region25: #{vit_forward.1} parent=11 // pred_check
          %p526 = pneg %p140
        $region26: #{vit_forward.1} parent=11 // pred_check_branch
          %528 = sbr.rel (%p526) target = $region28
        $region27: #{vit_forward.1} parent=11 // pred_region
          _
        $region28: #{vit_forward.1} parent=11 // pred_fallthru
          _
        // Predicated region
        $region29: #{vit_forward.1} parent=11 // pred_check
          %p529 = pneg %p161
        $region30: #{vit_forward.1} parent=11 // pred_check_branch
          %531 = sbr.rel (%p529) target = $region32
        $region31: #{vit_forward.1} parent=11 // pred_region
          _
        $region32: #{vit_forward.1} parent=11 // pred_fallthru
          _
        // Predicated region
        $region33: #{vit_forward.1} parent=11 // pred_check
          %p532 = pneg %p182
        $region34: #{vit_forward.1} parent=11 // pred_check_branch
          %534 = sbr.rel (%p532) target = $region36
        $region35: #{vit_forward.1} parent=11 // pred_region
          _
        $region36: #{vit_forward.1} parent=11 // pred_fallthru
          _
        // Predicated region
        $region37: #{vit_forward.1} parent=11 // pred_check
          %p535 = pneg %p203
        $region38: #{vit_forward.1} parent=11 // pred_check_branch
          %537 = sbr.rel (%p535) target = $region40
        $region39: #{vit_forward.1} parent=11 // pred_region
          _
        $region40: #{vit_forward.1} parent=11 // pred_fallthru
          _
        // Predicated region
        $region41: #{vit_forward.1} parent=11 // pred_check
          %p538 = pneg %p224
        $region42: #{vit_forward.1} parent=11 // pred_check_branch
          %540 = sbr.rel (%p538) target = $region44
        $region43: #{vit_forward.1} parent=11 // pred_region
          _
        $region44: #{vit_forward.1} parent=11 // pred_fallthru
          _
        // Predicated region
        $region45: #{vit_forward.1} parent=11 // pred_check
          %p541 = pneg %p245
        $region46: #{vit_forward.1} parent=11 // pred_check_branch
          %543 = sbr.rel (%p541) target = $region48
        $region47: #{vit_forward.1} parent=11 // pred_region
          _
        $region48: #{vit_forward.1} parent=11 // pred_fallthru
          _
        // Predicated region
        $region49: #{vit_forward.1} parent=11 // pred_check
          %p544 = pneg %p266
        $region50: #{vit_forward.1} parent=11 // pred_check_branch
          %546 = sbr.rel (%p544) target = $region52
        $region51: #{vit_forward.1} parent=11 // pred_region
          _
        $region52: #{vit_forward.1} parent=11 // pred_fallthru
          _
        // Predicated region
        $region53: #{vit_forward.1} parent=11 // pred_check
          %p547 = pneg %p287
        $region54: #{vit_forward.1} parent=11 // pred_check_branch
          %549 = sbr.rel (%p547) target = $region56
        $region55: #{vit_forward.1} parent=11 // pred_region
          _
        $region56: #{vit_forward.1} parent=11 // pred_fallthru
          _
        // Predicated region
        $region57: #{vit_forward.1} parent=11 // pred_check
          %p550 = pneg %p308
        $region58: #{vit_forward.1} parent=11 // pred_check_branch
          %552 = sbr.rel (%p550) target = $region60
        $region59: #{vit_forward.1} parent=11 // pred_region
          _
        $region60: #{vit_forward.1} parent=11 // pred_fallthru
          _
        // Predicated region
        $region61: #{vit_forward.1} parent=11 // pred_check
          %p553 = pneg %p329
        $region62: #{vit_forward.1} parent=11 // pred_check_branch
          %555 = sbr.rel (%p553) target = $region64
        $region63: #{vit_forward.1} parent=11 // pred_region
          _
        $region64: #{vit_forward.1} parent=11 // pred_fallthru
          _
        // Predicated region
        $region65: #{vit_forward.1} parent=11 // pred_check
          %p556 = pneg %p350
        $region66: #{vit_forward.1} parent=11 // pred_check_branch
          %558 = sbr.rel (%p556) target = $region68
        $region67: #{vit_forward.1} parent=11 // pred_region
          _
        $region68: #{vit_forward.1} parent=11 // pred_fallthru
          _
        // Predicated region
        $region69: #{vit_forward.1} parent=11 // pred_check
          %p559 = pneg %p371
        $region70: #{vit_forward.1} parent=11 // pred_check_branch
          %561 = sbr.rel (%p559) target = $region72
        $region71: #{vit_forward.1} parent=11 // pred_region
          _
        $region72: #{vit_forward.1} parent=11 // pred_fallthru
          _
        // Predicated region
        $region73: #{vit_forward.1} parent=11 // pred_check
          %p562 = pneg %p392
        $region74: #{vit_forward.1} parent=11 // pred_check_branch
          %564 = sbr.rel (%p562) target = $region76
        $region75: #{vit_forward.1} parent=11 // pred_region
          _
        $region76: #{vit_forward.1} parent=11 // pred_fallthru
          _
        // Predicated region
        $region77: #{vit_forward.1} parent=11 // pred_check
          %p565 = pneg %p413
        $region78: #{vit_forward.1} parent=11 // pred_check_branch
          %567 = sbr.rel (%p565) target = $region80
        $region79: #{vit_forward.1} parent=11 // pred_region
          _
        $region80: #{vit_forward.1} parent=11 // pred_fallthru
          _
        // Predicated region
        $region81: #{vit_forward.1} parent=11 // pred_check
          %p568 = pneg %p434
        $region82: #{vit_forward.1} parent=11 // pred_check_branch
          %570 = sbr.rel (%p568) target = $region84
        $region83: #{vit_forward.1} parent=11 // pred_region
          _
        $region84: #{vit_forward.1} parent=11 // pred_fallthru
          _
        // Predicated region
        $region85: #{vit_forward.1} parent=11 // pred_check
          %p571 = pneg %p455
        $region86: #{vit_forward.1} parent=11 // pred_check_branch
          %573 = sbr.rel (%p571) target = $region88
        $region87: #{vit_forward.1} parent=11 // pred_region
          _
        $region88: #{vit_forward.1} parent=11 // pred_fallthru
          _
        // Predicated region
        $region89: #{vit_forward.1} parent=11 // pred_check
          %p574 = pneg %p476
        $region90: #{vit_forward.1} parent=11 // pred_check_branch
          %576 = sbr.rel (%p574) target = $region92
        $region91: #{vit_forward.1} parent=11 // pred_region
          _
        $region92: #{vit_forward.1} parent=11 // pred_fallthru
          _
      $region12: #{vit_forward.1} parent=5 // pred_fallthru
        _
      %p577 = scmp.lt.s32.totalorder %s30, 2
      // Predicated region
      $region93: #{vit_forward.1} parent=5 // pred_check
        %p578 = pneg %p577
      $region94: #{vit_forward.1} parent=5 // pred_check_branch
        %580 = sbr.rel (%p578) target = $region96
      $region95: #{vit_forward.1} parent=5 // pred_region
        // Predicated region
        $region97: #{vit_forward.1} parent=95 // pred_check
          %p581 = pneg %p50
        $region98: #{vit_forward.1} parent=95 // pred_check_branch
          %583 = sbr.rel (%p581) target = $region100
        $region99: #{vit_forward.1} parent=95 // pred_region
          %p584 = scmp.lt.s32.totalorder %s30, 1
          %s585 = scalar_select %p584, %s30, 1
          %s586 = smul.addr %s585, 6
          %s587 = smul.addr %s586, 4
          %s588 = scalar_lea.vmem %s0, %s587
        $region100: #{vit_forward.1} parent=95 // pred_fallthru
          _
      $region96: #{vit_forward.1} parent=5 // pred_fallthru
        _
      %p589 = scmp.le.s32.totalorder 1, %s30
      %p590 = scmp.lt.s32.totalorder %s30, 3
      %p591 = pnand %p589, %p590
      %p592 = pneg %p591
      // Predicated region
      $region101: #{vit_forward.1} parent=5 // pred_check
        _
      $region102: #{vit_forward.1} parent=5 // pred_check_branch
        %594 = sbr.rel (%p591) target = $region104
      $region103: #{vit_forward.1} parent=5 // pred_region
        %s595 = ssub.s32 %s30, 1
        %p596 = scmp.lt.s32.totalorder %s35, 1
        %s597 = scalar_select %p596, %s35, 1
        %s598 = smul.addr %s597, 6
        %s599 = smul.addr %s598, 4
        %s600 = scalar_lea.vmem %s0, %s599
        %p601 = pneg %p56
        %p602 = pneg %p53
        %p603 = pneg %p77
        %p604 = pneg %p74
        %p605 = pneg %p98
        %p606 = pneg %p95
        %p607 = pneg %p119
        %p608 = pneg %p116
        %p609 = pneg %p140
        %p610 = pneg %p137
        %p611 = pneg %p161
        %p612 = pneg %p158
        %p613 = pneg %p182
        %p614 = pneg %p179
        %p615 = pneg %p203
        %p616 = pneg %p200
        %p617 = pneg %p224
        %p618 = pneg %p221
        %p619 = pneg %p245
        %p620 = pneg %p242
        %p621 = pneg %p266
        %p622 = pneg %p263
        %p623 = pneg %p287
        %p624 = pneg %p284
        %p625 = pneg %p308
        %p626 = pneg %p305
        %p627 = pneg %p329
        %p628 = pneg %p326
        %p629 = pneg %p350
        %p630 = pneg %p347
        %p631 = pneg %p371
        %p632 = pneg %p368
        %p633 = pneg %p392
        %p634 = pneg %p389
        %p635 = pneg %p413
        %p636 = pneg %p410
        %p637 = pneg %p434
        %p638 = pneg %p431
        %p639 = pneg %p455
        %p640 = pneg %p452
        %p641 = pneg %p476
        %p642 = pneg %p473
        %p643 = pneg %p502
        %p644 = pneg %p499
        %s645 = sand.u32 %s489, 1
        %s646 = scalar_lea.sflag [#allocation5], %s645
        %s647 = sand.u32 %s489, 1
        %s648 = scalar_lea.vmem [#allocation4], %s647
        %p649 = scmp.lt.s32.totalorder %s35, 1
        %s650 = scalar_select %p649, %s35, 1
        %s651 = smul.addr %s650, 6
        %s652 = smul.addr %s651, 4
        %s653 = scalar_lea.vmem %s0, %s652
        %v655 = vld [vmem:[%s653] sm:$0xff]
        %v656 = vld [vmem:[%s653 + $0x8] sm:$0xff]
        %v657 = vld [vmem:[%s653 + $0x10] sm:$0xff]
        %v658 = vld [vmem:[%s1] sm:$0xff]
        %v659 = vld [vmem:[%s1 + $0x8] sm:$0xff]
        %v660 = vld [vmem:[%s1 + $0x10] sm:$0xff]
        %v661 = vld [vmem:[%s1 + $0x18] sm:$0xff]
        %v662 = vld [vmem:[%s1 + $0x20] sm:$0xff]
        %v663 = vld [vmem:[%s1 + $0x28] sm:$0xff]
        %v664 = vld [vmem:[%s1 + $0x30] sm:$0xff]
        %v665 = vld [vmem:[%s1 + $0x38] sm:$0xff]
        %v666 = vld [vmem:[%s1 + $0x40] sm:$0xff]
        %v667 = vld [vmem:[%s1 + $0x48] sm:$0xff]
        %v668 = vld [vmem:[%s1 + $0x50] sm:$0xff]
        %v669 = vld [vmem:[%s1 + $0x58] sm:$0xff]
        %v670 = vld [vmem:[%s1 + $0x60] sm:$0xff]
        %v671 = vld [vmem:[%s1 + $0x68] sm:$0xff]
        %v672 = vld [vmem:[%s1 + $0x70] sm:$0xff]
        %v673 = vld [vmem:[%s1 + $0x78] sm:$0xff]
        %v674 = vld [vmem:[%s1 + $0x80] sm:$0xff]
        %v675 = vld [vmem:[%s1 + $0x88] sm:$0xff]
        %v676 = vld [vmem:[%s1 + $0x90] sm:$0xff]
        %v677 = vld [vmem:[%s1 + $0x98] sm:$0xff]
        %v678 = vld [vmem:[%s1 + $0xa0] sm:$0xff]
        %v679 = vld [vmem:[%s1 + $0xa8] sm:$0xff]
        %v680 = vld [vmem:[%s1 + $0xb0] sm:$0xff]
        %v681 = vld [vmem:[%s1 + $0xb8] sm:$0xff]
        %v682 = vld [vmem:[%s1 + $0xc0] sm:$0xff]
        %v683 = vld [vmem:[%s1 + $0xc8] sm:$0xff]
        %v684 = vld [vmem:[%s1 + $0xd0] sm:$0xff]
        %v685 = vld [vmem:[%s1 + $0xd8] sm:$0xff]
        %v686 = vld [vmem:[%s1 + $0xe0] sm:$0xff]
        %v687 = vld [vmem:[%s1 + $0xe8] sm:$0xff]
        %v688 = vld [vmem:[%s1 + $0xf0] sm:$0xff]
        %v689 = vld [vmem:[%s1 + $0xf8] sm:$0xff]
        %v690 = vld [vmem:[%s1 + $0x100] sm:$0xff]
        %v691 = vld [vmem:[%s1 + $0x108] sm:$0xff]
        %v692 = vld [vmem:[%s1 + $0x110] sm:$0xff]
        %v693 = vld [vmem:[%s1 + $0x118] sm:$0xff]
        %v694 = vld [vmem:[%s1 + $0x120] sm:$0xff]
        %v695 = vld [vmem:[%s1 + $0x128] sm:$0xff]
        %v696 = vld [vmem:[%s1 + $0x130] sm:$0xff]
        %v697 = vld [vmem:[%s1 + $0x138] sm:$0xff]
        %v698 = vld [vmem:[%s1 + $0x140] sm:$0xff]
        %v699 = vld [vmem:[%s1 + $0x148] sm:$0xff]
        %v700 = vld [vmem:[%s1 + $0x150] sm:$0xff]
        %v701 = vld [vmem:[%s1 + $0x158] sm:$0xff]
        %v702 = vld [vmem:[%s1 + $0x160] sm:$0xff]
        %v703 = vld [vmem:[%s1 + $0x168] sm:$0xff]
        %v704 = vld [vmem:[%s1 + $0x170] sm:$0xff]
        %v705 = vld [vmem:[%s1 + $0x178] sm:$0xff]
        %v706 = vld [vmem:[%s1 + $0x180] sm:$0xff]
        %v707 = vld [vmem:[%s1 + $0x188] sm:$0xff]
        %v708 = vld [vmem:[%s1 + $0x190] sm:$0xff]
        %v709 = vld [vmem:[%s1 + $0x198] sm:$0xff]
        %v710 = vld [vmem:[%s1 + $0x1a0] sm:$0xff]
        %v711 = vld [vmem:[%s1 + $0x1a8] sm:$0xff]
        %v712 = vld [vmem:[%s1 + $0x1b0] sm:$0xff]
        %v713 = vld [vmem:[%s1 + $0x1b8] sm:$0xff]
        %v714 = vld [vmem:[%s1 + $0x1c0] sm:$0xff]
        %v715 = vld [vmem:[%s1 + $0x1c8] sm:$0xff]
        %v716 = vld [vmem:[%s1 + $0x1d0] sm:$0xff]
        %v717 = vld [vmem:[%s1 + $0x1d8] sm:$0xff]
        %v718 = vld [vmem:[%s1 + $0x1e0] sm:$0xff]
        %v719 = vld [vmem:[%s1 + $0x1e8] sm:$0xff]
        %v720 = vld [vmem:[%s1 + $0x1f0] sm:$0xff]
        %v721 = vld [vmem:[%s1 + $0x1f8] sm:$0xff]
        %v722 = vld [vmem:[%s1 + $0x200] sm:$0xff]
        %v723 = vld [vmem:[%s1 + $0x208] sm:$0xff]
        %v724 = vld [vmem:[%s1 + $0x210] sm:$0xff]
        %v725 = vld [vmem:[%s1 + $0x218] sm:$0xff]
        %v726 = vld [vmem:[%s1 + $0x220] sm:$0xff]
        %v727 = vld [vmem:[%s1 + $0x228] sm:$0xff]
        %v728 = vld [vmem:[%s1 + $0x230] sm:$0xff]
        %v729 = vld [vmem:[%s1 + $0x238] sm:$0xff]
        %v730 = vld [vmem:[%s1 + $0x240] sm:$0xff]
        %v731 = vld [vmem:[%s1 + $0x248] sm:$0xff]
        %v732 = vld [vmem:[%s1 + $0x250] sm:$0xff]
        %v733 = vld [vmem:[%s1 + $0x258] sm:$0xff]
        %v734 = vld [vmem:[%s1 + $0x260] sm:$0xff]
        %v735 = vld [vmem:[%s1 + $0x268] sm:$0xff]
        %v736 = vld [vmem:[%s1 + $0x270] sm:$0xff]
        %v737 = vld [vmem:[%s1 + $0x278] sm:$0xff]
        %v738 = vld [vmem:[%s1 + $0x280] sm:$0xff]
        %v739 = vld [vmem:[%s1 + $0x288] sm:$0xff]
        %v740 = vld [vmem:[%s1 + $0x290] sm:$0xff]
        %v741 = vld [vmem:[%s1 + $0x298] sm:$0xff]
        %v742 = vld [vmem:[%s1 + $0x2a0] sm:$0xff]
        %v743 = vld [vmem:[%s1 + $0x2a8] sm:$0xff]
        %v744 = vld [vmem:[%s1 + $0x2b0] sm:$0xff]
        %v745 = vld [vmem:[%s1 + $0x2b8] sm:$0xff]
        %v746 = vld [vmem:[%s1 + $0x2c0] sm:$0xff]
        %v747 = vld [vmem:[%s1 + $0x2c8] sm:$0xff]
        %v748 = vld [vmem:[%s1 + $0x2d0] sm:$0xff]
        %v749 = vld [vmem:[%s1 + $0x2d8] sm:$0xff]
        %v750 = vld [vmem:[%s1 + $0x2e0] sm:$0xff]
        %v751 = vld [vmem:[%s1 + $0x2e8] sm:$0xff]
        %v752 = vld [vmem:[%s1 + $0x2f0] sm:$0xff]
        %v753 = vld [vmem:[%s1 + $0x2f8] sm:$0xff]
        %v757 = vcombine.high %v655, %v655
        %v758 = vcombine.high %v656, %v656
        %v759 = vcombine.high %v657, %v657
        %v763 = vpack.c.bf16 %v655, %v655
        %v764 = vpack.c.bf16 %v757, %v757
        %v765 = vpack.c.bf16 %v656, %v656
        %v766 = vpack.c.bf16 %v758, %v758
        %v767 = vpack.c.bf16 %v657, %v657
        %v768 = vpack.c.bf16 %v759, %v759
        %v769 = vpack.c.bf16 %v659, %v658
        %v770 = vpack.c.bf16 %v661, %v660
        %v771 = vpack.c.bf16 %v663, %v662
        %v772 = vpack.c.bf16 %v665, %v664
        %v773 = vpack.c.bf16 %v667, %v666
        %v774 = vpack.c.bf16 %v669, %v668
        %v775 = vpack.c.bf16 %v671, %v670
        %v776 = vpack.c.bf16 %v673, %v672
        %v777 = vpack.c.bf16 %v675, %v674
        %v778 = vpack.c.bf16 %v677, %v676
        %v779 = vpack.c.bf16 %v679, %v678
        %v780 = vpack.c.bf16 %v681, %v680
        %v781 = vpack.c.bf16 %v683, %v682
        %v782 = vpack.c.bf16 %v685, %v684
        %v783 = vpack.c.bf16 %v687, %v686
        %v784 = vpack.c.bf16 %v689, %v688
        %v785 = vpack.c.bf16 %v691, %v690
        %v786 = vpack.c.bf16 %v693, %v692
        %v787 = vpack.c.bf16 %v695, %v694
        %v788 = vpack.c.bf16 %v697, %v696
        %v789 = vpack.c.bf16 %v699, %v698
        %v790 = vpack.c.bf16 %v701, %v700
        %v791 = vpack.c.bf16 %v703, %v702
        %v792 = vpack.c.bf16 %v705, %v704
        %v793 = vpack.c.bf16 %v707, %v706
        %v794 = vpack.c.bf16 %v709, %v708
        %v795 = vpack.c.bf16 %v711, %v710
        %v796 = vpack.c.bf16 %v713, %v712
        %v797 = vpack.c.bf16 %v715, %v714
        %v798 = vpack.c.bf16 %v717, %v716
        %v799 = vpack.c.bf16 %v719, %v718
        %v800 = vpack.c.bf16 %v721, %v720
        %v801 = vpack.c.bf16 %v723, %v722
        %v802 = vpack.c.bf16 %v725, %v724
        %v803 = vpack.c.bf16 %v727, %v726
        %v804 = vpack.c.bf16 %v729, %v728
        %v805 = vpack.c.bf16 %v731, %v730
        %v806 = vpack.c.bf16 %v733, %v732
        %v807 = vpack.c.bf16 %v735, %v734
        %v808 = vpack.c.bf16 %v737, %v736
        %v809 = vpack.c.bf16 %v739, %v738
        %v810 = vpack.c.bf16 %v741, %v740
        %v811 = vpack.c.bf16 %v743, %v742
        %v812 = vpack.c.bf16 %v745, %v744
        %v813 = vpack.c.bf16 %v747, %v746
        %v814 = vpack.c.bf16 %v749, %v748
        %v815 = vpack.c.bf16 %v751, %v750
        %v816 = vpack.c.bf16 %v753, %v752
        %v817 = vld [vmem:[%s2] sm:$0x1]
        %v819 = vlaneseq
        %v820 = vshrl.u32 %v819, 7
        %v821 = vsub.s32 0, %v820
        %v822 = vrot.slane %v817, %v821
        %824 = vmatprep.subr.bf16.mxu0 0
        %825 = vmatpush1.bf16.msra.mxu0 %v769
        %826 = vmatprep.subr.bf16.mxu0 0
        %827 = vmatpush1.bf16.msra.mxu0 %v770
        %828 = vmatprep.subr.bf16.mxu0 0
        %829 = vmatpush1.bf16.msra.mxu0 %v771
        %830 = vmatprep.subr.bf16.mxu0 0
        %831 = vmatpush1.bf16.msra.mxu0 %v772
        %832 = vmatprep.subr.bf16.mxu0 0
        %833 = vmatpush1.bf16.msra.mxu0 %v773
        %834 = vmatprep.subr.bf16.mxu0 0
        %835 = vmatpush1.bf16.msra.mxu0 %v774
        %836 = vmatprep.subr.bf16.mxu0 0
        %837 = vmatpush1.bf16.msra.mxu0 %v775
        %838 = vmatprep.subr.bf16.mxu0 0
        %839 = vmatpush1.bf16.msra.mxu0 %v776
        %840 = vmatprep.subr.bf16.mxu0 0
        %841 = vmatpush1.bf16.msra.mxu0 %v777
        %842 = vmatprep.subr.bf16.mxu0 0
        %843 = vmatpush1.bf16.msra.mxu0 %v778
        %844 = vmatprep.subr.bf16.mxu0 0
        %845 = vmatpush1.bf16.msra.mxu0 %v779
        %846 = vmatprep.subr.bf16.mxu0 0
        %847 = vmatpush1.bf16.msra.mxu0 %v780
        %848 = vmatprep.subr.bf16.mxu0 0
        %849 = vmatpush1.bf16.msra.mxu0 %v781
        %850 = vmatprep.subr.bf16.mxu0 0
        %851 = vmatpush1.bf16.msra.mxu0 %v782
        %852 = vmatprep.subr.bf16.mxu0 0
        %853 = vmatpush1.bf16.msra.mxu0 %v783
        %854 = vmatprep.subr.bf16.mxu0 0
        %855 = vmatpush1.bf16.msra.mxu0 %v784
        %856 = vmatprep.mubr.bf16.mxu0 %v764
        %857 = vmatmul.mubr.bf16.gmra.mrb[0].mxu0 %v763
        %v858 = vpop.f32.mrb[0].mxu0
        %v859 = vadd.f32 %v822, %v858
        %v860 = vpop.f32.mrb[0].mxu0
        %v861 = vpop.f32.mrb[0].mxu0
        %v862 = vpop.f32.mrb[0].mxu0
        %863 = vdwg.mxu0
        %864 = vmatprep.subr.bf16.mxu0 0
        %865 = vmatpush1.bf16.msra.mxu0 %v785
        %866 = vmatprep.subr.bf16.mxu0 0
        %867 = vmatpush1.bf16.msra.mxu0 %v786
        %868 = vmatprep.subr.bf16.mxu0 0
        %869 = vmatpush1.bf16.msra.mxu0 %v787
        %870 = vmatprep.subr.bf16.mxu0 0
        %871 = vmatpush1.bf16.msra.mxu0 %v788
        %872 = vmatprep.subr.bf16.mxu0 0
        %873 = vmatpush1.bf16.msra.mxu0 %v789
        %874 = vmatprep.subr.bf16.mxu0 0
        %875 = vmatpush1.bf16.msra.mxu0 %v790
        %876 = vmatprep.subr.bf16.mxu0 0
        %877 = vmatpush1.bf16.msra.mxu0 %v791
        %878 = vmatprep.subr.bf16.mxu0 0
        %879 = vmatpush1.bf16.msra.mxu0 %v792
        %880 = vmatprep.subr.bf16.mxu0 0
        %881 = vmatpush1.bf16.msra.mxu0 %v793
        %882 = vmatprep.subr.bf16.mxu0 0
        %883 = vmatpush1.bf16.msra.mxu0 %v794
        %884 = vmatprep.subr.bf16.mxu0 0
        %885 = vmatpush1.bf16.msra.mxu0 %v795
        %886 = vmatprep.subr.bf16.mxu0 0
        %887 = vmatpush1.bf16.msra.mxu0 %v796
        %888 = vmatprep.subr.bf16.mxu0 0
        %889 = vmatpush1.bf16.msra.mxu0 %v797
        %890 = vmatprep.subr.bf16.mxu0 0
        %891 = vmatpush1.bf16.msra.mxu0 %v798
        %892 = vmatprep.subr.bf16.mxu0 0
        %893 = vmatpush1.bf16.msra.mxu0 %v799
        %894 = vmatprep.subr.bf16.mxu0 0
        %895 = vmatpush1.bf16.msra.mxu0 %v800
        %896 = vmatprep.mubr.bf16.mxu0 %v766
        %897 = vmatmul.mubr.bf16.gmra.mrb[0].mxu0 %v765
        %v898 = vpop.f32.mrb[0].mxu0
        %v899 = vadd.f32 %v859, %v898
        %v900 = vpop.f32.mrb[0].mxu0
        %v901 = vpop.f32.mrb[0].mxu0
        %v902 = vpop.f32.mrb[0].mxu0
        %903 = vdwg.mxu0
        %904 = vmatprep.subr.bf16.mxu0 0
        %905 = vmatpush1.bf16.msra.mxu0 %v801
        %906 = vmatprep.subr.bf16.mxu0 0
        %907 = vmatpush1.bf16.msra.mxu0 %v802
        %908 = vmatprep.subr.bf16.mxu0 0
        %909 = vmatpush1.bf16.msra.mxu0 %v803
        %910 = vmatprep.subr.bf16.mxu0 0
        %911 = vmatpush1.bf16.msra.mxu0 %v804
        %912 = vmatprep.subr.bf16.mxu0 0
        %913 = vmatpush1.bf16.msra.mxu0 %v805
        %914 = vmatprep.subr.bf16.mxu0 0
        %915 = vmatpush1.bf16.msra.mxu0 %v806
        %916 = vmatprep.subr.bf16.mxu0 0
        %917 = vmatpush1.bf16.msra.mxu0 %v807
        %918 = vmatprep.subr.bf16.mxu0 0
        %919 = vmatpush1.bf16.msra.mxu0 %v808
        %920 = vmatprep.subr.bf16.mxu0 0
        %921 = vmatpush1.bf16.msra.mxu0 %v809
        %922 = vmatprep.subr.bf16.mxu0 0
        %923 = vmatpush1.bf16.msra.mxu0 %v810
        %924 = vmatprep.subr.bf16.mxu0 0
        %925 = vmatpush1.bf16.msra.mxu0 %v811
        %926 = vmatprep.subr.bf16.mxu0 0
        %927 = vmatpush1.bf16.msra.mxu0 %v812
        %928 = vmatprep.subr.bf16.mxu0 0
        %929 = vmatpush1.bf16.msra.mxu0 %v813
        %930 = vmatprep.subr.bf16.mxu0 0
        %931 = vmatpush1.bf16.msra.mxu0 %v814
        %932 = vmatprep.subr.bf16.mxu0 0
        %933 = vmatpush1.bf16.msra.mxu0 %v815
        %934 = vmatprep.subr.bf16.mxu0 0
        %935 = vmatpush1.bf16.msra.mxu0 %v816
        %936 = vmatprep.mubr.bf16.mxu0 %v768
        %937 = vmatmul.mubr.bf16.gmra.mrb[0].mxu0 %v767
        %v938 = vpop.f32.mrb[0].mxu0
        %v939 = vadd.f32 %v899, %v938
        %v940 = vpop.f32.mrb[0].mxu0
        %v941 = vpop.f32.mrb[0].mxu0
        %v942 = vpop.f32.mrb[0].mxu0
        %943 = vdwg.mxu0
        %v944 = vld [vmem:[%s3] sm:$0x1]
        %v945 = vld [vmem:[%s4] sm:$0x1]
        %v946 = vadd.f32 %v944, %v945
        %vm947 = vcmask 253952
        %948 = vst.msk [vmem:[#allocation2] sm:$0x1] %vm947, %v946
        %v949 = vld [vmem:[%s4 + $0x1] sm:$0xf]
        %v950 = vadd.f32 %v939, %v949
        %vm951 = vcmask 257024
        %952 = vst.msk [vmem:[#allocation2 + $0x1] sm:$0xf] %vm951, %v950
        %v953 = vld [vmem:[#allocation2] sm:$0x1f]
        %v954 = vld [vmem:[%s5] sm:$0x1]
        %v955 = vld [vmem:[%s6] sm:$0x1]
        %vm956 = vcmask 258048
        %v957 = vsel %vm956, %v953, 0.0
        %958 = vadd.xlane.f32.xlu0 %v957
        %v959 = vpop.xlane.xlu0 %958
        %v960 = vrcp.pop 32.0
        %v961 = vmul.f32 %v959, %v960
        %v962 = vsub.f32 %v953, %v961
        %v963 = vmul.f32 %v962, %v962
        %v964 = vsel %vm956, %v963, 0.0
        %965 = vadd.xlane.f32.xlu0 %v964
        %v966 = vpop.xlane.xlu0 %965
        %v967 = vmul.f32 %v966, %v960
        %v968 = vadd.f32 %v967, 1e-06
        %v969 = vrsqrt.pop %v968
        %v970 = vmul.f32 %v962, %v969
        %v972 = vlaneseq
        %v973 = vshrl.u32 %v972, 7
        %v974 = vsub.s32 0, %v973
        %v975 = vrot.slane %v954, %v974
        %v977 = vmul.f32 %v970, %v975
        %v979 = vlaneseq
        %v980 = vshrl.u32 %v979, 7
        %v981 = vsub.s32 0, %v980
        %v982 = vrot.slane %v955, %v981
        %v984 = vadd.f32 %v977, %v982
        %v985 = vld [vmem:[%s7] sm:$0xff]
        %v986 = vld [vmem:[%s7 + $0x8] sm:$0xff]
        %v987 = vld [vmem:[%s7 + $0x10] sm:$0xff]
        %v988 = vld [vmem:[%s7 + $0x18] sm:$0xff]
        %v989 = vpack.c.bf16 %v984, %v984
        %v990 = vpack.c.bf16 %v986, %v985
        %v991 = vpack.c.bf16 %v988, %v987
        %v992 = vld [vmem:[%s8] sm:$0x1]
        %v994 = vlaneseq
        %v995 = vshrl.u32 %v994, 7
        %v996 = vsub.s32 0, %v995
        %v997 = vrot.slane %v992, %v996
        %vm999 = vcmask 261120
        %v1001 = vsel %vm999, %v989, 0
        %1003 = vmatprep.subr.bf16.mxu0 0
        %1004 = vmatpush1.bf16.msra.mxu0 %v990
        %1005 = vmatprep.subr.bf16.mxu0 0
        %1006 = vmatpush1.bf16.msra.mxu0 %v991
        %1007 = vmatprep.subr.bf16.mxu0 0
        %1008 = vmatpush1.bf16.msra.mxu0 0
        %1009 = vmatprep.subr.bf16.mxu0 0
        %1010 = vmatpush1.bf16.msra.mxu0 0
        %1011 = vmatprep.subr.bf16.mxu0 0
        %1012 = vmatpush1.bf16.msra.mxu0 0
        %1013 = vmatprep.subr.bf16.mxu0 0
        %1014 = vmatpush1.bf16.msra.mxu0 0
        %1015 = vmatprep.subr.bf16.mxu0 0
        %1016 = vmatpush1.bf16.msra.mxu0 0
        %1017 = vmatprep.subr.bf16.mxu0 0
        %1018 = vmatpush1.bf16.msra.mxu0 0
        %1019 = vmatprep.subr.bf16.mxu0 0
        %1020 = vmatpush1.bf16.msra.mxu0 0
        %1021 = vmatprep.subr.bf16.mxu0 0
        %1022 = vmatpush1.bf16.msra.mxu0 0
        %1023 = vmatprep.subr.bf16.mxu0 0
        %1024 = vmatpush1.bf16.msra.mxu0 0
        %1025 = vmatprep.subr.bf16.mxu0 0
        %1026 = vmatpush1.bf16.msra.mxu0 0
        %1027 = vmatprep.subr.bf16.mxu0 0
        %1028 = vmatpush1.bf16.msra.mxu0 0
        %1029 = vmatprep.subr.bf16.mxu0 0
        %1030 = vmatpush1.bf16.msra.mxu0 0
        %1031 = vmatprep.subr.bf16.mxu0 0
        %1032 = vmatpush1.bf16.msra.mxu0 0
        %1033 = vmatprep.subr.bf16.mxu0 0
        %1034 = vmatpush1.bf16.msra.mxu0 0
        %1035 = vmatprep.mubr.bf16.mxu0 0
        %1036 = vmatmul.mubr.bf16.gmra.mrb[0].mxu0 %v1001
        %v1037 = vpop.f32.mrb[0].mxu0
        %v1038 = vadd.f32 %v997, %v1037
        %v1039 = vpop.f32.mrb[0].mxu0
        %v1040 = vpop.f32.mrb[0].mxu0
        %v1041 = vpop.f32.mrb[0].mxu0
        %1042 = vdwg.mxu0
        %v1043 = vpack.c.bf16 %v1038, %v1038
        %1045 = vrot.lane.b32.xlu0 %v1043, 96
        %v1046 = vpop.permute.xlu0 %1045
        %vm1047 = vcmask 64512
        %v1049 = vsel %vm1047, %v1043, 0
        %v1052 = vsel %vm1047, %v1046, 0
        %1054 = vmatprep.subr.bf16.mxu0 0
        %1055 = vmatpush1.bf16.xpose.msra.mxu0 %v1052
        %1056 = vmatprep.subr.bf16.mxu0 0
        %1057 = vmatpush1.bf16.xpose.msra.mxu0 0
        %1058 = vmatprep.subr.bf16.mxu0 0
        %1059 = vmatpush1.bf16.xpose.msra.mxu0 0
        %1060 = vmatprep.subr.bf16.mxu0 0
        %1061 = vmatpush1.bf16.xpose.msra.mxu0 0
        %1062 = vmatprep.subr.bf16.mxu0 0
        %1063 = vmatpush1.bf16.xpose.msra.mxu0 0
        %1064 = vmatprep.subr.bf16.mxu0 0
        %1065 = vmatpush1.bf16.xpose.msra.mxu0 0
        %1066 = vmatprep.subr.bf16.mxu0 0
        %1067 = vmatpush1.bf16.xpose.msra.mxu0 0
        %1068 = vmatprep.subr.bf16.mxu0 0
        %1069 = vmatpush1.bf16.xpose.msra.mxu0 0
        %1070 = vmatprep.subr.bf16.mxu0 0
        %1071 = vmatpush1.bf16.xpose.msra.mxu0 0
        %1072 = vmatprep.subr.bf16.mxu0 0
        %1073 = vmatpush1.bf16.xpose.msra.mxu0 0
        %1074 = vmatprep.subr.bf16.mxu0 0
        %1075 = vmatpush1.bf16.xpose.msra.mxu0 0
        %1076 = vmatprep.subr.bf16.mxu0 0
        %1077 = vmatpush1.bf16.xpose.msra.mxu0 0
        %1078 = vmatprep.subr.bf16.mxu0 0
        %1079 = vmatpush1.bf16.xpose.msra.mxu0 0
        %1080 = vmatprep.subr.bf16.mxu0 0
        %1081 = vmatpush1.bf16.xpose.msra.mxu0 0
        %1082 = vmatprep.subr.bf16.mxu0 0
        %1083 = vmatpush1.bf16.xpose.msra.mxu0 0
        %1084 = vmatprep.subr.bf16.mxu0 0
        %1085 = vmatpush1.bf16.xpose.msra.mxu0 0
        %1086 = vmatprep.mubr.bf16.mxu0 0
        %1087 = vmatmul.mubr.bf16.gmra.mrb[0].mxu0 %v1049
        %v1088 = vpop.f32.mrb[0].mxu0
        %v1089 = vadd.f32 0.0, %v1088
        %v1090 = vpop.f32.mrb[0].mxu0
        %v1091 = vpop.f32.mrb[0].mxu0
        %v1092 = vpop.f32.mrb[0].mxu0
        %1093 = vdwg.mxu0
        %v1094 = vmul.f32 %v1089, 0.35355338
        %vm1095 = vcmask 36864
        %v1096 = vsel %vm1095, %v1094, -inf
        %1097 = vmax.xlane.f32.xlu0 %v1096
        %v1098 = vpop.xlane.xlu0 %1097
        %v1099 = vsub.f32 %v1094, %v1098
        %v1100 = vmul.f32 %v1099, 1.442695
        %v1101 = vpow.pop %v1100
        %v1102 = vsel %vm1095, %v1101, 0.0
        %1103 = vadd.xlane.f32.xlu0 %v1102
        %v1104 = vpop.xlane.xlu0 %1103
        %v1105 = vrcp.pop %v1104
        %v1106 = vmul.f32 %v1101, %v1105
        %v1107 = vpack.c.bf16 %v1106, %v1106
        %1108 = vrot.lane.b32.xlu0 %v1043, 64
        %v1109 = vpop.permute.xlu0 %1108
        %vm1110 = vcmask 39936
        %v1112 = vsel %vm1110, %v1107, 0
        %vm1114 = vcmask 1041408
        %vm1115 = vcmask 1042432
        %v1116 = vsel %vm1114, 4294967295, 65535
        %v1117 = vsel %vm1115, %v1116, 0
        %v1119 = vand.u32 %v1109, %v1117
        %1121 = vmatprep.subr.bf16.mxu0 0
        %1122 = vmatpush1.bf16.msra.mxu0 %v1119
        %1123 = vmatprep.subr.bf16.mxu0 0
        %1124 = vmatpush1.bf16.msra.mxu0 0
        %1125 = vmatprep.subr.bf16.mxu0 0
        %1126 = vmatpush1.bf16.msra.mxu0 0
        %1127 = vmatprep.subr.bf16.mxu0 0
        %1128 = vmatpush1.bf16.msra.mxu0 0
        %1129 = vmatprep.subr.bf16.mxu0 0
        %1130 = vmatpush1.bf16.msra.mxu0 0
        %1131 = vmatprep.subr.bf16.mxu0 0
        %1132 = vmatpush1.bf16.msra.mxu0 0
        %1133 = vmatprep.subr.bf16.mxu0 0
        %1134 = vmatpush1.bf16.msra.mxu0 0
        %1135 = vmatprep.subr.bf16.mxu0 0
        %1136 = vmatpush1.bf16.msra.mxu0 0
        %1137 = vmatprep.subr.bf16.mxu0 0
        %1138 = vmatpush1.bf16.msra.mxu0 0
        %1139 = vmatprep.subr.bf16.mxu0 0
        %1140 = vmatpush1.bf16.msra.mxu0 0
        %1141 = vmatprep.subr.bf16.mxu0 0
        %1142 = vmatpush1.bf16.msra.mxu0 0
        %1143 = vmatprep.subr.bf16.mxu0 0
        %1144 = vmatpush1.bf16.msra.mxu0 0
        %1145 = vmatprep.subr.bf16.mxu0 0
        %1146 = vmatpush1.bf16.msra.mxu0 0
        %1147 = vmatprep.subr.bf16.mxu0 0
        %1148 = vmatpush1.bf16.msra.mxu0 0
        %1149 = vmatprep.subr.bf16.mxu0 0
        %1150 = vmatpush1.bf16.msra.mxu0 0
        %1151 = vmatprep.subr.bf16.mxu0 0
        %1152 = vmatpush1.bf16.msra.mxu0 0
        %1153 = vmatprep.mubr.bf16.mxu0 0
        %1154 = vmatmul.mubr.bf16.gmra.mrb[0].mxu0 %v1112
        %v1155 = vpop.f32.mrb[0].mxu0
        %v1156 = vadd.f32 0.0, %v1155
        %v1157 = vpop.f32.mrb[0].mxu0
        %v1158 = vpop.f32.mrb[0].mxu0
        %v1159 = vpop.f32.mrb[0].mxu0
        %1160 = vdwg.mxu0
        %vm1161 = vcmask 61440
        %1162 = vst.msk [vmem:[#allocation3] sm:$0x1f] %vm1161, %v1156
        %1163 = vrot.lane.b32.xlu0 %v1043, 120
        %v1164 = vpop.permute.xlu0 %1163
        %1165 = vrot.lane.b32.xlu0 %v1043, 88
        %v1166 = vpop.permute.xlu0 %1165
        %v1168 = vsel %vm1047, %v1164, 0
        %v1171 = vsel %vm1047, %v1166, 0
        %1173 = vmatprep.subr.bf16.mxu0 0
        %1174 = vmatpush1.bf16.xpose.msra.mxu0 %v1171
        %1175 = vmatprep.subr.bf16.mxu0 0
        %1176 = vmatpush1.bf16.xpose.msra.mxu0 0
        %1177 = vmatprep.subr.bf16.mxu0 0
        %1178 = vmatpush1.bf16.xpose.msra.mxu0 0
        %1179 = vmatprep.subr.bf16.mxu0 0
        %1180 = vmatpush1.bf16.xpose.msra.mxu0 0
        %1181 = vmatprep.subr.bf16.mxu0 0
        %1182 = vmatpush1.bf16.xpose.msra.mxu0 0
        %1183 = vmatprep.subr.bf16.mxu0 0
        %1184 = vmatpush1.bf16.xpose.msra.mxu0 0
        %1185 = vmatprep.subr.bf16.mxu0 0
        %1186 = vmatpush1.bf16.xpose.msra.mxu0 0
        %1187 = vmatprep.subr.bf16.mxu0 0
        %1188 = vmatpush1.bf16.xpose.msra.mxu0 0
        %1189 = vmatprep.subr.bf16.mxu0 0
        %1190 = vmatpush1.bf16.xpose.msra.mxu0 0
        %1191 = vmatprep.subr.bf16.mxu0 0
        %1192 = vmatpush1.bf16.xpose.msra.mxu0 0
        %1193 = vmatprep.subr.bf16.mxu0 0
        %1194 = vmatpush1.bf16.xpose.msra.mxu0 0
        %1195 = vmatprep.subr.bf16.mxu0 0
        %1196 = vmatpush1.bf16.xpose.msra.mxu0 0
        %1197 = vmatprep.subr.bf16.mxu0 0
        %1198 = vmatpush1.bf16.xpose.msra.mxu0 0
        %1199 = vmatprep.subr.bf16.mxu0 0
        %1200 = vmatpush1.bf16.xpose.msra.mxu0 0
        %1201 = vmatprep.subr.bf16.mxu0 0
        %1202 = vmatpush1.bf16.xpose.msra.mxu0 0
        %1203 = vmatprep.subr.bf16.mxu0 0
        %1204 = vmatpush1.bf16.xpose.msra.mxu0 0
        %1205 = vmatprep.mubr.bf16.mxu0 0
        %1206 = vmatmul.mubr.bf16.gmra.mrb[0].mxu0 %v1168
        %v1207 = vpop.f32.mrb[0].mxu0
        %v1208 = vadd.f32 0.0, %v1207
        %v1209 = vpop.f32.mrb[0].mxu0
        %v1210 = vpop.f32.mrb[0].mxu0
        %v1211 = vpop.f32.mrb[0].mxu0
        %1212 = vdwg.mxu0
        %v1213 = vmul.f32 %v1208, 0.35355338
        %v1214 = vsel %vm1095, %v1213, -inf
        %1215 = vmax.xlane.f32.xlu0 %v1214
        %v1216 = vpop.xlane.xlu0 %1215
        %v1217 = vsub.f32 %v1213, %v1216
        %v1218 = vmul.f32 %v1217, 1.442695
        %v1219 = vpow.pop %v1218
        %v1220 = vsel %vm1095, %v1219, 0.0
        %1221 = vadd.xlane.f32.xlu0 %v1220
        %v1222 = vpop.xlane.xlu0 %1221
        %v1223 = vrcp.pop %v1222
        %v1224 = vmul.f32 %v1219, %v1223
        %v1225 = vpack.c.bf16 %v1224, %v1224
        %1226 = vrot.lane.b32.xlu0 %v1043, 56
        %v1227 = vpop.permute.xlu0 %1226
        %v1229 = vsel %vm1110, %v1225, 0
        %v1232 = vand.u32 %v1227, %v1117
        %1234 = vmatprep.subr.bf16.mxu0 0
        %1235 = vmatpush1.bf16.msra.mxu0 %v1232
        %1236 = vmatprep.subr.bf16.mxu0 0
        %1237 = vmatpush1.bf16.msra.mxu0 0
        %1238 = vmatprep.subr.bf16.mxu0 0
        %1239 = vmatpush1.bf16.msra.mxu0 0
        %1240 = vmatprep.subr.bf16.mxu0 0
        %1241 = vmatpush1.bf16.msra.mxu0 0
        %1242 = vmatprep.subr.bf16.mxu0 0
        %1243 = vmatpush1.bf16.msra.mxu0 0
        %1244 = vmatprep.subr.bf16.mxu0 0
        %1245 = vmatpush1.bf16.msra.mxu0 0
        %1246 = vmatprep.subr.bf16.mxu0 0
        %1247 = vmatpush1.bf16.msra.mxu0 0
        %1248 = vmatprep.subr.bf16.mxu0 0
        %1249 = vmatpush1.bf16.msra.mxu0 0
        %1250 = vmatprep.subr.bf16.mxu0 0
        %1251 = vmatpush1.bf16.msra.mxu0 0
        %1252 = vmatprep.subr.bf16.mxu0 0
        %1253 = vmatpush1.bf16.msra.mxu0 0
        %1254 = vmatprep.subr.bf16.mxu0 0
        %1255 = vmatpush1.bf16.msra.mxu0 0
        %1256 = vmatprep.subr.bf16.mxu0 0
        %1257 = vmatpush1.bf16.msra.mxu0 0
        %1258 = vmatprep.subr.bf16.mxu0 0
        %1259 = vmatpush1.bf16.msra.mxu0 0
        %1260 = vmatprep.subr.bf16.mxu0 0
        %1261 = vmatpush1.bf16.msra.mxu0 0
        %1262 = vmatprep.subr.bf16.mxu0 0
        %1263 = vmatpush1.bf16.msra.mxu0 0
        %1264 = vmatprep.subr.bf16.mxu0 0
        %1265 = vmatpush1.bf16.msra.mxu0 0
        %1266 = vmatprep.mubr.bf16.mxu0 0
        %1267 = vmatmul.mubr.bf16.gmra.mrb[0].mxu0 %v1229
        %v1268 = vpop.f32.mrb[0].mxu0
        %v1269 = vadd.f32 0.0, %v1268
        %v1270 = vpop.f32.mrb[0].mxu0
        %v1271 = vpop.f32.mrb[0].mxu0
        %v1272 = vpop.f32.mrb[0].mxu0
        %1273 = vdwg.mxu0
        %1275 = vrot.lane.b32.xlu0 %v1269, 8
        %v1276 = vpop.permute.xlu0 %1275
        %vm1278 = vcmask 127040
        %1279 = vst.msk [vmem:[#allocation3] sm:$0x1f] %vm1278, %v1276
        %1280 = vrot.lane.b32.xlu0 %v1043, 112
        %v1281 = vpop.permute.xlu0 %1280
        %1282 = vrot.lane.b32.xlu0 %v1043, 80
        %v1283 = vpop.permute.xlu0 %1282
        %v1285 = vsel %vm1047, %v1281, 0
        %v1288 = vsel %vm1047, %v1283, 0
        %1290 = vmatprep.subr.bf16.mxu0 0
        %1291 = vmatpush1.bf16.xpose.msra.mxu0 %v1288
        %1292 = vmatprep.subr.bf16.mxu0 0
        %1293 = vmatpush1.bf16.xpose.msra.mxu0 0
        %1294 = vmatprep.subr.bf16.mxu0 0
        %1295 = vmatpush1.bf16.xpose.msra.mxu0 0
        %1296 = vmatprep.subr.bf16.mxu0 0
        %1297 = vmatpush1.bf16.xpose.msra.mxu0 0
        %1298 = vmatprep.subr.bf16.mxu0 0
        %1299 = vmatpush1.bf16.xpose.msra.mxu0 0
        %1300 = vmatprep.subr.bf16.mxu0 0
        %1301 = vmatpush1.bf16.xpose.msra.mxu0 0
        %1302 = vmatprep.subr.bf16.mxu0 0
        %1303 = vmatpush1.bf16.xpose.msra.mxu0 0
        %1304 = vmatprep.subr.bf16.mxu0 0
        %1305 = vmatpush1.bf16.xpose.msra.mxu0 0
        %1306 = vmatprep.subr.bf16.mxu0 0
        %1307 = vmatpush1.bf16.xpose.msra.mxu0 0
        %1308 = vmatprep.subr.bf16.mxu0 0
        %1309 = vmatpush1.bf16.xpose.msra.mxu0 0
        %1310 = vmatprep.subr.bf16.mxu0 0
        %1311 = vmatpush1.bf16.xpose.msra.mxu0 0
        %1312 = vmatprep.subr.bf16.mxu0 0
        %1313 = vmatpush1.bf16.xpose.msra.mxu0 0
        %1314 = vmatprep.subr.bf16.mxu0 0
        %1315 = vmatpush1.bf16.xpose.msra.mxu0 0
        %1316 = vmatprep.subr.bf16.mxu0 0
        %1317 = vmatpush1.bf16.xpose.msra.mxu0 0
        %1318 = vmatprep.subr.bf16.mxu0 0
        %1319 = vmatpush1.bf16.xpose.msra.mxu0 0
        %1320 = vmatprep.subr.bf16.mxu0 0
        %1321 = vmatpush1.bf16.xpose.msra.mxu0 0
        %1322 = vmatprep.mubr.bf16.mxu0 0
        %1323 = vmatmul.mubr.bf16.gmra.mrb[0].mxu0 %v1285
        %v1324 = vpop.f32.mrb[0].mxu0
        %v1325 = vadd.f32 0.0, %v1324
        %v1326 = vpop.f32.mrb[0].mxu0
        %v1327 = vpop.f32.mrb[0].mxu0
        %v1328 = vpop.f32.mrb[0].mxu0
        %1329 = vdwg.mxu0
        %v1330 = vmul.f32 %v1325, 0.35355338
        %v1331 = vsel %vm1095, %v1330, -inf
        %1332 = vmax.xlane.f32.xlu0 %v1331
        %v1333 = vpop.xlane.xlu0 %1332
        %v1334 = vsub.f32 %v1330, %v1333
        %v1335 = vmul.f32 %v1334, 1.442695
        %v1336 = vpow.pop %v1335
        %v1337 = vsel %vm1095, %v1336, 0.0
        %1338 = vadd.xlane.f32.xlu0 %v1337
        %v1339 = vpop.xlane.xlu0 %1338
        %v1340 = vrcp.pop %v1339
        %v1341 = vmul.f32 %v1336, %v1340
        %v1342 = vpack.c.bf16 %v1341, %v1341
        %1343 = vrot.lane.b32.xlu0 %v1043, 48
        %v1344 = vpop.permute.xlu0 %1343
        %v1346 = vsel %vm1110, %v1342, 0
        %v1349 = vand.u32 %v1344, %v1117
        %1351 = vmatprep.subr.bf16.mxu0 0
        %1352 = vmatpush1.bf16.msra.mxu0 %v1349
        %1353 = vmatprep.subr.bf16.mxu0 0
        %1354 = vmatpush1.bf16.msra.mxu0 0
        %1355 = vmatprep.subr.bf16.mxu0 0
        %1356 = vmatpush1.bf16.msra.mxu0 0
        %1357 = vmatprep.subr.bf16.mxu0 0
        %1358 = vmatpush1.bf16.msra.mxu0 0
        %1359 = vmatprep.subr.bf16.mxu0 0
        %1360 = vmatpush1.bf16.msra.mxu0 0
        %1361 = vmatprep.subr.bf16.mxu0 0
        %1362 = vmatpush1.bf16.msra.mxu0 0
        %1363 = vmatprep.subr.bf16.mxu0 0
        %1364 = vmatpush1.bf16.msra.mxu0 0
        %1365 = vmatprep.subr.bf16.mxu0 0
        %1366 = vmatpush1.bf16.msra.mxu0 0
        %1367 = vmatprep.subr.bf16.mxu0 0
        %1368 = vmatpush1.bf16.msra.mxu0 0
        %1369 = vmatprep.subr.bf16.mxu0 0
        %1370 = vmatpush1.bf16.msra.mxu0 0
        %1371 = vmatprep.subr.bf16.mxu0 0
        %1372 = vmatpush1.bf16.msra.mxu0 0
        %1373 = vmatprep.subr.bf16.mxu0 0
        %1374 = vmatpush1.bf16.msra.mxu0 0
        %1375 = vmatprep.subr.bf16.mxu0 0
        %1376 = vmatpush1.bf16.msra.mxu0 0
        %1377 = vmatprep.subr.bf16.mxu0 0
        %1378 = vmatpush1.bf16.msra.mxu0 0
        %1379 = vmatprep.subr.bf16.mxu0 0
        %1380 = vmatpush1.bf16.msra.mxu0 0
        %1381 = vmatprep.subr.bf16.mxu0 0
        %1382 = vmatpush1.bf16.msra.mxu0 0
        %1383 = vmatprep.mubr.bf16.mxu0 0
        %1384 = vmatmul.mubr.bf16.gmra.mrb[0].mxu0 %v1346
        %v1385 = vpop.f32.mrb[0].mxu0
        %v1386 = vadd.f32 0.0, %v1385
        %v1387 = vpop.f32.mrb[0].mxu0
        %v1388 = vpop.f32.mrb[0].mxu0
        %v1389 = vpop.f32.mrb[0].mxu0
        %1390 = vdwg.mxu0
        %1392 = vrot.lane.b32.xlu0 %v1386, 16
        %v1393 = vpop.permute.xlu0 %1392
        %vm1395 = vcmask 192640
        %1396 = vst.msk [vmem:[#allocation3] sm:$0x1f] %vm1395, %v1393
        %1397 = vrot.lane.b32.xlu0 %v1043, 104
        %v1398 = vpop.permute.xlu0 %1397
        %1399 = vrot.lane.b32.xlu0 %v1043, 72
        %v1400 = vpop.permute.xlu0 %1399
        %v1402 = vsel %vm1047, %v1398, 0
        %v1405 = vsel %vm1047, %v1400, 0
        %1407 = vmatprep.subr.bf16.mxu0 0
        %1408 = vmatpush1.bf16.xpose.msra.mxu0 %v1405
        %1409 = vmatprep.subr.bf16.mxu0 0
        %1410 = vmatpush1.bf16.xpose.msra.mxu0 0
        %1411 = vmatprep.subr.bf16.mxu0 0
        %1412 = vmatpush1.bf16.xpose.msra.mxu0 0
        %1413 = vmatprep.subr.bf16.mxu0 0
        %1414 = vmatpush1.bf16.xpose.msra.mxu0 0
        %1415 = vmatprep.subr.bf16.mxu0 0
        %1416 = vmatpush1.bf16.xpose.msra.mxu0 0
        %1417 = vmatprep.subr.bf16.mxu0 0
        %1418 = vmatpush1.bf16.xpose.msra.mxu0 0
        %1419 = vmatprep.subr.bf16.mxu0 0
        %1420 = vmatpush1.bf16.xpose.msra.mxu0 0
        %1421 = vmatprep.subr.bf16.mxu0 0
        %1422 = vmatpush1.bf16.xpose.msra.mxu0 0
        %1423 = vmatprep.subr.bf16.mxu0 0
        %1424 = vmatpush1.bf16.xpose.msra.mxu0 0
        %1425 = vmatprep.subr.bf16.mxu0 0
        %1426 = vmatpush1.bf16.xpose.msra.mxu0 0
        %1427 = vmatprep.subr.bf16.mxu0 0
        %1428 = vmatpush1.bf16.xpose.msra.mxu0 0
        %1429 = vmatprep.subr.bf16.mxu0 0
        %1430 = vmatpush1.bf16.xpose.msra.mxu0 0
        %1431 = vmatprep.subr.bf16.mxu0 0
        %1432 = vmatpush1.bf16.xpose.msra.mxu0 0
        %1433 = vmatprep.subr.bf16.mxu0 0
        %1434 = vmatpush1.bf16.xpose.msra.mxu0 0
        %1435 = vmatprep.subr.bf16.mxu0 0
        %1436 = vmatpush1.bf16.xpose.msra.mxu0 0
        %1437 = vmatprep.subr.bf16.mxu0 0
        %1438 = vmatpush1.bf16.xpose.msra.mxu0 0
        %1439 = vmatprep.mubr.bf16.mxu0 0
        %1440 = vmatmul.mubr.bf16.gmra.mrb[0].mxu0 %v1402
        %v1441 = vpop.f32.mrb[0].mxu0
        %v1442 = vadd.f32 0.0, %v1441
        %v1443 = vpop.f32.mrb[0].mxu0
        %v1444 = vpop.f32.mrb[0].mxu0
        %v1445 = vpop.f32.mrb[0].mxu0
        %1446 = vdwg.mxu0
        %v1447 = vmul.f32 %v1442, 0.35355338
        %v1448 = vsel %vm1095, %v1447, -inf
        %1449 = vmax.xlane.f32.xlu0 %v1448
        %v1450 = vpop.xlane.xlu0 %1449
        %v1451 = vsub.f32 %v1447, %v1450
        %v1452 = vmul.f32 %v1451, 1.442695
        %v1453 = vpow.pop %v1452
        %v1454 = vsel %vm1095, %v1453, 0.0
        %1455 = vadd.xlane.f32.xlu0 %v1454
        %v1456 = vpop.xlane.xlu0 %1455
        %v1457 = vrcp.pop %v1456
        %v1458 = vmul.f32 %v1453, %v1457
        %v1459 = vpack.c.bf16 %v1458, %v1458
        %1460 = vrot.lane.b32.xlu0 %v1043, 40
        %v1461 = vpop.permute.xlu0 %1460
        %v1463 = vsel %vm1110, %v1459, 0
        %v1466 = vand.u32 %v1461, %v1117
        %1468 = vmatprep.subr.bf16.mxu0 0
        %1469 = vmatpush1.bf16.msra.mxu0 %v1466
        %1470 = vmatprep.subr.bf16.mxu0 0
        %1471 = vmatpush1.bf16.msra.mxu0 0
        %1472 = vmatprep.subr.bf16.mxu0 0
        %1473 = vmatpush1.bf16.msra.mxu0 0
        %1474 = vmatprep.subr.bf16.mxu0 0
        %1475 = vmatpush1.bf16.msra.mxu0 0
        %1476 = vmatprep.subr.bf16.mxu0 0
        %1477 = vmatpush1.bf16.msra.mxu0 0
        %1478 = vmatprep.subr.bf16.mxu0 0
        %1479 = vmatpush1.bf16.msra.mxu0 0
        %1480 = vmatprep.subr.bf16.mxu0 0
        %1481 = vmatpush1.bf16.msra.mxu0 0
        %1482 = vmatprep.subr.bf16.mxu0 0
        %1483 = vmatpush1.bf16.msra.mxu0 0
        %1484 = vmatprep.subr.bf16.mxu0 0
        %1485 = vmatpush1.bf16.msra.mxu0 0
        %1486 = vmatprep.subr.bf16.mxu0 0
        %1487 = vmatpush1.bf16.msra.mxu0 0
        %1488 = vmatprep.subr.bf16.mxu0 0
        %1489 = vmatpush1.bf16.msra.mxu0 0
        %1490 = vmatprep.subr.bf16.mxu0 0
        %1491 = vmatpush1.bf16.msra.mxu0 0
        %1492 = vmatprep.subr.bf16.mxu0 0
        %1493 = vmatpush1.bf16.msra.mxu0 0
        %1494 = vmatprep.subr.bf16.mxu0 0
        %1495 = vmatpush1.bf16.msra.mxu0 0
        %1496 = vmatprep.subr.bf16.mxu0 0
        %1497 = vmatpush1.bf16.msra.mxu0 0
        %1498 = vmatprep.subr.bf16.mxu0 0
        %1499 = vmatpush1.bf16.msra.mxu0 0
        %1500 = vmatprep.mubr.bf16.mxu0 0
        %1501 = vmatmul.mubr.bf16.gmra.mrb[0].mxu0 %v1463
        %v1502 = vpop.f32.mrb[0].mxu0
        %v1503 = vadd.f32 0.0, %v1502
        %v1504 = vpop.f32.mrb[0].mxu0
        %v1505 = vpop.f32.mrb[0].mxu0
        %v1506 = vpop.f32.mrb[0].mxu0
        %1507 = vdwg.mxu0
        %1509 = vrot.lane.b32.xlu0 %v1503, 24
        %v1510 = vpop.permute.xlu0 %1509
        %vm1512 = vcmask 258240
        %1513 = vst.msk [vmem:[#allocation3] sm:$0x1f] %vm1512, %v1510
        %v1514 = vld [vmem:[#allocation3] sm:$0x1f]
        %v1515 = vld [vmem:[%s9] sm:$0xff]
        %v1516 = vld [vmem:[%s9 + $0x8] sm:$0xff]
        %v1517 = vld [vmem:[%s9 + $0x10] sm:$0xff]
        %v1518 = vld [vmem:[%s9 + $0x18] sm:$0xff]
        %v1519 = vpack.c.bf16 %v1514, %v1514
        %v1520 = vpack.c.bf16 %v1516, %v1515
        %v1521 = vpack.c.bf16 %v1518, %v1517
        %v1523 = vsel %vm999, %v1519, 0
        %1525 = vmatprep.subr.bf16.mxu0 0
        %1526 = vmatpush1.bf16.msra.mxu0 %v1520
        %1527 = vmatprep.subr.bf16.mxu0 0
        %1528 = vmatpush1.bf16.msra.mxu0 %v1521
        %1529 = vmatprep.subr.bf16.mxu0 0
        %1530 = vmatpush1.bf16.msra.mxu0 0
        %1531 = vmatprep.subr.bf16.mxu0 0
        %1532 = vmatpush1.bf16.msra.mxu0 0
        %1533 = vmatprep.subr.bf16.mxu0 0
        %1534 = vmatpush1.bf16.msra.mxu0 0
        %1535 = vmatprep.subr.bf16.mxu0 0
        %1536 = vmatpush1.bf16.msra.mxu0 0
        %1537 = vmatprep.subr.bf16.mxu0 0
        %1538 = vmatpush1.bf16.msra.mxu0 0
        %1539 = vmatprep.subr.bf16.mxu0 0
        %1540 = vmatpush1.bf16.msra.mxu0 0
        %1541 = vmatprep.subr.bf16.mxu0 0
        %1542 = vmatpush1.bf16.msra.mxu0 0
        %1543 = vmatprep.subr.bf16.mxu0 0
        %1544 = vmatpush1.bf16.msra.mxu0 0
        %1545 = vmatprep.subr.bf16.mxu0 0
        %1546 = vmatpush1.bf16.msra.mxu0 0
        %1547 = vmatprep.subr.bf16.mxu0 0
        %1548 = vmatpush1.bf16.msra.mxu0 0
        %1549 = vmatprep.subr.bf16.mxu0 0
        %1550 = vmatpush1.bf16.msra.mxu0 0
        %1551 = vmatprep.subr.bf16.mxu0 0
        %1552 = vmatpush1.bf16.msra.mxu0 0
        %1553 = vmatprep.subr.bf16.mxu0 0
        %1554 = vmatpush1.bf16.msra.mxu0 0
        %1555 = vmatprep.subr.bf16.mxu0 0
        %1556 = vmatpush1.bf16.msra.mxu0 0
        %1557 = vmatprep.mubr.bf16.mxu0 0
        %1558 = vmatmul.mubr.bf16.gmra.mrb[0].mxu0 %v1523
        %v1559 = vpop.f32.mrb[0].mxu0
        %v1560 = vadd.f32 0.0, %v1559
        %v1561 = vpop.f32.mrb[0].mxu0
        %v1562 = vpop.f32.mrb[0].mxu0
        %v1563 = vpop.f32.mrb[0].mxu0
        %1564 = vdwg.mxu0
        %v1565 = vadd.f32 %v953, %v1560
        %v1566 = vld [vmem:[%s10] sm:$0x1]
        %v1568 = vlaneseq
        %v1569 = vshrl.u32 %v1568, 7
        %v1570 = vsub.s32 0, %v1569
        %v1571 = vrot.slane %v1566, %v1570
        %v1573 = vadd.f32 %v1565, %v1571
        %v1574 = vld [vmem:[%s11] sm:$0x1]
        %v1575 = vld [vmem:[%s12] sm:$0x1]
        %v1576 = vsel %vm956, %v1573, 0.0
        %1577 = vadd.xlane.f32.xlu0 %v1576
        %v1578 = vpop.xlane.xlu0 %1577
        %v1579 = vmul.f32 %v1578, %v960
        %v1580 = vsub.f32 %v1573, %v1579
        %v1581 = vmul.f32 %v1580, %v1580
        %v1582 = vsel %vm956, %v1581, 0.0
        %1583 = vadd.xlane.f32.xlu0 %v1582
        %v1584 = vpop.xlane.xlu0 %1583
        %v1585 = vmul.f32 %v1584, %v960
        %v1586 = vadd.f32 %v1585, 1e-06
        %v1587 = vrsqrt.pop %v1586
        %v1588 = vmul.f32 %v1580, %v1587
        %v1590 = vlaneseq
        %v1591 = vshrl.u32 %v1590, 7
        %v1592 = vsub.s32 0, %v1591
        %v1593 = vrot.slane %v1574, %v1592
        %v1595 = vmul.f32 %v1588, %v1593
        %v1597 = vlaneseq
        %v1598 = vshrl.u32 %v1597, 7
        %v1599 = vsub.s32 0, %v1598
        %v1600 = vrot.slane %v1575, %v1599
        %v1602 = vadd.f32 %v1595, %v1600
        %v1603 = vld [vmem:[%s13] sm:$0xff]
        %v1604 = vld [vmem:[%s13 + $0x8] sm:$0xff]
        %v1605 = vld [vmem:[%s13 + $0x10] sm:$0xff]
        %v1606 = vld [vmem:[%s13 + $0x18] sm:$0xff]
        %v1607 = vpack.c.bf16 %v1602, %v1602
        %v1608 = vpack.c.bf16 %v1604, %v1603
        %v1609 = vpack.c.bf16 %v1606, %v1605
        %v1610 = vld [vmem:[%s14] sm:$0x1]
        %v1612 = vlaneseq
        %v1613 = vshrl.u32 %v1612, 7
        %v1614 = vsub.s32 0, %v1613
        %v1615 = vrot.slane %v1610, %v1614
        %v1618 = vsel %vm999, %v1607, 0
        %1620 = vmatprep.subr.bf16.mxu0 0
        %1621 = vmatpush1.bf16.msra.mxu0 %v1608
        %1622 = vmatprep.subr.bf16.mxu0 0
        %1623 = vmatpush1.bf16.msra.mxu0 %v1609
        %1624 = vmatprep.subr.bf16.mxu0 0
        %1625 = vmatpush1.bf16.msra.mxu0 0
        %1626 = vmatprep.subr.bf16.mxu0 0
        %1627 = vmatpush1.bf16.msra.mxu0 0
        %1628 = vmatprep.subr.bf16.mxu0 0
        %1629 = vmatpush1.bf16.msra.mxu0 0
        %1630 = vmatprep.subr.bf16.mxu0 0
        %1631 = vmatpush1.bf16.msra.mxu0 0
        %1632 = vmatprep.subr.bf16.mxu0 0
        %1633 = vmatpush1.bf16.msra.mxu0 0
        %1634 = vmatprep.subr.bf16.mxu0 0
        %1635 = vmatpush1.bf16.msra.mxu0 0
        %1636 = vmatprep.subr.bf16.mxu0 0
        %1637 = vmatpush1.bf16.msra.mxu0 0
        %1638 = vmatprep.subr.bf16.mxu0 0
        %1639 = vmatpush1.bf16.msra.mxu0 0
        %1640 = vmatprep.subr.bf16.mxu0 0
        %1641 = vmatpush1.bf16.msra.mxu0 0
        %1642 = vmatprep.subr.bf16.mxu0 0
        %1643 = vmatpush1.bf16.msra.mxu0 0
        %1644 = vmatprep.subr.bf16.mxu0 0
        %1645 = vmatpush1.bf16.msra.mxu0 0
        %1646 = vmatprep.subr.bf16.mxu0 0
        %1647 = vmatpush1.bf16.msra.mxu0 0
        %1648 = vmatprep.subr.bf16.mxu0 0
        %1649 = vmatpush1.bf16.msra.mxu0 0
        %1650 = vmatprep.subr.bf16.mxu0 0
        %1651 = vmatpush1.bf16.msra.mxu0 0
        %1652 = vmatprep.mubr.bf16.mxu0 0
        %1653 = vmatmul.mubr.bf16.gmra.mrb[0].mxu0 %v1618
        %v1654 = vpop.f32.mrb[0].mxu0
        %v1655 = vadd.f32 %v1615, %v1654
        %v1656 = vpop.f32.mrb[0].mxu0
        %v1657 = vpop.f32.mrb[0].mxu0
        %v1658 = vpop.f32.mrb[0].mxu0
        %1659 = vdwg.mxu0
        %v1660 = vmul.f32 %v1655, 0.5
        %v1661 = vmul.f32 %v1655, 0.044715
        %v1662 = vmul.f32 %v1661, %v1655
        %v1663 = vmul.f32 %v1662, %v1655
        %v1664 = vadd.f32 %v1655, %v1663
        %v1665 = vmul.f32 %v1664, 0.7978846
        %v1666 = vtanh.pop %v1665
        %v1667 = vadd.f32 %v1666, 1.0
        %v1668 = vmul.f32 %v1660, %v1667
        %v1669 = vld [vmem:[%s15] sm:$0xff]
        %v1670 = vld [vmem:[%s15 + $0x8] sm:$0xff]
        %v1671 = vld [vmem:[%s15 + $0x10] sm:$0xff]
        %v1672 = vld [vmem:[%s15 + $0x18] sm:$0xff]
        %v1673 = vld [vmem:[%s15 + $0x20] sm:$0xff]
        %v1674 = vld [vmem:[%s15 + $0x28] sm:$0xff]
        %v1675 = vld [vmem:[%s15 + $0x30] sm:$0xff]
        %v1676 = vld [vmem:[%s15 + $0x38] sm:$0xff]
        %v1677 = vpack.c.bf16 %v1668, %v1668
        %v1678 = vpack.c.bf16 %v1670, %v1669
        %v1679 = vpack.c.bf16 %v1672, %v1671
        %v1680 = vpack.c.bf16 %v1674, %v1673
        %v1681 = vpack.c.bf16 %v1676, %v1675
        %vm1682 = vcmask 523264
        %v1684 = vsel %vm1682, %v1677, 0
        %1686 = vmatprep.subr.bf16.mxu0 0
        %1687 = vmatpush1.bf16.msra.mxu0 %v1678
        %1688 = vmatprep.subr.bf16.mxu0 0
        %1689 = vmatpush1.bf16.msra.mxu0 %v1679
        %1690 = vmatprep.subr.bf16.mxu0 0
        %1691 = vmatpush1.bf16.msra.mxu0 %v1680
        %1692 = vmatprep.subr.bf16.mxu0 0
        %1693 = vmatpush1.bf16.msra.mxu0 %v1681
        %1694 = vmatprep.subr.bf16.mxu0 0
        %1695 = vmatpush1.bf16.msra.mxu0 0
        %1696 = vmatprep.subr.bf16.mxu0 0
        %1697 = vmatpush1.bf16.msra.mxu0 0
        %1698 = vmatprep.subr.bf16.mxu0 0
        %1699 = vmatpush1.bf16.msra.mxu0 0
        %1700 = vmatprep.subr.bf16.mxu0 0
        %1701 = vmatpush1.bf16.msra.mxu0 0
        %1702 = vmatprep.subr.bf16.mxu0 0
        %1703 = vmatpush1.bf16.msra.mxu0 0
        %1704 = vmatprep.subr.bf16.mxu0 0
        %1705 = vmatpush1.bf16.msra.mxu0 0
        %1706 = vmatprep.subr.bf16.mxu0 0
        %1707 = vmatpush1.bf16.msra.mxu0 0
        %1708 = vmatprep.subr.bf16.mxu0 0
        %1709 = vmatpush1.bf16.msra.mxu0 0
        %1710 = vmatprep.subr.bf16.mxu0 0
        %1711 = vmatpush1.bf16.msra.mxu0 0
        %1712 = vmatprep.subr.bf16.mxu0 0
        %1713 = vmatpush1.bf16.msra.mxu0 0
        %1714 = vmatprep.subr.bf16.mxu0 0
        %1715 = vmatpush1.bf16.msra.mxu0 0
        %1716 = vmatprep.subr.bf16.mxu0 0
        %1717 = vmatpush1.bf16.msra.mxu0 0
        %1718 = vmatprep.mubr.bf16.mxu0 0
        %1719 = vmatmul.mubr.bf16.gmra.mrb[0].mxu0 %v1684
        %v1720 = vpop.f32.mrb[0].mxu0
        %v1721 = vadd.f32 0.0, %v1720
        %v1722 = vpop.f32.mrb[0].mxu0
        %v1723 = vpop.f32.mrb[0].mxu0
        %v1724 = vpop.f32.mrb[0].mxu0
        %1725 = vdwg.mxu0
        %v1726 = vadd.f32 %v1573, %v1721
        %v1727 = vld [vmem:[%s16] sm:$0x1]
        %v1729 = vlaneseq
        %v1730 = vshrl.u32 %v1729, 7
        %v1731 = vsub.s32 0, %v1730
        %v1732 = vrot.slane %v1727, %v1731
        %v1734 = vadd.f32 %v1726, %v1732
        %s1735 = scalar_lea.vmem %s5, 1
        %v1736 = vld [vmem:[%s1735] sm:$0x1]
        %s1737 = scalar_lea.vmem %s6, 1
        %v1738 = vld [vmem:[%s1737] sm:$0x1]
        %v1739 = vsel %vm956, %v1734, 0.0
        %1740 = vadd.xlane.f32.xlu0 %v1739
        %v1741 = vpop.xlane.xlu0 %1740
        %v1742 = vmul.f32 %v1741, %v960
        %v1743 = vsub.f32 %v1734, %v1742
        %v1744 = vmul.f32 %v1743, %v1743
        %v1745 = vsel %vm956, %v1744, 0.0
        %1746 = vadd.xlane.f32.xlu0 %v1745
        %v1747 = vpop.xlane.xlu0 %1746
        %v1748 = vmul.f32 %v1747, %v960
        %v1749 = vadd.f32 %v1748, 1e-06
        %v1750 = vrsqrt.pop %v1749
        %v1751 = vmul.f32 %v1743, %v1750
        %v1753 = vlaneseq
        %v1754 = vshrl.u32 %v1753, 7
        %v1755 = vsub.s32 0, %v1754
        %v1756 = vrot.slane %v1736, %v1755
        %v1758 = vmul.f32 %v1751, %v1756
        %v1760 = vlaneseq
        %v1761 = vshrl.u32 %v1760, 7
        %v1762 = vsub.s32 0, %v1761
        %v1763 = vrot.slane %v1738, %v1762
        %v1765 = vadd.f32 %v1758, %v1763
        %s1766 = scalar_lea.vmem %s7, 32
        %v1767 = vld [vmem:[%s1766] sm:$0xff]
        %v1768 = vld [vmem:[%s1766 + $0x8] sm:$0xff]
        %v1769 = vld [vmem:[%s1766 + $0x10] sm:$0xff]
        %v1770 = vld [vmem:[%s1766 + $0x18] sm:$0xff]
        %v1771 = vpack.c.bf16 %v1765, %v1765
        %v1772 = vpack.c.bf16 %v1768, %v1767
        %v1773 = vpack.c.bf16 %v1770, %v1769
        %s1774 = scalar_lea.vmem %s8, 1
        %v1775 = vld [vmem:[%s1774] sm:$0x1]
        %v1777 = vlaneseq
        %v1778 = vshrl.u32 %v1777, 7
        %v1779 = vsub.s32 0, %v1778
        %v1780 = vrot.slane %v1775, %v1779
        %v1783 = vsel %vm999, %v1771, 0
        %1785 = vmatprep.subr.bf16.mxu0 0
        %1786 = vmatpush1.bf16.msra.mxu0 %v1772
        %1787 = vmatprep.subr.bf16.mxu0 0
        %1788 = vmatpush1.bf16.msra.mxu0 %v1773
        %1789 = vmatprep.subr.bf16.mxu0 0
        %1790 = vmatpush1.bf16.msra.mxu0 0
        %1791 = vmatprep.subr.bf16.mxu0 0
        %1792 = vmatpush1.bf16.msra.mxu0 0
        %1793 = vmatprep.subr.bf16.mxu0 0
        %1794 = vmatpush1.bf16.msra.mxu0 0
        %1795 = vmatprep.subr.bf16.mxu0 0
        %1796 = vmatpush1.bf16.msra.mxu0 0
        %1797 = vmatprep.subr.bf16.mxu0 0
        %1798 = vmatpush1.bf16.msra.mxu0 0
        %1799 = vmatprep.subr.bf16.mxu0 0
        %1800 = vmatpush1.bf16.msra.mxu0 0
        %1801 = vmatprep.subr.bf16.mxu0 0
        %1802 = vmatpush1.bf16.msra.mxu0 0
        %1803 = vmatprep.subr.bf16.mxu0 0
        %1804 = vmatpush1.bf16.msra.mxu0 0
        %1805 = vmatprep.subr.bf16.mxu0 0
        %1806 = vmatpush1.bf16.msra.mxu0 0
        %1807 = vmatprep.subr.bf16.mxu0 0
        %1808 = vmatpush1.bf16.msra.mxu0 0
        %1809 = vmatprep.subr.bf16.mxu0 0
        %1810 = vmatpush1.bf16.msra.mxu0 0
        %1811 = vmatprep.subr.bf16.mxu0 0
        %1812 = vmatpush1.bf16.msra.mxu0 0
        %1813 = vmatprep.subr.bf16.mxu0 0
        %1814 = vmatpush1.bf16.msra.mxu0 0
        %1815 = vmatprep.subr.bf16.mxu0 0
        %1816 = vmatpush1.bf16.msra.mxu0 0
        %1817 = vmatprep.mubr.bf16.mxu0 0
        %1818 = vmatmul.mubr.bf16.gmra.mrb[0].mxu0 %v1783
        %v1819 = vpop.f32.mrb[0].mxu0
        %v1820 = vadd.f32 %v1780, %v1819
        %v1821 = vpop.f32.mrb[0].mxu0
        %v1822 = vpop.f32.mrb[0].mxu0
        %v1823 = vpop.f32.mrb[0].mxu0
        %1824 = vdwg.mxu0
        %v1825 = vpack.c.bf16 %v1820, %v1820
        %1827 = vrot.lane.b32.xlu0 %v1825, 96
        %v1828 = vpop.permute.xlu0 %1827
        %v1830 = vsel %vm1047, %v1825, 0
        %v1833 = vsel %vm1047, %v1828, 0
        %1835 = vmatprep.subr.bf16.mxu0 0
        %1836 = vmatpush1.bf16.xpose.msra.mxu0 %v1833
        %1837 = vmatprep.subr.bf16.mxu0 0
        %1838 = vmatpush1.bf16.xpose.msra.mxu0 0
        %1839 = vmatprep.subr.bf16.mxu0 0
        %1840 = vmatpush1.bf16.xpose.msra.mxu0 0
        %1841 = vmatprep.subr.bf16.mxu0 0
        %1842 = vmatpush1.bf16.xpose.msra.mxu0 0
        %1843 = vmatprep.subr.bf16.mxu0 0
        %1844 = vmatpush1.bf16.xpose.msra.mxu0 0
        %1845 = vmatprep.subr.bf16.mxu0 0
        %1846 = vmatpush1.bf16.xpose.msra.mxu0 0
        %1847 = vmatprep.subr.bf16.mxu0 0
        %1848 = vmatpush1.bf16.xpose.msra.mxu0 0
        %1849 = vmatprep.subr.bf16.mxu0 0
        %1850 = vmatpush1.bf16.xpose.msra.mxu0 0
        %1851 = vmatprep.subr.bf16.mxu0 0
        %1852 = vmatpush1.bf16.xpose.msra.mxu0 0
        %1853 = vmatprep.subr.bf16.mxu0 0
        %1854 = vmatpush1.bf16.xpose.msra.mxu0 0
        %1855 = vmatprep.subr.bf16.mxu0 0
        %1856 = vmatpush1.bf16.xpose.msra.mxu0 0
        %1857 = vmatprep.subr.bf16.mxu0 0
        %1858 = vmatpush1.bf16.xpose.msra.mxu0 0
        %1859 = vmatprep.subr.bf16.mxu0 0
        %1860 = vmatpush1.bf16.xpose.msra.mxu0 0
        %1861 = vmatprep.subr.bf16.mxu0 0
        %1862 = vmatpush1.bf16.xpose.msra.mxu0 0
        %1863 = vmatprep.subr.bf16.mxu0 0
        %1864 = vmatpush1.bf16.xpose.msra.mxu0 0
        %1865 = vmatprep.subr.bf16.mxu0 0
        %1866 = vmatpush1.bf16.xpose.msra.mxu0 0
        %1867 = vmatprep.mubr.bf16.mxu0 0
        %1868 = vmatmul.mubr.bf16.gmra.mrb[0].mxu0 %v1830
        %v1869 = vpop.f32.mrb[0].mxu0
        %v1870 = vadd.f32 0.0, %v1869
        %v1871 = vpop.f32.mrb[0].mxu0
        %v1872 = vpop.f32.mrb[0].mxu0
        %v1873 = vpop.f32.mrb[0].mxu0
        %1874 = vdwg.mxu0
        %v1875 = vmul.f32 %v1870, 0.35355338
        %v1876 = vsel %vm1095, %v1875, -inf
        %1877 = vmax.xlane.f32.xlu0 %v1876
        %v1878 = vpop.xlane.xlu0 %1877
        %v1879 = vsub.f32 %v1875, %v1878
        %v1880 = vmul.f32 %v1879, 1.442695
        %v1881 = vpow.pop %v1880
        %v1882 = vsel %vm1095, %v1881, 0.0
        %1883 = vadd.xlane.f32.xlu0 %v1882
        %v1884 = vpop.xlane.xlu0 %1883
        %v1885 = vrcp.pop %v1884
        %v1886 = vmul.f32 %v1881, %v1885
        %v1887 = vpack.c.bf16 %v1886, %v1886
        %1888 = vrot.lane.b32.xlu0 %v1825, 64
        %v1889 = vpop.permute.xlu0 %1888
        %v1891 = vsel %vm1110, %v1887, 0
        %v1894 = vand.u32 %v1889, %v1117
        %1896 = vmatprep.subr.bf16.mxu0 0
        %1897 = vmatpush1.bf16.msra.mxu0 %v1894
        %1898 = vmatprep.subr.bf16.mxu0 0
        %1899 = vmatpush1.bf16.msra.mxu0 0
        %1900 = vmatprep.subr.bf16.mxu0 0
        %1901 = vmatpush1.bf16.msra.mxu0 0
        %1902 = vmatprep.subr.bf16.mxu0 0
        %1903 = vmatpush1.bf16.msra.mxu0 0
        %1904 = vmatprep.subr.bf16.mxu0 0
        %1905 = vmatpush1.bf16.msra.mxu0 0
        %1906 = vmatprep.subr.bf16.mxu0 0
        %1907 = vmatpush1.bf16.msra.mxu0 0
        %1908 = vmatprep.subr.bf16.mxu0 0
        %1909 = vmatpush1.bf16.msra.mxu0 0
        %1910 = vmatprep.subr.bf16.mxu0 0
        %1911 = vmatpush1.bf16.msra.mxu0 0
        %1912 = vmatprep.subr.bf16.mxu0 0
        %1913 = vmatpush1.bf16.msra.mxu0 0
        %1914 = vmatprep.subr.bf16.mxu0 0
        %1915 = vmatpush1.bf16.msra.mxu0 0
        %1916 = vmatprep.subr.bf16.mxu0 0
        %1917 = vmatpush1.bf16.msra.mxu0 0
        %1918 = vmatprep.subr.bf16.mxu0 0
        %1919 = vmatpush1.bf16.msra.mxu0 0
        %1920 = vmatprep.subr.bf16.mxu0 0
        %1921 = vmatpush1.bf16.msra.mxu0 0
        %1922 = vmatprep.subr.bf16.mxu0 0
        %1923 = vmatpush1.bf16.msra.mxu0 0
        %1924 = vmatprep.subr.bf16.mxu0 0
        %1925 = vmatpush1.bf16.msra.mxu0 0
        %1926 = vmatprep.subr.bf16.mxu0 0
        %1927 = vmatpush1.bf16.msra.mxu0 0
        %1928 = vmatprep.mubr.bf16.mxu0 0
        %1929 = vmatmul.mubr.bf16.gmra.mrb[0].mxu0 %v1891
        %v1930 = vpop.f32.mrb[0].mxu0
        %v1931 = vadd.f32 0.0, %v1930
        %v1932 = vpop.f32.mrb[0].mxu0
        %v1933 = vpop.f32.mrb[0].mxu0
        %v1934 = vpop.f32.mrb[0].mxu0
        %1935 = vdwg.mxu0
        %1936 = vst.msk [vmem:[#allocation3] sm:$0x1f] %vm1161, %v1931
        %1937 = vrot.lane.b32.xlu0 %v1825, 120
        %v1938 = vpop.permute.xlu0 %1937
        %1939 = vrot.lane.b32.xlu0 %v1825, 88
        %v1940 = vpop.permute.xlu0 %1939
        %v1942 = vsel %vm1047, %v1938, 0
        %v1945 = vsel %vm1047, %v1940, 0
        %1947 = vmatprep.subr.bf16.mxu0 0
        %1948 = vmatpush1.bf16.xpose.msra.mxu0 %v1945
        %1949 = vmatprep.subr.bf16.mxu0 0
        %1950 = vmatpush1.bf16.xpose.msra.mxu0 0
        %1951 = vmatprep.subr.bf16.mxu0 0
        %1952 = vmatpush1.bf16.xpose.msra.mxu0 0
        %1953 = vmatprep.subr.bf16.mxu0 0
        %1954 = vmatpush1.bf16.xpose.msra.mxu0 0
        %1955 = vmatprep.subr.bf16.mxu0 0
        %1956 = vmatpush1.bf16.xpose.msra.mxu0 0
        %1957 = vmatprep.subr.bf16.mxu0 0
        %1958 = vmatpush1.bf16.xpose.msra.mxu0 0
        %1959 = vmatprep.subr.bf16.mxu0 0
        %1960 = vmatpush1.bf16.xpose.msra.mxu0 0
        %1961 = vmatprep.subr.bf16.mxu0 0
        %1962 = vmatpush1.bf16.xpose.msra.mxu0 0
        %1963 = vmatprep.subr.bf16.mxu0 0
        %1964 = vmatpush1.bf16.xpose.msra.mxu0 0
        %1965 = vmatprep.subr.bf16.mxu0 0
        %1966 = vmatpush1.bf16.xpose.msra.mxu0 0
        %1967 = vmatprep.subr.bf16.mxu0 0
        %1968 = vmatpush1.bf16.xpose.msra.mxu0 0
        %1969 = vmatprep.subr.bf16.mxu0 0
        %1970 = vmatpush1.bf16.xpose.msra.mxu0 0
        %1971 = vmatprep.subr.bf16.mxu0 0
        %1972 = vmatpush1.bf16.xpose.msra.mxu0 0
        %1973 = vmatprep.subr.bf16.mxu0 0
        %1974 = vmatpush1.bf16.xpose.msra.mxu0 0
        %1975 = vmatprep.subr.bf16.mxu0 0
        %1976 = vmatpush1.bf16.xpose.msra.mxu0 0
        %1977 = vmatprep.subr.bf16.mxu0 0
        %1978 = vmatpush1.bf16.xpose.msra.mxu0 0
        %1979 = vmatprep.mubr.bf16.mxu0 0
        %1980 = vmatmul.mubr.bf16.gmra.mrb[0].mxu0 %v1942
        %v1981 = vpop.f32.mrb[0].mxu0
        %v1982 = vadd.f32 0.0, %v1981
        %v1983 = vpop.f32.mrb[0].mxu0
        %v1984 = vpop.f32.mrb[0].mxu0
        %v1985 = vpop.f32.mrb[0].mxu0
        %1986 = vdwg.mxu0
        %v1987 = vmul.f32 %v1982, 0.35355338
        %v1988 = vsel %vm1095, %v1987, -inf
        %1989 = vmax.xlane.f32.xlu0 %v1988
        %v1990 = vpop.xlane.xlu0 %1989
        %v1991 = vsub.f32 %v1987, %v1990
        %v1992 = vmul.f32 %v1991, 1.442695
        %v1993 = vpow.pop %v1992
        %v1994 = vsel %vm1095, %v1993, 0.0
        %1995 = vadd.xlane.f32.xlu0 %v1994
        %v1996 = vpop.xlane.xlu0 %1995
        %v1997 = vrcp.pop %v1996
        %v1998 = vmul.f32 %v1993, %v1997
        %v1999 = vpack.c.bf16 %v1998, %v1998
        %2000 = vrot.lane.b32.xlu0 %v1825, 56
        %v2001 = vpop.permute.xlu0 %2000
        %v2003 = vsel %vm1110, %v1999, 0
        %v2006 = vand.u32 %v2001, %v1117
        %2008 = vmatprep.subr.bf16.mxu0 0
        %2009 = vmatpush1.bf16.msra.mxu0 %v2006
        %2010 = vmatprep.subr.bf16.mxu0 0
        %2011 = vmatpush1.bf16.msra.mxu0 0
        %2012 = vmatprep.subr.bf16.mxu0 0
        %2013 = vmatpush1.bf16.msra.mxu0 0
        %2014 = vmatprep.subr.bf16.mxu0 0
        %2015 = vmatpush1.bf16.msra.mxu0 0
        %2016 = vmatprep.subr.bf16.mxu0 0
        %2017 = vmatpush1.bf16.msra.mxu0 0
        %2018 = vmatprep.subr.bf16.mxu0 0
        %2019 = vmatpush1.bf16.msra.mxu0 0
        %2020 = vmatprep.subr.bf16.mxu0 0
        %2021 = vmatpush1.bf16.msra.mxu0 0
        %2022 = vmatprep.subr.bf16.mxu0 0
        %2023 = vmatpush1.bf16.msra.mxu0 0
        %2024 = vmatprep.subr.bf16.mxu0 0
        %2025 = vmatpush1.bf16.msra.mxu0 0
        %2026 = vmatprep.subr.bf16.mxu0 0
        %2027 = vmatpush1.bf16.msra.mxu0 0
        %2028 = vmatprep.subr.bf16.mxu0 0
        %2029 = vmatpush1.bf16.msra.mxu0 0
        %2030 = vmatprep.subr.bf16.mxu0 0
        %2031 = vmatpush1.bf16.msra.mxu0 0
        %2032 = vmatprep.subr.bf16.mxu0 0
        %2033 = vmatpush1.bf16.msra.mxu0 0
        %2034 = vmatprep.subr.bf16.mxu0 0
        %2035 = vmatpush1.bf16.msra.mxu0 0
        %2036 = vmatprep.subr.bf16.mxu0 0
        %2037 = vmatpush1.bf16.msra.mxu0 0
        %2038 = vmatprep.subr.bf16.mxu0 0
        %2039 = vmatpush1.bf16.msra.mxu0 0
        %2040 = vmatprep.mubr.bf16.mxu0 0
        %2041 = vmatmul.mubr.bf16.gmra.mrb[0].mxu0 %v2003
        %v2042 = vpop.f32.mrb[0].mxu0
        %v2043 = vadd.f32 0.0, %v2042
        %v2044 = vpop.f32.mrb[0].mxu0
        %v2045 = vpop.f32.mrb[0].mxu0
        %v2046 = vpop.f32.mrb[0].mxu0
        %2047 = vdwg.mxu0
        %2049 = vrot.lane.b32.xlu0 %v2043, 8
        %v2050 = vpop.permute.xlu0 %2049
        %2052 = vst.msk [vmem:[#allocation3] sm:$0x1f] %vm1278, %v2050
        %2053 = vrot.lane.b32.xlu0 %v1825, 112
        %v2054 = vpop.permute.xlu0 %2053
        %2055 = vrot.lane.b32.xlu0 %v1825, 80
        %v2056 = vpop.permute.xlu0 %2055
        %v2058 = vsel %vm1047, %v2054, 0
        %v2061 = vsel %vm1047, %v2056, 0
        %2063 = vmatprep.subr.bf16.mxu0 0
        %2064 = vmatpush1.bf16.xpose.msra.mxu0 %v2061
        %2065 = vmatprep.subr.bf16.mxu0 0
        %2066 = vmatpush1.bf16.xpose.msra.mxu0 0
        %2067 = vmatprep.subr.bf16.mxu0 0
        %2068 = vmatpush1.bf16.xpose.msra.mxu0 0
        %2069 = vmatprep.subr.bf16.mxu0 0
        %2070 = vmatpush1.bf16.xpose.msra.mxu0 0
        %2071 = vmatprep.subr.bf16.mxu0 0
        %2072 = vmatpush1.bf16.xpose.msra.mxu0 0
        %2073 = vmatprep.subr.bf16.mxu0 0
        %2074 = vmatpush1.bf16.xpose.msra.mxu0 0
        %2075 = vmatprep.subr.bf16.mxu0 0
        %2076 = vmatpush1.bf16.xpose.msra.mxu0 0
        %2077 = vmatprep.subr.bf16.mxu0 0
        %2078 = vmatpush1.bf16.xpose.msra.mxu0 0
        %2079 = vmatprep.subr.bf16.mxu0 0
        %2080 = vmatpush1.bf16.xpose.msra.mxu0 0
        %2081 = vmatprep.subr.bf16.mxu0 0
        %2082 = vmatpush1.bf16.xpose.msra.mxu0 0
        %2083 = vmatprep.subr.bf16.mxu0 0
        %2084 = vmatpush1.bf16.xpose.msra.mxu0 0
        %2085 = vmatprep.subr.bf16.mxu0 0
        %2086 = vmatpush1.bf16.xpose.msra.mxu0 0
        %2087 = vmatprep.subr.bf16.mxu0 0
        %2088 = vmatpush1.bf16.xpose.msra.mxu0 0
        %2089 = vmatprep.subr.bf16.mxu0 0
        %2090 = vmatpush1.bf16.xpose.msra.mxu0 0
        %2091 = vmatprep.subr.bf16.mxu0 0
        %2092 = vmatpush1.bf16.xpose.msra.mxu0 0
        %2093 = vmatprep.subr.bf16.mxu0 0
        %2094 = vmatpush1.bf16.xpose.msra.mxu0 0
        %2095 = vmatprep.mubr.bf16.mxu0 0
        %2096 = vmatmul.mubr.bf16.gmra.mrb[0].mxu0 %v2058
        %v2097 = vpop.f32.mrb[0].mxu0
        %v2098 = vadd.f32 0.0, %v2097
        %v2099 = vpop.f32.mrb[0].mxu0
        %v2100 = vpop.f32.mrb[0].mxu0
        %v2101 = vpop.f32.mrb[0].mxu0
        %2102 = vdwg.mxu0
        %v2103 = vmul.f32 %v2098, 0.35355338
        %v2104 = vsel %vm1095, %v2103, -inf
        %2105 = vmax.xlane.f32.xlu0 %v2104
        %v2106 = vpop.xlane.xlu0 %2105
        %v2107 = vsub.f32 %v2103, %v2106
        %v2108 = vmul.f32 %v2107, 1.442695
        %v2109 = vpow.pop %v2108
        %v2110 = vsel %vm1095, %v2109, 0.0
        %2111 = vadd.xlane.f32.xlu0 %v2110
        %v2112 = vpop.xlane.xlu0 %2111
        %v2113 = vrcp.pop %v2112
        %v2114 = vmul.f32 %v2109, %v2113
        %v2115 = vpack.c.bf16 %v2114, %v2114
        %2116 = vrot.lane.b32.xlu0 %v1825, 48
        %v2117 = vpop.permute.xlu0 %2116
        %v2119 = vsel %vm1110, %v2115, 0
        %v2122 = vand.u32 %v2117, %v1117
        %2124 = vmatprep.subr.bf16.mxu0 0
        %2125 = vmatpush1.bf16.msra.mxu0 %v2122
        %2126 = vmatprep.subr.bf16.mxu0 0
        %2127 = vmatpush1.bf16.msra.mxu0 0
        %2128 = vmatprep.subr.bf16.mxu0 0
        %2129 = vmatpush1.bf16.msra.mxu0 0
        %2130 = vmatprep.subr.bf16.mxu0 0
        %2131 = vmatpush1.bf16.msra.mxu0 0
        %2132 = vmatprep.subr.bf16.mxu0 0
        %2133 = vmatpush1.bf16.msra.mxu0 0
        %2134 = vmatprep.subr.bf16.mxu0 0
        %2135 = vmatpush1.bf16.msra.mxu0 0
        %2136 = vmatprep.subr.bf16.mxu0 0
        %2137 = vmatpush1.bf16.msra.mxu0 0
        %2138 = vmatprep.subr.bf16.mxu0 0
        %2139 = vmatpush1.bf16.msra.mxu0 0
        %2140 = vmatprep.subr.bf16.mxu0 0
        %2141 = vmatpush1.bf16.msra.mxu0 0
        %2142 = vmatprep.subr.bf16.mxu0 0
        %2143 = vmatpush1.bf16.msra.mxu0 0
        %2144 = vmatprep.subr.bf16.mxu0 0
        %2145 = vmatpush1.bf16.msra.mxu0 0
        %2146 = vmatprep.subr.bf16.mxu0 0
        %2147 = vmatpush1.bf16.msra.mxu0 0
        %2148 = vmatprep.subr.bf16.mxu0 0
        %2149 = vmatpush1.bf16.msra.mxu0 0
        %2150 = vmatprep.subr.bf16.mxu0 0
        %2151 = vmatpush1.bf16.msra.mxu0 0
        %2152 = vmatprep.subr.bf16.mxu0 0
        %2153 = vmatpush1.bf16.msra.mxu0 0
        %2154 = vmatprep.subr.bf16.mxu0 0
        %2155 = vmatpush1.bf16.msra.mxu0 0
        %2156 = vmatprep.mubr.bf16.mxu0 0
        %2157 = vmatmul.mubr.bf16.gmra.mrb[0].mxu0 %v2119
        %v2158 = vpop.f32.mrb[0].mxu0
        %v2159 = vadd.f32 0.0, %v2158
        %v2160 = vpop.f32.mrb[0].mxu0
        %v2161 = vpop.f32.mrb[0].mxu0
        %v2162 = vpop.f32.mrb[0].mxu0
        %2163 = vdwg.mxu0
        %2165 = vrot.lane.b32.xlu0 %v2159, 16
        %v2166 = vpop.permute.xlu0 %2165
        %2168 = vst.msk [vmem:[#allocation3] sm:$0x1f] %vm1395, %v2166
        %2169 = vrot.lane.b32.xlu0 %v1825, 104
        %v2170 = vpop.permute.xlu0 %2169
        %2171 = vrot.lane.b32.xlu0 %v1825, 72
        %v2172 = vpop.permute.xlu0 %2171
        %v2174 = vsel %vm1047, %v2170, 0
        %v2177 = vsel %vm1047, %v2172, 0
        %2179 = vmatprep.subr.bf16.mxu0 0
        %2180 = vmatpush1.bf16.xpose.msra.mxu0 %v2177
        %2181 = vmatprep.subr.bf16.mxu0 0
        %2182 = vmatpush1.bf16.xpose.msra.mxu0 0
        %2183 = vmatprep.subr.bf16.mxu0 0
        %2184 = vmatpush1.bf16.xpose.msra.mxu0 0
        %2185 = vmatprep.subr.bf16.mxu0 0
        %2186 = vmatpush1.bf16.xpose.msra.mxu0 0
        %2187 = vmatprep.subr.bf16.mxu0 0
        %2188 = vmatpush1.bf16.xpose.msra.mxu0 0
        %2189 = vmatprep.subr.bf16.mxu0 0
        %2190 = vmatpush1.bf16.xpose.msra.mxu0 0
        %2191 = vmatprep.subr.bf16.mxu0 0
        %2192 = vmatpush1.bf16.xpose.msra.mxu0 0
        %2193 = vmatprep.subr.bf16.mxu0 0
        %2194 = vmatpush1.bf16.xpose.msra.mxu0 0
        %2195 = vmatprep.subr.bf16.mxu0 0
        %2196 = vmatpush1.bf16.xpose.msra.mxu0 0
        %2197 = vmatprep.subr.bf16.mxu0 0
        %2198 = vmatpush1.bf16.xpose.msra.mxu0 0
        %2199 = vmatprep.subr.bf16.mxu0 0
        %2200 = vmatpush1.bf16.xpose.msra.mxu0 0
        %2201 = vmatprep.subr.bf16.mxu0 0
        %2202 = vmatpush1.bf16.xpose.msra.mxu0 0
        %2203 = vmatprep.subr.bf16.mxu0 0
        %2204 = vmatpush1.bf16.xpose.msra.mxu0 0
        %2205 = vmatprep.subr.bf16.mxu0 0
        %2206 = vmatpush1.bf16.xpose.msra.mxu0 0
        %2207 = vmatprep.subr.bf16.mxu0 0
        %2208 = vmatpush1.bf16.xpose.msra.mxu0 0
        %2209 = vmatprep.subr.bf16.mxu0 0
        %2210 = vmatpush1.bf16.xpose.msra.mxu0 0
        %2211 = vmatprep.mubr.bf16.mxu0 0
        %2212 = vmatmul.mubr.bf16.gmra.mrb[0].mxu0 %v2174
        %v2213 = vpop.f32.mrb[0].mxu0
        %v2214 = vadd.f32 0.0, %v2213
        %v2215 = vpop.f32.mrb[0].mxu0
        %v2216 = vpop.f32.mrb[0].mxu0
        %v2217 = vpop.f32.mrb[0].mxu0
        %2218 = vdwg.mxu0
        %v2219 = vmul.f32 %v2214, 0.35355338
        %v2220 = vsel %vm1095, %v2219, -inf
        %2221 = vmax.xlane.f32.xlu0 %v2220
        %v2222 = vpop.xlane.xlu0 %2221
        %v2223 = vsub.f32 %v2219, %v2222
        %v2224 = vmul.f32 %v2223, 1.442695
        %v2225 = vpow.pop %v2224
        %v2226 = vsel %vm1095, %v2225, 0.0
        %2227 = vadd.xlane.f32.xlu0 %v2226
        %v2228 = vpop.xlane.xlu0 %2227
        %v2229 = vrcp.pop %v2228
        %v2230 = vmul.f32 %v2225, %v2229
        %v2231 = vpack.c.bf16 %v2230, %v2230
        %2232 = vrot.lane.b32.xlu0 %v1825, 40
        %v2233 = vpop.permute.xlu0 %2232
        %v2235 = vsel %vm1110, %v2231, 0
        %v2238 = vand.u32 %v2233, %v1117
        %2240 = vmatprep.subr.bf16.mxu0 0
        %2241 = vmatpush1.bf16.msra.mxu0 %v2238
        %2242 = vmatprep.subr.bf16.mxu0 0
        %2243 = vmatpush1.bf16.msra.mxu0 0
        %2244 = vmatprep.subr.bf16.mxu0 0
        %2245 = vmatpush1.bf16.msra.mxu0 0
        %2246 = vmatprep.subr.bf16.mxu0 0
        %2247 = vmatpush1.bf16.msra.mxu0 0
        %2248 = vmatprep.subr.bf16.mxu0 0
        %2249 = vmatpush1.bf16.msra.mxu0 0
        %2250 = vmatprep.subr.bf16.mxu0 0
        %2251 = vmatpush1.bf16.msra.mxu0 0
        %2252 = vmatprep.subr.bf16.mxu0 0
        %2253 = vmatpush1.bf16.msra.mxu0 0
        %2254 = vmatprep.subr.bf16.mxu0 0
        %2255 = vmatpush1.bf16.msra.mxu0 0
        %2256 = vmatprep.subr.bf16.mxu0 0
        %2257 = vmatpush1.bf16.msra.mxu0 0
        %2258 = vmatprep.subr.bf16.mxu0 0
        %2259 = vmatpush1.bf16.msra.mxu0 0
        %2260 = vmatprep.subr.bf16.mxu0 0
        %2261 = vmatpush1.bf16.msra.mxu0 0
        %2262 = vmatprep.subr.bf16.mxu0 0
        %2263 = vmatpush1.bf16.msra.mxu0 0
        %2264 = vmatprep.subr.bf16.mxu0 0
        %2265 = vmatpush1.bf16.msra.mxu0 0
        %2266 = vmatprep.subr.bf16.mxu0 0
        %2267 = vmatpush1.bf16.msra.mxu0 0
        %2268 = vmatprep.subr.bf16.mxu0 0
        %2269 = vmatpush1.bf16.msra.mxu0 0
        %2270 = vmatprep.subr.bf16.mxu0 0
        %2271 = vmatpush1.bf16.msra.mxu0 0
        %2272 = vmatprep.mubr.bf16.mxu0 0
        %2273 = vmatmul.mubr.bf16.gmra.mrb[0].mxu0 %v2235
        %v2274 = vpop.f32.mrb[0].mxu0
        %v2275 = vadd.f32 0.0, %v2274
        %v2276 = vpop.f32.mrb[0].mxu0
        %v2277 = vpop.f32.mrb[0].mxu0
        %v2278 = vpop.f32.mrb[0].mxu0
        %2279 = vdwg.mxu0
        %2281 = vrot.lane.b32.xlu0 %v2275, 24
        %v2282 = vpop.permute.xlu0 %2281
        %2284 = vst.msk [vmem:[#allocation3] sm:$0x1f] %vm1512, %v2282
        %v2285 = vld [vmem:[#allocation3] sm:$0x1f]
        %s2286 = scalar_lea.vmem %s9, 32
        %v2287 = vld [vmem:[%s2286] sm:$0xff]
        %v2288 = vld [vmem:[%s2286 + $0x8] sm:$0xff]
        %v2289 = vld [vmem:[%s2286 + $0x10] sm:$0xff]
        %v2290 = vld [vmem:[%s2286 + $0x18] sm:$0xff]
        %v2291 = vpack.c.bf16 %v2285, %v2285
        %v2292 = vpack.c.bf16 %v2288, %v2287
        %v2293 = vpack.c.bf16 %v2290, %v2289
        %v2295 = vsel %vm999, %v2291, 0
        %2297 = vmatprep.subr.bf16.mxu0 0
        %2298 = vmatpush1.bf16.msra.mxu0 %v2292
        %2299 = vmatprep.subr.bf16.mxu0 0
        %2300 = vmatpush1.bf16.msra.mxu0 %v2293
        %2301 = vmatprep.subr.bf16.mxu0 0
        %2302 = vmatpush1.bf16.msra.mxu0 0
        %2303 = vmatprep.subr.bf16.mxu0 0
        %2304 = vmatpush1.bf16.msra.mxu0 0
        %2305 = vmatprep.subr.bf16.mxu0 0
        %2306 = vmatpush1.bf16.msra.mxu0 0
        %2307 = vmatprep.subr.bf16.mxu0 0
        %2308 = vmatpush1.bf16.msra.mxu0 0
        %2309 = vmatprep.subr.bf16.mxu0 0
        %2310 = vmatpush1.bf16.msra.mxu0 0
        %2311 = vmatprep.subr.bf16.mxu0 0
        %2312 = vmatpush1.bf16.msra.mxu0 0
        %2313 = vmatprep.subr.bf16.mxu0 0
        %2314 = vmatpush1.bf16.msra.mxu0 0
        %2315 = vmatprep.subr.bf16.mxu0 0
        %2316 = vmatpush1.bf16.msra.mxu0 0
        %2317 = vmatprep.subr.bf16.mxu0 0
        %2318 = vmatpush1.bf16.msra.mxu0 0
        %2319 = vmatprep.subr.bf16.mxu0 0
        %2320 = vmatpush1.bf16.msra.mxu0 0
        %2321 = vmatprep.subr.bf16.mxu0 0
        %2322 = vmatpush1.bf16.msra.mxu0 0
        %2323 = vmatprep.subr.bf16.mxu0 0
        %2324 = vmatpush1.bf16.msra.mxu0 0
        %2325 = vmatprep.subr.bf16.mxu0 0
        %2326 = vmatpush1.bf16.msra.mxu0 0
        %2327 = vmatprep.subr.bf16.mxu0 0
        %2328 = vmatpush1.bf16.msra.mxu0 0
        %2329 = vmatprep.mubr.bf16.mxu0 0
        %2330 = vmatmul.mubr.bf16.gmra.mrb[0].mxu0 %v2295
        %v2331 = vpop.f32.mrb[0].mxu0
        %v2332 = vadd.f32 0.0, %v2331
        %v2333 = vpop.f32.mrb[0].mxu0
        %v2334 = vpop.f32.mrb[0].mxu0
        %v2335 = vpop.f32.mrb[0].mxu0
        %2336 = vdwg.mxu0
        %v2337 = vadd.f32 %v1734, %v2332
        %s2338 = scalar_lea.vmem %s10, 1
        %v2339 = vld [vmem:[%s2338] sm:$0x1]
        %v2341 = vlaneseq
        %v2342 = vshrl.u32 %v2341, 7
        %v2343 = vsub.s32 0, %v2342
        %v2344 = vrot.slane %v2339, %v2343
        %v2346 = vadd.f32 %v2337, %v2344
        %s2347 = scalar_lea.vmem %s11, 1
        %v2348 = vld [vmem:[%s2347] sm:$0x1]
        %s2349 = scalar_lea.vmem %s12, 1
        %v2350 = vld [vmem:[%s2349] sm:$0x1]
        %v2351 = vsel %vm956, %v2346, 0.0
        %2352 = vadd.xlane.f32.xlu0 %v2351
        %v2353 = vpop.xlane.xlu0 %2352
        %v2354 = vmul.f32 %v2353, %v960
        %v2355 = vsub.f32 %v2346, %v2354
        %v2356 = vmul.f32 %v2355, %v2355
        %v2357 = vsel %vm956, %v2356, 0.0
        %2358 = vadd.xlane.f32.xlu0 %v2357
        %v2359 = vpop.xlane.xlu0 %2358
        %v2360 = vmul.f32 %v2359, %v960
        %v2361 = vadd.f32 %v2360, 1e-06
        %v2362 = vrsqrt.pop %v2361
        %v2363 = vmul.f32 %v2355, %v2362
        %v2365 = vlaneseq
        %v2366 = vshrl.u32 %v2365, 7
        %v2367 = vsub.s32 0, %v2366
        %v2368 = vrot.slane %v2348, %v2367
        %v2370 = vmul.f32 %v2363, %v2368
        %v2372 = vlaneseq
        %v2373 = vshrl.u32 %v2372, 7
        %v2374 = vsub.s32 0, %v2373
        %v2375 = vrot.slane %v2350, %v2374
        %v2377 = vadd.f32 %v2370, %v2375
        %s2378 = scalar_lea.vmem %s13, 32
        %v2379 = vld [vmem:[%s2378] sm:$0xff]
        %v2380 = vld [vmem:[%s2378 + $0x8] sm:$0xff]
        %v2381 = vld [vmem:[%s2378 + $0x10] sm:$0xff]
        %v2382 = vld [vmem:[%s2378 + $0x18] sm:$0xff]
        %v2383 = vpack.c.bf16 %v2377, %v2377
        %v2384 = vpack.c.bf16 %v2380, %v2379
        %v2385 = vpack.c.bf16 %v2382, %v2381
        %s2386 = scalar_lea.vmem %s14, 1
        %v2387 = vld [vmem:[%s2386] sm:$0x1]
        %v2389 = vlaneseq
        %v2390 = vshrl.u32 %v2389, 7
        %v2391 = vsub.s32 0, %v2390
        %v2392 = vrot.slane %v2387, %v2391
        %v2395 = vsel %vm999, %v2383, 0
        %2397 = vmatprep.subr.bf16.mxu0 0
        %2398 = vmatpush1.bf16.msra.mxu0 %v2384
        %2399 = vmatprep.subr.bf16.mxu0 0
        %2400 = vmatpush1.bf16.msra.mxu0 %v2385
        %2401 = vmatprep.subr.bf16.mxu0 0
        %2402 = vmatpush1.bf16.msra.mxu0 0
        %2403 = vmatprep.subr.bf16.mxu0 0
        %2404 = vmatpush1.bf16.msra.mxu0 0
        %2405 = vmatprep.subr.bf16.mxu0 0
        %2406 = vmatpush1.bf16.msra.mxu0 0
        %2407 = vmatprep.subr.bf16.mxu0 0
        %2408 = vmatpush1.bf16.msra.mxu0 0
        %2409 = vmatprep.subr.bf16.mxu0 0
        %2410 = vmatpush1.bf16.msra.mxu0 0
        %2411 = vmatprep.subr.bf16.mxu0 0
        %2412 = vmatpush1.bf16.msra.mxu0 0
        %2413 = vmatprep.subr.bf16.mxu0 0
        %2414 = vmatpush1.bf16.msra.mxu0 0
        %2415 = vmatprep.subr.bf16.mxu0 0
        %2416 = vmatpush1.bf16.msra.mxu0 0
        %2417 = vmatprep.subr.bf16.mxu0 0
        %2418 = vmatpush1.bf16.msra.mxu0 0
        %2419 = vmatprep.subr.bf16.mxu0 0
        %2420 = vmatpush1.bf16.msra.mxu0 0
        %2421 = vmatprep.subr.bf16.mxu0 0
        %2422 = vmatpush1.bf16.msra.mxu0 0
        %2423 = vmatprep.subr.bf16.mxu0 0
        %2424 = vmatpush1.bf16.msra.mxu0 0
        %2425 = vmatprep.subr.bf16.mxu0 0
        %2426 = vmatpush1.bf16.msra.mxu0 0
        %2427 = vmatprep.subr.bf16.mxu0 0
        %2428 = vmatpush1.bf16.msra.mxu0 0
        %2429 = vmatprep.mubr.bf16.mxu0 0
        %2430 = vmatmul.mubr.bf16.gmra.mrb[0].mxu0 %v2395
        %v2431 = vpop.f32.mrb[0].mxu0
        %v2432 = vadd.f32 %v2392, %v2431
        %v2433 = vpop.f32.mrb[0].mxu0
        %v2434 = vpop.f32.mrb[0].mxu0
        %v2435 = vpop.f32.mrb[0].mxu0
        %2436 = vdwg.mxu0
        %v2437 = vmul.f32 %v2432, 0.5
        %v2438 = vmul.f32 %v2432, 0.044715
        %v2439 = vmul.f32 %v2438, %v2432
        %v2440 = vmul.f32 %v2439, %v2432
        %v2441 = vadd.f32 %v2432, %v2440
        %v2442 = vmul.f32 %v2441, 0.7978846
        %v2443 = vtanh.pop %v2442
        %v2444 = vadd.f32 %v2443, 1.0
        %v2445 = vmul.f32 %v2437, %v2444
        %s2446 = scalar_lea.vmem %s15, 64
        %v2447 = vld [vmem:[%s2446] sm:$0xff]
        %v2448 = vld [vmem:[%s2446 + $0x8] sm:$0xff]
        %v2449 = vld [vmem:[%s2446 + $0x10] sm:$0xff]
        %v2450 = vld [vmem:[%s2446 + $0x18] sm:$0xff]
        %v2451 = vld [vmem:[%s2446 + $0x20] sm:$0xff]
        %v2452 = vld [vmem:[%s2446 + $0x28] sm:$0xff]
        %v2453 = vld [vmem:[%s2446 + $0x30] sm:$0xff]
        %v2454 = vld [vmem:[%s2446 + $0x38] sm:$0xff]
        %v2455 = vpack.c.bf16 %v2445, %v2445
        %v2456 = vpack.c.bf16 %v2448, %v2447
        %v2457 = vpack.c.bf16 %v2450, %v2449
        %v2458 = vpack.c.bf16 %v2452, %v2451
        %v2459 = vpack.c.bf16 %v2454, %v2453
        %v2461 = vsel %vm1682, %v2455, 0
        %2463 = vmatprep.subr.bf16.mxu0 0
        %2464 = vmatpush1.bf16.msra.mxu0 %v2456
        %2465 = vmatprep.subr.bf16.mxu0 0
        %2466 = vmatpush1.bf16.msra.mxu0 %v2457
        %2467 = vmatprep.subr.bf16.mxu0 0
        %2468 = vmatpush1.bf16.msra.mxu0 %v2458
        %2469 = vmatprep.subr.bf16.mxu0 0
        %2470 = vmatpush1.bf16.msra.mxu0 %v2459
        %2471 = vmatprep.subr.bf16.mxu0 0
        %2472 = vmatpush1.bf16.msra.mxu0 0
        %2473 = vmatprep.subr.bf16.mxu0 0
        %2474 = vmatpush1.bf16.msra.mxu0 0
        %2475 = vmatprep.subr.bf16.mxu0 0
        %2476 = vmatpush1.bf16.msra.mxu0 0
        %2477 = vmatprep.subr.bf16.mxu0 0
        %2478 = vmatpush1.bf16.msra.mxu0 0
        %2479 = vmatprep.subr.bf16.mxu0 0
        %2480 = vmatpush1.bf16.msra.mxu0 0
        %2481 = vmatprep.subr.bf16.mxu0 0
        %2482 = vmatpush1.bf16.msra.mxu0 0
        %2483 = vmatprep.subr.bf16.mxu0 0
        %2484 = vmatpush1.bf16.msra.mxu0 0
        %2485 = vmatprep.subr.bf16.mxu0 0
        %2486 = vmatpush1.bf16.msra.mxu0 0
        %2487 = vmatprep.subr.bf16.mxu0 0
        %2488 = vmatpush1.bf16.msra.mxu0 0
        %2489 = vmatprep.subr.bf16.mxu0 0
        %2490 = vmatpush1.bf16.msra.mxu0 0
        %2491 = vmatprep.subr.bf16.mxu0 0
        %2492 = vmatpush1.bf16.msra.mxu0 0
        %2493 = vmatprep.subr.bf16.mxu0 0
        %2494 = vmatpush1.bf16.msra.mxu0 0
        %2495 = vmatprep.mubr.bf16.mxu0 0
        %2496 = vmatmul.mubr.bf16.gmra.mrb[0].mxu0 %v2461
        %v2497 = vpop.f32.mrb[0].mxu0
        %v2498 = vadd.f32 0.0, %v2497
        %v2499 = vpop.f32.mrb[0].mxu0
        %v2500 = vpop.f32.mrb[0].mxu0
        %v2501 = vpop.f32.mrb[0].mxu0
        %2502 = vdwg.mxu0
        %v2503 = vadd.f32 %v2346, %v2498
        %s2504 = scalar_lea.vmem %s16, 1
        %v2505 = vld [vmem:[%s2504] sm:$0x1]
        %v2507 = vlaneseq
        %v2508 = vshrl.u32 %v2507, 7
        %v2509 = vsub.s32 0, %v2508
        %v2510 = vrot.slane %v2505, %v2509
        %v2512 = vadd.f32 %v2503, %v2510
        %v2513 = vld [vmem:[%s17] sm:$0x1]
        %v2514 = vld [vmem:[%s18] sm:$0x1]
        %v2515 = vsel %vm947, %v2512, 0.0
        %2516 = vadd.xlane.f32.xlu0 %v2515
        %v2517 = vpop.xlane.xlu0 %2516
        %v2518 = vmul.f32 %v2517, %v960
        %v2519 = vsub.f32 %v2512, %v2518
        %v2520 = vmul.f32 %v2519, %v2519
        %v2521 = vsel %vm947, %v2520, 0.0
        %2522 = vadd.xlane.f32.xlu0 %v2521
        %v2523 = vpop.xlane.xlu0 %2522
        %v2524 = vmul.f32 %v2523, %v960
        %v2525 = vadd.f32 %v2524, 1e-06
        %v2526 = vrsqrt.pop %v2525
        %v2527 = vmul.f32 %v2519, %v2526
        %v2528 = vmul.f32 %v2527, %v2513
        %v2529 = vadd.f32 %v2528, %v2514
        %v2530 = vld [vmem:[%s19] sm:$0xff]
        %v2531 = vld [vmem:[%s19 + $0x8] sm:$0xff]
        %v2532 = vld [vmem:[%s19 + $0x10] sm:$0xff]
        %v2533 = vld [vmem:[%s19 + $0x18] sm:$0xff]
        %v2534 = vpack.c.bf16 %v2529, %v2529
        %v2535 = vpack.c.bf16 %v2531, %v2530
        %v2536 = vpack.c.bf16 %v2533, %v2532
        %v2537 = vld [vmem:[%s20] sm:$0x1]
        %v2539 = vsel %vm999, %v2534, 0
        %2541 = vmatprep.subr.bf16.mxu0 0
        %2542 = vmatpush1.bf16.msra.mxu0 %v2535
        %2543 = vmatprep.subr.bf16.mxu0 0
        %2544 = vmatpush1.bf16.msra.mxu0 %v2536
        %2545 = vmatprep.subr.bf16.mxu0 0
        %2546 = vmatpush1.bf16.msra.mxu0 0
        %2547 = vmatprep.subr.bf16.mxu0 0
        %2548 = vmatpush1.bf16.msra.mxu0 0
        %2549 = vmatprep.subr.bf16.mxu0 0
        %2550 = vmatpush1.bf16.msra.mxu0 0
        %2551 = vmatprep.subr.bf16.mxu0 0
        %2552 = vmatpush1.bf16.msra.mxu0 0
        %2553 = vmatprep.subr.bf16.mxu0 0
        %2554 = vmatpush1.bf16.msra.mxu0 0
        %2555 = vmatprep.subr.bf16.mxu0 0
        %2556 = vmatpush1.bf16.msra.mxu0 0
        %2557 = vmatprep.subr.bf16.mxu0 0
        %2558 = vmatpush1.bf16.msra.mxu0 0
        %2559 = vmatprep.subr.bf16.mxu0 0
        %2560 = vmatpush1.bf16.msra.mxu0 0
        %2561 = vmatprep.subr.bf16.mxu0 0
        %2562 = vmatpush1.bf16.msra.mxu0 0
        %2563 = vmatprep.subr.bf16.mxu0 0
        %2564 = vmatpush1.bf16.msra.mxu0 0
        %2565 = vmatprep.subr.bf16.mxu0 0
        %2566 = vmatpush1.bf16.msra.mxu0 0
        %2567 = vmatprep.subr.bf16.mxu0 0
        %2568 = vmatpush1.bf16.msra.mxu0 0
        %2569 = vmatprep.subr.bf16.mxu0 0
        %2570 = vmatpush1.bf16.msra.mxu0 0
        %2571 = vmatprep.subr.bf16.mxu0 0
        %2572 = vmatpush1.bf16.msra.mxu0 0
        %2573 = vmatprep.mubr.bf16.mxu0 0
        %2574 = vmatmul.mubr.bf16.gmra.mrb[0].mxu0 %v2539
        %v2575 = vpop.f32.mrb[0].mxu0
        %v2576 = vadd.f32 %v2537, %v2575
        %v2577 = vpop.f32.mrb[0].mxu0
        %v2578 = vpop.f32.mrb[0].mxu0
        %v2579 = vpop.f32.mrb[0].mxu0
        %2580 = vdwg.mxu0
        %vm2581 = vcmask 73728
        %2582 = vst.msk [vmem:[%s648] sm:$0x1] %vm2581, %v2576
        %s2583 = sand.u32 %s489, 1
        %s2584 = scalar_lea.sflag [#allocation5], %s2583
        %s2585 = sand.u32 %s489, 1
        %s2586 = scalar_lea.vmem [#allocation4], %s2585
        // Predicated region
        $region105: #{vit_forward.1} parent=103 // pred_check
          %p2587 = pneg %p499
        $region106: #{vit_forward.1} parent=103 // pred_check_branch
          %2589 = sbr.rel (%p2587) target = $region108
        $region107: #{vit_forward.1} parent=103 // pred_region
          %s2591 = ssub.s32 16, 16
          %2592 = vsyncadd %s2584, %s2591
          %s2593 = smul.addr %s35, 16
          %s2594 = scalar_lea.hbm %s21, %s2593
          %s2596 = sshll.u32 %s2586, 4
          %s2597 = int_to_ptr.vmem [resolvable:$true] %s2596
          %2599 = dma.vmem_to_hbm [thread:$0]  %s2597, 16, %s2594, %s2584
        $region108: #{vit_forward.1} parent=103 // pred_fallthru
          _
      $region104: #{vit_forward.1} parent=5 // pred_fallthru
        _
      %p2600 = scmp.le.s32.totalorder 2, %s30
      // Predicated region
      $region109: #{vit_forward.1} parent=5 // pred_check
        %p2601 = pneg %p2600
      $region110: #{vit_forward.1} parent=5 // pred_check_branch
        %2603 = sbr.rel (%p2601) target = $region112
      $region111: #{vit_forward.1} parent=5 // pred_region
        %s2604 = ssub.s32 %s30, 2
        // Predicated region
        $region113: #{vit_forward.1} parent=111 // pred_check
          %p2605 = pneg %p505
        $region114: #{vit_forward.1} parent=111 // pred_check_branch
          %2607 = sbr.rel (%p2605) target = $region116
        $region115: #{vit_forward.1} parent=111 // pred_region
          %s2608 = sand.u32 %s490, 1
          %s2609 = scalar_lea.sflag [#allocation5], %s2608
          %s2610 = sand.u32 %s490, 1
          %s2611 = scalar_lea.vmem [#allocation4], %s2610
          %2612 = dma.done %s2609, 16
        $region116: #{vit_forward.1} parent=111 // pred_fallthru
          _
      $region112: #{vit_forward.1} parent=5 // pred_fallthru
        _
    $region6: #{vit_forward.1} parent=1 // loop_footer
      %s34 = sadd.s32 1, %s30
    $region7: #{vit_forward.1} parent=1 // loop_footer_branch
      %29 = sbr.rel target = $region3
    $region8: #{vit_forward.1} parent=1 // loop_exit
      _
    %2613 = vsyncpa [#allocation5], 1
    %s2614 = scalar_lea.sflag [#allocation5], 1
    %2615 = vsyncpa %s2614, 1

</llo_original>
